<compile_context>
chip_gen: v7x
topology: tpu7x:2x2x1
jax: 0.10.0
libtpu: 0.0.40
codegen_flags: <defaults>
</compile_context>

<pallas_src>
import jax
import jax.numpy as jnp
from jax.experimental import pallas as pl
from jax.experimental.pallas import tpu as pltpu


def tmo_kernel(x_ref, w1_ref, b1_ref, w2_ref, b2_ref, o_ref):
    # x_ref : (8, PL)  lane-dense tile of points (8 sublane rows x PL lanes)
    # w1_ref: (H, 1)   layer-1 weight column (features along sublanes)
    # b1_ref: (H, 1)   layer-1 bias column
    # w2_ref: (H, 1)   layer-2 weight column
    # b2_ref: (1, 1)   layer-2 bias scalar, in SMEM
    # o_ref : (8, PL)  lane-dense output tile
    R, PL = x_ref.shape
    H = w1_ref.shape[0]

    x = x_ref[...]                     # (R, PL) f32, already f32 (no redundant cast)
    b2 = b2_ref[0, 0]                  # scalar read from SMEM

    # Hoist the lane-broadcasts of the parameter columns out of the per-row loop.
    w1_b = jnp.broadcast_to(w1_ref[...], (H, PL))   # (H, PL)
    b1_b = jnp.broadcast_to(b1_ref[...], (H, PL))   # (H, PL)
    w2_b = jnp.broadcast_to(w2_ref[...], (H, PL))   # (H, PL)

    # Static (unrolled) loop over the 8 sublane rows of the tile.
    for r in range(R):
        xr = x[r:r + 1, :]                                   # (1, PL) one row of points
        # Layer 1: outer product on the VPU  h[j, p] = w1[j] * x[p] + b1[j]
        h = xr * w1_b + b1_b                                  # (H, PL)
        # LeakyReLU (PyTorch default negative_slope = 0.01)
        h = jnp.where(h > 0, h, 0.01 * h)                     # (H, PL)
        # Layer 2: per-point reduce over features (sublane axis) -> lane-dense row
        y = jnp.sum(h * w2_b, axis=0, keepdims=True) + b2     # (1, PL)
        # MyTanh: tanh(2 * x), applied only to the reduced (1, PL) row
        o_ref[r:r + 1, :] = jnp.tanh(2.0 * y).astype(o_ref.dtype)


def tmo_forward(coords, w1, b1, w2, b2, *, tile_lanes=256):
    """coords: (N, 1) float32.  Returns (N, 1) float32.

    tile_lanes must be a multiple of 128; each grid step processes 8*tile_lanes points.
    Ragged N is handled by zero-padding to a full tile and slicing the result.
    """
    N, in_dim = coords.shape
    assert in_dim == 1, "TMO kernel specialised for in_dim == 1 (module default)"
    H = w1.shape[1]
    assert tile_lanes % 128 == 0

    pts_per_tile = 8 * tile_lanes
    n_tiles = (N + pts_per_tile - 1) // pts_per_tile
    n_pad = n_tiles * pts_per_tile

    # Lane-dense input slab: point n -> (n // tile_lanes, n % tile_lanes).
    x_flat = coords.reshape(N)
    if n_pad != N:
        x_flat = jnp.pad(x_flat, (0, n_pad - N))
    x2d = x_flat.reshape(n_pad // tile_lanes, tile_lanes)

    # Parameters as (H, 1) columns (features along sublanes); b2 as a (1,1) SMEM scalar.
    w1_col = w1.reshape(H, 1)
    b1_col = b1.reshape(H, 1)
    w2_col = w2.reshape(H, 1)
    b2_2d = b2.reshape(1, 1)

    out2d = pl.pallas_call(
        tmo_kernel,
        out_shape=jax.ShapeDtypeStruct((n_pad // tile_lanes, tile_lanes), jnp.float32),
        grid_spec=pltpu.PrefetchScalarGridSpec(
            num_scalar_prefetch=0,
            grid=(n_tiles,),
            in_specs=[
                pl.BlockSpec((8, tile_lanes), lambda i: (i, 0)),      # points tile
                pl.BlockSpec((H, 1), lambda i: (0, 0)),               # W1 column
                pl.BlockSpec((H, 1), lambda i: (0, 0)),               # b1 column
                pl.BlockSpec((H, 1), lambda i: (0, 0)),               # W2 column
                pl.BlockSpec(memory_space=pltpu.MemorySpace.SMEM),    # b2 scalar
            ],
            out_specs=pl.BlockSpec((8, tile_lanes), lambda i: (i, 0)),
        ),
        compiler_params=pltpu.CompilerParams(
            dimension_semantics=("parallel",),
        ),
    )(x2d, w1_col, b1_col, w2_col, b2_2d)

    out = out2d.reshape(n_pad, 1)
    if n_pad != N:
        out = out[:N]
    return out


def tmo_reference(coords, w1, b1, w2, b2):
    h = coords @ w1 + b1
    h = jnp.where(h > 0, h, 0.01 * h)
    y = h @ w2 + b2
    return jnp.tanh(2.0 * y)


if __name__ == "__main__":
    in_dim = 1
    hidden_dim = 256
    N = 8192  # 4 grid steps at the default tile (2048 points / tile) -> both v7x TCs busy

    key = jax.random.PRNGKey(0)
    k_x, k_w1, k_b1, k_w2 = jax.random.split(key, 4)

    # nn.Linear-style uniform(-1/sqrt(fan_in), 1/sqrt(fan_in)) init.
    bound1 = 1.0 / jnp.sqrt(jnp.float32(in_dim))
    bound2 = 1.0 / jnp.sqrt(jnp.float32(hidden_dim))
    w1 = jax.random.uniform(k_w1, (in_dim, hidden_dim), jnp.float32, -bound1, bound1)
    b1 = jax.random.uniform(k_b1, (hidden_dim,), jnp.float32, -bound1, bound1)
    w2 = jax.random.uniform(k_w2, (hidden_dim, 1), jnp.float32, -bound2, bound2)
    b2 = jnp.array([0.5], dtype=jnp.float32)  # init_weights(): last bias = 0.5

    coords = jax.random.uniform(k_x, (N, in_dim), jnp.float32, -1.0, 1.0)

    out = tmo_forward(coords, w1, b1, w2, b2)
    out = jax.block_until_ready(out)
    ref = tmo_reference(coords, w1, b1, w2, b2)
    assert out.shape == (N, 1)
    assert jnp.allclose(out, ref, atol=1e-5, rtol=1e-5), "mismatch vs JAX reference"

    # Ragged-N path (padded tail) check.
    N2 = 1000
    coords2 = jax.random.uniform(jax.random.PRNGKey(1), (N2, in_dim), jnp.float32, -1.0, 1.0)
    out2 = jax.block_until_ready(tmo_forward(coords2, w1, b1, w2, b2))
    ref2 = tmo_reference(coords2, w1, b1, w2, b2)
    assert out2.shape == (N2, 1)
    assert jnp.allclose(out2, ref2, atol=1e-5, rtol=1e-5), "mismatch vs JAX reference (ragged N)"

    print("KERNEL_OK")
</pallas_src>

<mosaic_0001>
module attributes {stable_mosaic.version = 11 : i64} {
  func.func @tmo_kernel(%arg0: i32, %arg1: memref<8x256xf32, #tpu.memory_space<vmem>>, %arg2: memref<256x1xf32, #tpu.memory_space<vmem>>, %arg3: memref<256x1xf32, #tpu.memory_space<vmem>>, %arg4: memref<256x1xf32, #tpu.memory_space<vmem>>, %arg5: memref<1x1xf32, #tpu.memory_space<smem>>, %arg6: memref<8x256xf32, #tpu.memory_space<vmem>>) attributes {dimension_semantics = [#tpu.dimension_semantics<parallel>], iteration_bounds = array<i64: 4>, scalar_prefetch = 0 : i64, scratch_operands = 0 : i64, tpu.core_type = #tpu.core_type<tc>, window_params = [{transform_indices = @transform_0, window_bounds = array<i64: 8, 256>}, {pipeline_mode = #tpu.pipeline_mode<synchronous>, transform_indices = @transform_1, window_bounds = array<i64: 256, 1>}, {pipeline_mode = #tpu.pipeline_mode<synchronous>, transform_indices = @transform_2, window_bounds = array<i64: 256, 1>}, {pipeline_mode = #tpu.pipeline_mode<synchronous>, transform_indices = @transform_3, window_bounds = array<i64: 256, 1>}, {transform_indices = @transform_4, window_bounds = array<i64: 1, 1>}, {transform_indices = @transform_5, window_bounds = array<i64: 8, 256>}]} {
    %c0 = arith.constant 0 : index
    %c0_0 = arith.constant 0 : index
    %0 = vector.load %arg1[%c0, %c0_0] : memref<8x256xf32, #tpu.memory_space<vmem>>, vector<8x256xf32>
    %c0_1 = arith.constant 0 : index
    %c0_2 = arith.constant 0 : index
    %1 = memref.load %arg5[%c0_1, %c0_2] : memref<1x1xf32, #tpu.memory_space<smem>>
    %c0_3 = arith.constant 0 : index
    %c0_4 = arith.constant 0 : index
    %2 = vector.load %arg2[%c0_3, %c0_4] : memref<256x1xf32, #tpu.memory_space<vmem>>, vector<256x1xf32>
    %3 = vector.shape_cast %2 : vector<256x1xf32> to vector<256x1xf32>
    %4 = vector.broadcast %3 : vector<256x1xf32> to vector<256x256xf32>
    %c0_5 = arith.constant 0 : index
    %c0_6 = arith.constant 0 : index
    %5 = vector.load %arg3[%c0_5, %c0_6] : memref<256x1xf32, #tpu.memory_space<vmem>>, vector<256x1xf32>
    %6 = vector.shape_cast %5 : vector<256x1xf32> to vector<256x1xf32>
    %7 = vector.broadcast %6 : vector<256x1xf32> to vector<256x256xf32>
    %c0_7 = arith.constant 0 : index
    %c0_8 = arith.constant 0 : index
    %8 = vector.load %arg4[%c0_7, %c0_8] : memref<256x1xf32, #tpu.memory_space<vmem>>, vector<256x1xf32>
    %9 = vector.shape_cast %8 : vector<256x1xf32> to vector<256x1xf32>
    %10 = vector.broadcast %9 : vector<256x1xf32> to vector<256x256xf32>
    %11 = vector.extract_strided_slice %0 {offsets = [0, 0], sizes = [1, 256], strides = [1, 1]} : vector<8x256xf32> to vector<1x256xf32>
    %12 = vector.broadcast %11 : vector<1x256xf32> to vector<256x256xf32>
    %13 = arith.mulf %12, %4 : vector<256x256xf32>
    %14 = arith.addf %13, %7 : vector<256x256xf32>
    %cst = arith.constant 0.000000e+00 : f32
    %15 = vector.broadcast %cst : f32 to vector<256x256xf32>
    %16 = arith.cmpf ogt, %14, %15 : vector<256x256xf32>
    %cst_9 = arith.constant 0.00999999977 : f32
    %17 = vector.broadcast %cst_9 : f32 to vector<256x256xf32>
    %18 = arith.mulf %17, %14 : vector<256x256xf32>
    %19 = arith.select %16, %14, %18 : vector<256x256xi1>, vector<256x256xf32>
    %20 = arith.mulf %19, %10 : vector<256x256xf32>
    %cst_10 = arith.constant dense<0.000000e+00> : vector<256xf32>
    %21 = vector.multi_reduction <add>, %20, %cst_10 [0] : vector<256x256xf32> to vector<256xf32>
    %22 = vector.shape_cast %21 : vector<256xf32> to vector<1x256xf32>
    %23 = vector.broadcast %1 : f32 to vector<1x256xf32>
    %24 = arith.addf %22, %23 : vector<1x256xf32>
    %cst_11 = arith.constant 2.000000e+00 : f32
    %25 = vector.broadcast %cst_11 : f32 to vector<1x256xf32>
    %26 = arith.mulf %25, %24 : vector<1x256xf32>
    %27 = math.tanh %26 : vector<1x256xf32>
    %c0_12 = arith.constant 0 : index
    %c0_13 = arith.constant 0 : index
    %28 = vector.load %arg6[%c0_12, %c0_13] : memref<8x256xf32, #tpu.memory_space<vmem>>, vector<1x256xf32>
    tpu.vector_store %arg6[%c0_12, %c0_13], %27 {strides = array<i32>} : memref<8x256xf32, #tpu.memory_space<vmem>>, vector<1x256xf32>,
    %29 = vector.extract_strided_slice %0 {offsets = [1, 0], sizes = [1, 256], strides = [1, 1]} : vector<8x256xf32> to vector<1x256xf32>
    %30 = vector.broadcast %29 : vector<1x256xf32> to vector<256x256xf32>
    %31 = arith.mulf %30, %4 : vector<256x256xf32>
    %32 = arith.addf %31, %7 : vector<256x256xf32>
    %cst_14 = arith.constant 0.000000e+00 : f32
    %33 = vector.broadcast %cst_14 : f32 to vector<256x256xf32>
    %34 = arith.cmpf ogt, %32, %33 : vector<256x256xf32>
    %cst_15 = arith.constant 0.00999999977 : f32
    %35 = vector.broadcast %cst_15 : f32 to vector<256x256xf32>
    %36 = arith.mulf %35, %32 : vector<256x256xf32>
    %37 = arith.select %34, %32, %36 : vector<256x256xi1>, vector<256x256xf32>
    %38 = arith.mulf %37, %10 : vector<256x256xf32>
    %cst_16 = arith.constant dense<0.000000e+00> : vector<256xf32>
    %39 = vector.multi_reduction <add>, %38, %cst_16 [0] : vector<256x256xf32> to vector<256xf32>
    %40 = vector.shape_cast %39 : vector<256xf32> to vector<1x256xf32>
    %41 = vector.broadcast %1 : f32 to vector<1x256xf32>
    %42 = arith.addf %40, %41 : vector<1x256xf32>
    %cst_17 = arith.constant 2.000000e+00 : f32
    %43 = vector.broadcast %cst_17 : f32 to vector<1x256xf32>
    %44 = arith.mulf %43, %42 : vector<1x256xf32>
    %45 = math.tanh %44 : vector<1x256xf32>
    %c1 = arith.constant 1 : index
    %c0_18 = arith.constant 0 : index
    %46 = vector.load %arg6[%c1, %c0_18] : memref<8x256xf32, #tpu.memory_space<vmem>>, vector<1x256xf32>
    tpu.vector_store %arg6[%c1, %c0_18], %45 {strides = array<i32>} : memref<8x256xf32, #tpu.memory_space<vmem>>, vector<1x256xf32>,
    %47 = vector.extract_strided_slice %0 {offsets = [2, 0], sizes = [1, 256], strides = [1, 1]} : vector<8x256xf32> to vector<1x256xf32>
    %48 = vector.broadcast %47 : vector<1x256xf32> to vector<256x256xf32>
    %49 = arith.mulf %48, %4 : vector<256x256xf32>
    %50 = arith.addf %49, %7 : vector<256x256xf32>
    %cst_19 = arith.constant 0.000000e+00 : f32
    %51 = vector.broadcast %cst_19 : f32 to vector<256x256xf32>
    %52 = arith.cmpf ogt, %50, %51 : vector<256x256xf32>
    %cst_20 = arith.constant 0.00999999977 : f32
    %53 = vector.broadcast %cst_20 : f32 to vector<256x256xf32>
    %54 = arith.mulf %53, %50 : vector<256x256xf32>
    %55 = arith.select %52, %50, %54 : vector<256x256xi1>, vector<256x256xf32>
    %56 = arith.mulf %55, %10 : vector<256x256xf32>
    %cst_21 = arith.constant dense<0.000000e+00> : vector<256xf32>
    %57 = vector.multi_reduction <add>, %56, %cst_21 [0] : vector<256x256xf32> to vector<256xf32>
    %58 = vector.shape_cast %57 : vector<256xf32> to vector<1x256xf32>
    %59 = vector.broadcast %1 : f32 to vector<1x256xf32>
    %60 = arith.addf %58, %59 : vector<1x256xf32>
    %cst_22 = arith.constant 2.000000e+00 : f32
    %61 = vector.broadcast %cst_22 : f32 to vector<1x256xf32>
    %62 = arith.mulf %61, %60 : vector<1x256xf32>
    %63 = math.tanh %62 : vector<1x256xf32>
    %c2 = arith.constant 2 : index
    %c0_23 = arith.constant 0 : index
    %64 = vector.load %arg6[%c2, %c0_23] : memref<8x256xf32, #tpu.memory_space<vmem>>, vector<1x256xf32>
    tpu.vector_store %arg6[%c2, %c0_23], %63 {strides = array<i32>} : memref<8x256xf32, #tpu.memory_space<vmem>>, vector<1x256xf32>,
    %65 = vector.extract_strided_slice %0 {offsets = [3, 0], sizes = [1, 256], strides = [1, 1]} : vector<8x256xf32> to vector<1x256xf32>
    %66 = vector.broadcast %65 : vector<1x256xf32> to vector<256x256xf32>
    %67 = arith.mulf %66, %4 : vector<256x256xf32>
    %68 = arith.addf %67, %7 : vector<256x256xf32>
    %cst_24 = arith.constant 0.000000e+00 : f32
    %69 = vector.broadcast %cst_24 : f32 to vector<256x256xf32>
    %70 = arith.cmpf ogt, %68, %69 : vector<256x256xf32>
    %cst_25 = arith.constant 0.00999999977 : f32
    %71 = vector.broadcast %cst_25 : f32 to vector<256x256xf32>
    %72 = arith.mulf %71, %68 : vector<256x256xf32>
    %73 = arith.select %70, %68, %72 : vector<256x256xi1>, vector<256x256xf32>
    %74 = arith.mulf %73, %10 : vector<256x256xf32>
    %cst_26 = arith.constant dense<0.000000e+00> : vector<256xf32>
    %75 = vector.multi_reduction <add>, %74, %cst_26 [0] : vector<256x256xf32> to vector<256xf32>
    %76 = vector.shape_cast %75 : vector<256xf32> to vector<1x256xf32>
    %77 = vector.broadcast %1 : f32 to vector<1x256xf32>
    %78 = arith.addf %76, %77 : vector<1x256xf32>
    %cst_27 = arith.constant 2.000000e+00 : f32
    %79 = vector.broadcast %cst_27 : f32 to vector<1x256xf32>
    %80 = arith.mulf %79, %78 : vector<1x256xf32>
    %81 = math.tanh %80 : vector<1x256xf32>
    %c3 = arith.constant 3 : index
    %c0_28 = arith.constant 0 : index
    %82 = vector.load %arg6[%c3, %c0_28] : memref<8x256xf32, #tpu.memory_space<vmem>>, vector<1x256xf32>
    tpu.vector_store %arg6[%c3, %c0_28], %81 {strides = array<i32>} : memref<8x256xf32, #tpu.memory_space<vmem>>, vector<1x256xf32>,
    %83 = vector.extract_strided_slice %0 {offsets = [4, 0], sizes = [1, 256], strides = [1, 1]} : vector<8x256xf32> to vector<1x256xf32>
    %84 = vector.broadcast %83 : vector<1x256xf32> to vector<256x256xf32>
    %85 = arith.mulf %84, %4 : vector<256x256xf32>
    %86 = arith.addf %85, %7 : vector<256x256xf32>
    %cst_29 = arith.constant 0.000000e+00 : f32
    %87 = vector.broadcast %cst_29 : f32 to vector<256x256xf32>
    %88 = arith.cmpf ogt, %86, %87 : vector<256x256xf32>
    %cst_30 = arith.constant 0.00999999977 : f32
    %89 = vector.broadcast %cst_30 : f32 to vector<256x256xf32>
    %90 = arith.mulf %89, %86 : vector<256x256xf32>
    %91 = arith.select %88, %86, %90 : vector<256x256xi1>, vector<256x256xf32>
    %92 = arith.mulf %91, %10 : vector<256x256xf32>
    %cst_31 = arith.constant dense<0.000000e+00> : vector<256xf32>
    %93 = vector.multi_reduction <add>, %92, %cst_31 [0] : vector<256x256xf32> to vector<256xf32>
    %94 = vector.shape_cast %93 : vector<256xf32> to vector<1x256xf32>
    %95 = vector.broadcast %1 : f32 to vector<1x256xf32>
    %96 = arith.addf %94, %95 : vector<1x256xf32>
    %cst_32 = arith.constant 2.000000e+00 : f32
    %97 = vector.broadcast %cst_32 : f32 to vector<1x256xf32>
    %98 = arith.mulf %97, %96 : vector<1x256xf32>
    %99 = math.tanh %98 : vector<1x256xf32>
    %c4 = arith.constant 4 : index
    %c0_33 = arith.constant 0 : index
    %100 = vector.load %arg6[%c4, %c0_33] : memref<8x256xf32, #tpu.memory_space<vmem>>, vector<1x256xf32>
    tpu.vector_store %arg6[%c4, %c0_33], %99 {strides = array<i32>} : memref<8x256xf32, #tpu.memory_space<vmem>>, vector<1x256xf32>,
    %101 = vector.extract_strided_slice %0 {offsets = [5, 0], sizes = [1, 256], strides = [1, 1]} : vector<8x256xf32> to vector<1x256xf32>
    %102 = vector.broadcast %101 : vector<1x256xf32> to vector<256x256xf32>
    %103 = arith.mulf %102, %4 : vector<256x256xf32>
    %104 = arith.addf %103, %7 : vector<256x256xf32>
    %cst_34 = arith.constant 0.000000e+00 : f32
    %105 = vector.broadcast %cst_34 : f32 to vector<256x256xf32>
    %106 = arith.cmpf ogt, %104, %105 : vector<256x256xf32>
    %cst_35 = arith.constant 0.00999999977 : f32
    %107 = vector.broadcast %cst_35 : f32 to vector<256x256xf32>
    %108 = arith.mulf %107, %104 : vector<256x256xf32>
    %109 = arith.select %106, %104, %108 : vector<256x256xi1>, vector<256x256xf32>
    %110 = arith.mulf %109, %10 : vector<256x256xf32>
    %cst_36 = arith.constant dense<0.000000e+00> : vector<256xf32>
    %111 = vector.multi_reduction <add>, %110, %cst_36 [0] : vector<256x256xf32> to vector<256xf32>
    %112 = vector.shape_cast %111 : vector<256xf32> to vector<1x256xf32>
    %113 = vector.broadcast %1 : f32 to vector<1x256xf32>
    %114 = arith.addf %112, %113 : vector<1x256xf32>
    %cst_37 = arith.constant 2.000000e+00 : f32
    %115 = vector.broadcast %cst_37 : f32 to vector<1x256xf32>
    %116 = arith.mulf %115, %114 : vector<1x256xf32>
    %117 = math.tanh %116 : vector<1x256xf32>
    %c5 = arith.constant 5 : index
    %c0_38 = arith.constant 0 : index
    %118 = vector.load %arg6[%c5, %c0_38] : memref<8x256xf32, #tpu.memory_space<vmem>>, vector<1x256xf32>
    tpu.vector_store %arg6[%c5, %c0_38], %117 {strides = array<i32>} : memref<8x256xf32, #tpu.memory_space<vmem>>, vector<1x256xf32>,
    %119 = vector.extract_strided_slice %0 {offsets = [6, 0], sizes = [1, 256], strides = [1, 1]} : vector<8x256xf32> to vector<1x256xf32>
    %120 = vector.broadcast %119 : vector<1x256xf32> to vector<256x256xf32>
    %121 = arith.mulf %120, %4 : vector<256x256xf32>
    %122 = arith.addf %121, %7 : vector<256x256xf32>
    %cst_39 = arith.constant 0.000000e+00 : f32
    %123 = vector.broadcast %cst_39 : f32 to vector<256x256xf32>
    %124 = arith.cmpf ogt, %122, %123 : vector<256x256xf32>
    %cst_40 = arith.constant 0.00999999977 : f32
    %125 = vector.broadcast %cst_40 : f32 to vector<256x256xf32>
    %126 = arith.mulf %125, %122 : vector<256x256xf32>
    %127 = arith.select %124, %122, %126 : vector<256x256xi1>, vector<256x256xf32>
    %128 = arith.mulf %127, %10 : vector<256x256xf32>
    %cst_41 = arith.constant dense<0.000000e+00> : vector<256xf32>
    %129 = vector.multi_reduction <add>, %128, %cst_41 [0] : vector<256x256xf32> to vector<256xf32>
    %130 = vector.shape_cast %129 : vector<256xf32> to vector<1x256xf32>
    %131 = vector.broadcast %1 : f32 to vector<1x256xf32>
    %132 = arith.addf %130, %131 : vector<1x256xf32>
    %cst_42 = arith.constant 2.000000e+00 : f32
    %133 = vector.broadcast %cst_42 : f32 to vector<1x256xf32>
    %134 = arith.mulf %133, %132 : vector<1x256xf32>
    %135 = math.tanh %134 : vector<1x256xf32>
    %c6 = arith.constant 6 : index
    %c0_43 = arith.constant 0 : index
    %136 = vector.load %arg6[%c6, %c0_43] : memref<8x256xf32, #tpu.memory_space<vmem>>, vector<1x256xf32>
    tpu.vector_store %arg6[%c6, %c0_43], %135 {strides = array<i32>} : memref<8x256xf32, #tpu.memory_space<vmem>>, vector<1x256xf32>,
    %137 = vector.extract_strided_slice %0 {offsets = [7, 0], sizes = [1, 256], strides = [1, 1]} : vector<8x256xf32> to vector<1x256xf32>
    %138 = vector.broadcast %137 : vector<1x256xf32> to vector<256x256xf32>
    %139 = arith.mulf %138, %4 : vector<256x256xf32>
    %140 = arith.addf %139, %7 : vector<256x256xf32>
    %cst_44 = arith.constant 0.000000e+00 : f32
    %141 = vector.broadcast %cst_44 : f32 to vector<256x256xf32>
    %142 = arith.cmpf ogt, %140, %141 : vector<256x256xf32>
    %cst_45 = arith.constant 0.00999999977 : f32
    %143 = vector.broadcast %cst_45 : f32 to vector<256x256xf32>
    %144 = arith.mulf %143, %140 : vector<256x256xf32>
    %145 = arith.select %142, %140, %144 : vector<256x256xi1>, vector<256x256xf32>
    %146 = arith.mulf %145, %10 : vector<256x256xf32>
    %cst_46 = arith.constant dense<0.000000e+00> : vector<256xf32>
    %147 = vector.multi_reduction <add>, %146, %cst_46 [0] : vector<256x256xf32> to vector<256xf32>
    %148 = vector.shape_cast %147 : vector<256xf32> to vector<1x256xf32>
    %149 = vector.broadcast %1 : f32 to vector<1x256xf32>
    %150 = arith.addf %148, %149 : vector<1x256xf32>
    %cst_47 = arith.constant 2.000000e+00 : f32
    %151 = vector.broadcast %cst_47 : f32 to vector<1x256xf32>
    %152 = arith.mulf %151, %150 : vector<1x256xf32>
    %153 = math.tanh %152 : vector<1x256xf32>
    %c7 = arith.constant 7 : index
    %c0_48 = arith.constant 0 : index
    %154 = vector.load %arg6[%c7, %c0_48] : memref<8x256xf32, #tpu.memory_space<vmem>>, vector<1x256xf32>
    tpu.vector_store %arg6[%c7, %c0_48], %153 {strides = array<i32>} : memref<8x256xf32, #tpu.memory_space<vmem>>, vector<1x256xf32>,
    return
  }
  func.func @transform_0(%arg0: i32) -> (i32, i32) {
    %c0_i32 = arith.constant 0 : i32
    %c0_i32_0 = arith.constant 0 : i32
    return %arg0, %c0_i32 : i32, i32
  }
  func.func @transform_1(%arg0: i32) -> (i32, i32) {
    %c0_i32 = arith.constant 0 : i32
    %c0_i32_0 = arith.constant 0 : i32
    %c0_i32_1 = arith.constant 0 : i32
    return %c0_i32, %c0_i32_0 : i32, i32
  }
  func.func @transform_2(%arg0: i32) -> (i32, i32) {
    %c0_i32 = arith.constant 0 : i32
    %c0_i32_0 = arith.constant 0 : i32
    %c0_i32_1 = arith.constant 0 : i32
    return %c0_i32, %c0_i32_0 : i32, i32
  }
  func.func @transform_3(%arg0: i32) -> (i32, i32) {
    %c0_i32 = arith.constant 0 : i32
    %c0_i32_0 = arith.constant 0 : i32
    %c0_i32_1 = arith.constant 0 : i32
    return %c0_i32, %c0_i32_0 : i32, i32
  }
  func.func @transform_4(%arg0: i32) -> (i32, i32) {
    %c0_i32 = arith.constant 0 : i32
    %c0_i32_0 = arith.constant 0 : i32
    %c0_i32_1 = arith.constant 0 : i32
    return %c0_i32, %c0_i32_0 : i32, i32
  }
  func.func @transform_5(%arg0: i32) -> (i32, i32) {
    %c0_i32 = arith.constant 0 : i32
    %c0_i32_0 = arith.constant 0 : i32
    return %arg0, %c0_i32 : i32, i32
  }
}

</mosaic_0001>

<llo_original>
// kernel: tpu_custom_call.1
$region0: #{tpu_custom_call.1}
  #allocation0 [shape = 'u32[]', space=smem, size = 0x4, offset = 0x4, fixed_abs, tag = 'smem constant byte address 0x4 - core index']
  #allocation1 [shape = 'u32[144,128]{1,0:T(1,128)}', space=vmem, size = 0x12000, scoped, tag = 'internal scratch']
  #allocation2 [shape = 'f32[1,1]{1,0:T(1,128)S(6)}', space=smem, size = 0x200, scoped, tag = 'scoped memory for tpu_custom_call.1']
  %s0 = inlined_call_operand.vmem [shape: f32[32,256], index: 0, kind: input, shape index: {}]
  %s1 = inlined_call_operand.vmem [shape: f32[256,1], index: 1, kind: input, shape index: {}]
  %s2 = inlined_call_operand.vmem [shape: f32[256,1], index: 2, kind: input, shape index: {}]
  %s3 = inlined_call_operand.vmem [shape: f32[256,1], index: 3, kind: input, shape index: {}]
  %s4 = inlined_call_operand.<no memory space> [shape: f32[1,1], index: 4, kind: input, shape index: {}]
  %s5 = inlined_call_operand.hbm [shape: f32[32,256], index: 5, kind: output, shape index: {}]
  %s6 = sld [smem:[#allocation0]]
  $region53: #{tpu_custom_call.1} parent=0
    _
  %s8 = ssub.s32 1, %s6
  %s9 = scalar_select 0, %s8, %s6
  %10 = sst [smem:[#allocation2]] %s4
  $region1: #{tpu_custom_call.1} parent=0
    #allocation3 [shape = 'u8[16384]{0}', space=vmem, size = 0x4000, scoped, tag = 'output window, operand 0']
    #allocation4 [shape = 's32[2]{0}', space=sflag, size = 0x8, scoped, tag = 'scoped memory for tpu_custom_call.1']
    %11 = vsyncpa [#allocation4], 0
    %s12 = scalar_lea.sflag [#allocation4], 1
    %13 = vsyncpa %s12, 0
    loop: start=0, step=1, limit=6
    $region2: #{tpu_custom_call.1} parent=1 // loop_pre_header
      _
    $region3: #{tpu_custom_call.1} parent=1 // loop_header
      %s15 = sphi 0, %s19
      %p16 = scmp.ge.s32.totalorder %s15, 6
      %s25 = sphi 0, %s27
      %s28 = sphi 0, %s25
      %s29 = sphi 0, %s28
      %s45 = sphi 0, %s29
      %s49 = sphi 0, %s49
      %s51 = sphi 0, %s49
      %s52 = sphi 0, %s51
      %s66 = sphi 0, %s52
      %s70 = sphi 0, %s70
      %s72 = sphi 0, %s70
      %s73 = sphi 0, %s72
      %s87 = sphi 0, %s73
      %s91 = sphi 0, %s91
      %s93 = sphi 0, %s91
      %s94 = sphi 0, %s93
      %s108 = sphi 0, %s94
      %s112 = sphi 0, %s112
      %s114 = sphi 0, %s112
      %s115 = sphi 0, %s114
      %s129 = sphi 0, %s115
      %s135 = sphi 0, %s137
      %s138 = sphi 0, %s135
      %s139 = sphi 0, %s138
      %s155 = sphi 0, %s139
    $region4: #{tpu_custom_call.1} parent=1 // loop_header_branch
      %18 = sbr.rel (%p16) target = $region8
    $region5: #{tpu_custom_call.1} parent=1 // loop_body
      %s20 = ssub.s32 %s15, 1
      %s21 = ssub.s32 %s15, 2
      %s22 = sadd.s32 %s15, 1
      %s23 = ssub.s32 %s15, %s22
      %p24 = scmp.eq.s32.totalorder %s23, 0
      %s26 = sadd.s32 %s25, 1
      %s27 = scalar_select %p24, %s25, %s26
      %p30 = pneg %p24
      %p31 = scmp.eq.s32.totalorder %s15, 3
      %p32 = por %p30, %p31
      %p33 = scmp.ne.s32.totalorder %s25, %s28
      %p34 = scmp.eq.s32.totalorder %s15, 0
      %p35 = por %p33, %p34
      %p36 = scmp.ne.s32.totalorder %s25, %s28
      %p37 = scmp.eq.s32.totalorder %s20, 3
      %p38 = por %p36, %p37
      %p39 = scmp.ne.s32.totalorder %s28, %s29
      %p40 = scmp.eq.s32.totalorder %s20, 0
      %p41 = por %p39, %p40
      %p42 = scmp.ne.s32.totalorder %s28, %s29
      %p43 = scmp.eq.s32.totalorder %s21, 3
      %p44 = por %p42, %p43
      %p46 = scmp.ne.s32.totalorder %s29, %s45
      %p47 = scmp.eq.s32.totalorder %s21, 0
      %p48 = por %p46, %p47
      %s50 = sadd.s32 %s49, 1
      %p53 = scmp.eq.s32.totalorder %s15, 3
      %p54 = scmp.ne.s32.totalorder %s49, %s51
      %p55 = scmp.eq.s32.totalorder %s15, 0
      %p56 = por %p54, %p55
      %p57 = scmp.ne.s32.totalorder %s49, %s51
      %p58 = scmp.eq.s32.totalorder %s20, 3
      %p59 = por %p57, %p58
      %p60 = scmp.ne.s32.totalorder %s51, %s52
      %p61 = scmp.eq.s32.totalorder %s20, 0
      %p62 = por %p60, %p61
      %p63 = scmp.ne.s32.totalorder %s51, %s52
      %p64 = scmp.eq.s32.totalorder %s21, 3
      %p65 = por %p63, %p64
      %p67 = scmp.ne.s32.totalorder %s52, %s66
      %p68 = scmp.eq.s32.totalorder %s21, 0
      %p69 = por %p67, %p68
      %s71 = sadd.s32 %s70, 1
      %p74 = scmp.eq.s32.totalorder %s15, 3
      %p75 = scmp.ne.s32.totalorder %s70, %s72
      %p76 = scmp.eq.s32.totalorder %s15, 0
      %p77 = por %p75, %p76
      %p78 = scmp.ne.s32.totalorder %s70, %s72
      %p79 = scmp.eq.s32.totalorder %s20, 3
      %p80 = por %p78, %p79
      %p81 = scmp.ne.s32.totalorder %s72, %s73
      %p82 = scmp.eq.s32.totalorder %s20, 0
      %p83 = por %p81, %p82
      %p84 = scmp.ne.s32.totalorder %s72, %s73
      %p85 = scmp.eq.s32.totalorder %s21, 3
      %p86 = por %p84, %p85
      %p88 = scmp.ne.s32.totalorder %s73, %s87
      %p89 = scmp.eq.s32.totalorder %s21, 0
      %p90 = por %p88, %p89
      %s92 = sadd.s32 %s91, 1
      %p95 = scmp.eq.s32.totalorder %s15, 3
      %p96 = scmp.ne.s32.totalorder %s91, %s93
      %p97 = scmp.eq.s32.totalorder %s15, 0
      %p98 = por %p96, %p97
      %p99 = scmp.ne.s32.totalorder %s91, %s93
      %p100 = scmp.eq.s32.totalorder %s20, 3
      %p101 = por %p99, %p100
      %p102 = scmp.ne.s32.totalorder %s93, %s94
      %p103 = scmp.eq.s32.totalorder %s20, 0
      %p104 = por %p102, %p103
      %p105 = scmp.ne.s32.totalorder %s93, %s94
      %p106 = scmp.eq.s32.totalorder %s21, 3
      %p107 = por %p105, %p106
      %p109 = scmp.ne.s32.totalorder %s94, %s108
      %p110 = scmp.eq.s32.totalorder %s21, 0
      %p111 = por %p109, %p110
      %s113 = sadd.s32 %s112, 1
      %p116 = scmp.eq.s32.totalorder %s15, 3
      %p117 = scmp.ne.s32.totalorder %s112, %s114
      %p118 = scmp.eq.s32.totalorder %s15, 0
      %p119 = por %p117, %p118
      %p120 = scmp.ne.s32.totalorder %s112, %s114
      %p121 = scmp.eq.s32.totalorder %s20, 3
      %p122 = por %p120, %p121
      %p123 = scmp.ne.s32.totalorder %s114, %s115
      %p124 = scmp.eq.s32.totalorder %s20, 0
      %p125 = por %p123, %p124
      %p126 = scmp.ne.s32.totalorder %s114, %s115
      %p127 = scmp.eq.s32.totalorder %s21, 3
      %p128 = por %p126, %p127
      %p130 = scmp.ne.s32.totalorder %s115, %s129
      %p131 = scmp.eq.s32.totalorder %s21, 0
      %p132 = por %p130, %p131
      %s133 = ssub.s32 %s15, %s22
      %p134 = scmp.eq.s32.totalorder %s133, 0
      %s136 = sadd.s32 %s135, 1
      %s137 = scalar_select %p134, %s135, %s136
      %p140 = pneg %p134
      %p141 = scmp.eq.s32.totalorder %s15, 3
      %p142 = por %p140, %p141
      %p143 = scmp.ne.s32.totalorder %s135, %s138
      %p144 = scmp.eq.s32.totalorder %s15, 0
      %p145 = por %p143, %p144
      %p146 = scmp.ne.s32.totalorder %s135, %s138
      %p147 = scmp.eq.s32.totalorder %s20, 3
      %p148 = por %p146, %p147
      %p149 = scmp.ne.s32.totalorder %s138, %s139
      %p150 = scmp.eq.s32.totalorder %s20, 0
      %p151 = por %p149, %p150
      %p152 = scmp.ne.s32.totalorder %s138, %s139
      %p153 = scmp.eq.s32.totalorder %s21, 3
      %p154 = por %p152, %p153
      %p156 = scmp.ne.s32.totalorder %s139, %s155
      %p157 = scmp.eq.s32.totalorder %s21, 0
      %p158 = por %p156, %p157
      %p159 = scmp.le.s32.totalorder 1, %s15
      %p160 = scmp.lt.s32.totalorder %s15, 5
      %p161 = pnand %p159, %p160
      %p162 = pneg %p161
      // Predicated region
      $region9: #{tpu_custom_call.1} parent=5 // pred_check
        _
      $region10: #{tpu_custom_call.1} parent=5 // pred_check_branch
        %164 = sbr.rel (%p161) target = $region12
      $region11: #{tpu_custom_call.1} parent=5 // pred_region
        %s165 = ssub.s32 %s15, 1
        // Predicated region
        $region13: #{tpu_custom_call.1} parent=11 // pred_check
          %p166 = pneg %p62
        $region14: #{tpu_custom_call.1} parent=11 // pred_check_branch
          %168 = sbr.rel (%p166) target = $region16
        $region15: #{tpu_custom_call.1} parent=11 // pred_region
          _
        $region16: #{tpu_custom_call.1} parent=11 // pred_fallthru
          _
        // Predicated region
        $region17: #{tpu_custom_call.1} parent=11 // pred_check
          %p169 = pneg %p83
        $region18: #{tpu_custom_call.1} parent=11 // pred_check_branch
          %171 = sbr.rel (%p169) target = $region20
        $region19: #{tpu_custom_call.1} parent=11 // pred_region
          _
        $region20: #{tpu_custom_call.1} parent=11 // pred_fallthru
          _
        // Predicated region
        $region21: #{tpu_custom_call.1} parent=11 // pred_check
          %p172 = pneg %p104
        $region22: #{tpu_custom_call.1} parent=11 // pred_check_branch
          %174 = sbr.rel (%p172) target = $region24
        $region23: #{tpu_custom_call.1} parent=11 // pred_region
          _
        $region24: #{tpu_custom_call.1} parent=11 // pred_fallthru
          _
        // Predicated region
        $region25: #{tpu_custom_call.1} parent=11 // pred_check
          %p175 = pneg %p125
        $region26: #{tpu_custom_call.1} parent=11 // pred_check_branch
          %177 = sbr.rel (%p175) target = $region28
        $region27: #{tpu_custom_call.1} parent=11 // pred_region
          _
        $region28: #{tpu_custom_call.1} parent=11 // pred_fallthru
          _
      $region12: #{tpu_custom_call.1} parent=5 // pred_fallthru
        _
      %p178 = scmp.lt.s32.totalorder %s15, 4
      // Predicated region
      $region29: #{tpu_custom_call.1} parent=5 // pred_check
        %p179 = pneg %p178
      $region30: #{tpu_custom_call.1} parent=5 // pred_check_branch
        %181 = sbr.rel (%p179) target = $region32
      $region31: #{tpu_custom_call.1} parent=5 // pred_region
        // Predicated region
        $region33: #{tpu_custom_call.1} parent=31 // pred_check
          %p182 = pneg %p35
        $region34: #{tpu_custom_call.1} parent=31 // pred_check_branch
          %184 = sbr.rel (%p182) target = $region36
        $region35: #{tpu_custom_call.1} parent=31 // pred_region
          %p185 = scmp.lt.s32.totalorder %s15, 3
          %s186 = scalar_select %p185, %s15, 3
          %s187 = smul.addr %s186, 2
          %s188 = smul.addr %s187, 8
          %s189 = scalar_lea.vmem %s0, %s188
        $region36: #{tpu_custom_call.1} parent=31 // pred_fallthru
          _
      $region32: #{tpu_custom_call.1} parent=5 // pred_fallthru
        _
      %p190 = scmp.le.s32.totalorder 1, %s15
      %p191 = scmp.lt.s32.totalorder %s15, 5
      %p192 = pnand %p190, %p191
      %p193 = pneg %p192
      // Predicated region
      $region37: #{tpu_custom_call.1} parent=5 // pred_check
        _
      $region38: #{tpu_custom_call.1} parent=5 // pred_check_branch
        %195 = sbr.rel (%p192) target = $region40
      $region39: #{tpu_custom_call.1} parent=5 // pred_region
        %s196 = ssub.s32 %s15, 1
        %p197 = scmp.lt.s32.totalorder %s20, 3
        %s198 = scalar_select %p197, %s20, 3
        %s199 = smul.addr %s198, 2
        %s200 = smul.addr %s199, 8
        %s201 = scalar_lea.vmem %s0, %s200
        %p202 = pneg %p41
        %p203 = pneg %p38
        %p204 = pneg %p62
        %p205 = pneg %p59
        %p206 = pneg %p83
        %p207 = pneg %p80
        %p208 = pneg %p104
        %p209 = pneg %p101
        %p210 = pneg %p125
        %p211 = pneg %p122
        %p212 = pneg %p151
        %p213 = pneg %p148
        %s214 = sand.u32 %s138, 1
        %s215 = scalar_lea.sflag [#allocation4], %s214
        %s216 = sand.u32 %s138, 1
        %s217 = smul.addr %s216, 16
        %s218 = scalar_lea.vmem [#allocation3], %s217
        %p219 = scmp.lt.s32.totalorder %s20, 3
        %s220 = scalar_select %p219, %s20, 3
        %s221 = smul.addr %s220, 2
        %s222 = smul.addr %s221, 8
        %s223 = scalar_lea.vmem %s0, %s222
        %v224 = vld [vmem:[%s223] sm:$0xff]
        %v225 = vld [vmem:[%s223 + $0x8] sm:$0xff]
        %s226 = sld [smem:[#allocation2]]
        %v227 = vld [vmem:[%s1] sm:$0xff]
        %v228 = vld [vmem:[%s1 + $0x8] sm:$0xff]
        %v229 = vld [vmem:[%s1 + $0x10] sm:$0xff]
        %v230 = vld [vmem:[%s1 + $0x18] sm:$0xff]
        %v231 = vld [vmem:[%s1 + $0x20] sm:$0xff]
        %v232 = vld [vmem:[%s1 + $0x28] sm:$0xff]
        %v233 = vld [vmem:[%s1 + $0x30] sm:$0xff]
        %v234 = vld [vmem:[%s1 + $0x38] sm:$0xff]
        %v235 = vld [vmem:[%s1 + $0x40] sm:$0xff]
        %v236 = vld [vmem:[%s1 + $0x48] sm:$0xff]
        %v237 = vld [vmem:[%s1 + $0x50] sm:$0xff]
        %v238 = vld [vmem:[%s1 + $0x58] sm:$0xff]
        %v239 = vld [vmem:[%s1 + $0x60] sm:$0xff]
        %v240 = vld [vmem:[%s1 + $0x68] sm:$0xff]
        %v241 = vld [vmem:[%s1 + $0x70] sm:$0xff]
        %v242 = vld [vmem:[%s1 + $0x78] sm:$0xff]
        %v243 = vld [vmem:[%s1 + $0x80] sm:$0xff]
        %v244 = vld [vmem:[%s1 + $0x88] sm:$0xff]
        %v245 = vld [vmem:[%s1 + $0x90] sm:$0xff]
        %v246 = vld [vmem:[%s1 + $0x98] sm:$0xff]
        %v247 = vld [vmem:[%s1 + $0xa0] sm:$0xff]
        %v248 = vld [vmem:[%s1 + $0xa8] sm:$0xff]
        %v249 = vld [vmem:[%s1 + $0xb0] sm:$0xff]
        %v250 = vld [vmem:[%s1 + $0xb8] sm:$0xff]
        %v251 = vld [vmem:[%s1 + $0xc0] sm:$0xff]
        %v252 = vld [vmem:[%s1 + $0xc8] sm:$0xff]
        %v253 = vld [vmem:[%s1 + $0xd0] sm:$0xff]
        %v254 = vld [vmem:[%s1 + $0xd8] sm:$0xff]
        %v255 = vld [vmem:[%s1 + $0xe0] sm:$0xff]
        %v256 = vld [vmem:[%s1 + $0xe8] sm:$0xff]
        %v257 = vld [vmem:[%s1 + $0xf0] sm:$0xff]
        %v258 = vld [vmem:[%s1 + $0xf8] sm:$0xff]
        %260 = vset.pattern.permute.xlu0 0
        %261 = vperm.xlu0 %260, %v227
        %v262 = vpop.permute.xlu0 %261
        %265 = vset.pattern.permute.xlu0 0
        %266 = vperm.xlu0 %265, %v228
        %v267 = vpop.permute.xlu0 %266
        %270 = vset.pattern.permute.xlu0 0
        %271 = vperm.xlu0 %270, %v229
        %v272 = vpop.permute.xlu0 %271
        %275 = vset.pattern.permute.xlu0 0
        %276 = vperm.xlu0 %275, %v230
        %v277 = vpop.permute.xlu0 %276
        %280 = vset.pattern.permute.xlu0 0
        %281 = vperm.xlu0 %280, %v231
        %v282 = vpop.permute.xlu0 %281
        %285 = vset.pattern.permute.xlu0 0
        %286 = vperm.xlu0 %285, %v232
        %v287 = vpop.permute.xlu0 %286
        %290 = vset.pattern.permute.xlu0 0
        %291 = vperm.xlu0 %290, %v233
        %v292 = vpop.permute.xlu0 %291
        %295 = vset.pattern.permute.xlu0 0
        %296 = vperm.xlu0 %295, %v234
        %v297 = vpop.permute.xlu0 %296
        %300 = vset.pattern.permute.xlu0 0
        %301 = vperm.xlu0 %300, %v235
        %v302 = vpop.permute.xlu0 %301
        %305 = vset.pattern.permute.xlu0 0
        %306 = vperm.xlu0 %305, %v236
        %v307 = vpop.permute.xlu0 %306
        %310 = vset.pattern.permute.xlu0 0
        %311 = vperm.xlu0 %310, %v237
        %v312 = vpop.permute.xlu0 %311
        %315 = vset.pattern.permute.xlu0 0
        %316 = vperm.xlu0 %315, %v238
        %v317 = vpop.permute.xlu0 %316
        %320 = vset.pattern.permute.xlu0 0
        %321 = vperm.xlu0 %320, %v239
        %v322 = vpop.permute.xlu0 %321
        %325 = vset.pattern.permute.xlu0 0
        %326 = vperm.xlu0 %325, %v240
        %v327 = vpop.permute.xlu0 %326
        %330 = vset.pattern.permute.xlu0 0
        %331 = vperm.xlu0 %330, %v241
        %v332 = vpop.permute.xlu0 %331
        %335 = vset.pattern.permute.xlu0 0
        %336 = vperm.xlu0 %335, %v242
        %v337 = vpop.permute.xlu0 %336
        %340 = vset.pattern.permute.xlu0 0
        %341 = vperm.xlu0 %340, %v243
        %v342 = vpop.permute.xlu0 %341
        %345 = vset.pattern.permute.xlu0 0
        %346 = vperm.xlu0 %345, %v244
        %v347 = vpop.permute.xlu0 %346
        %350 = vset.pattern.permute.xlu0 0
        %351 = vperm.xlu0 %350, %v245
        %v352 = vpop.permute.xlu0 %351
        %355 = vset.pattern.permute.xlu0 0
        %356 = vperm.xlu0 %355, %v246
        %v357 = vpop.permute.xlu0 %356
        %360 = vset.pattern.permute.xlu0 0
        %361 = vperm.xlu0 %360, %v247
        %v362 = vpop.permute.xlu0 %361
        %365 = vset.pattern.permute.xlu0 0
        %366 = vperm.xlu0 %365, %v248
        %v367 = vpop.permute.xlu0 %366
        %370 = vset.pattern.permute.xlu0 0
        %371 = vperm.xlu0 %370, %v249
        %v372 = vpop.permute.xlu0 %371
        %375 = vset.pattern.permute.xlu0 0
        %376 = vperm.xlu0 %375, %v250
        %v377 = vpop.permute.xlu0 %376
        %380 = vset.pattern.permute.xlu0 0
        %381 = vperm.xlu0 %380, %v251
        %v382 = vpop.permute.xlu0 %381
        %385 = vset.pattern.permute.xlu0 0
        %386 = vperm.xlu0 %385, %v252
        %v387 = vpop.permute.xlu0 %386
        %390 = vset.pattern.permute.xlu0 0
        %391 = vperm.xlu0 %390, %v253
        %v392 = vpop.permute.xlu0 %391
        %395 = vset.pattern.permute.xlu0 0
        %396 = vperm.xlu0 %395, %v254
        %v397 = vpop.permute.xlu0 %396
        %400 = vset.pattern.permute.xlu0 0
        %401 = vperm.xlu0 %400, %v255
        %v402 = vpop.permute.xlu0 %401
        %405 = vset.pattern.permute.xlu0 0
        %406 = vperm.xlu0 %405, %v256
        %v407 = vpop.permute.xlu0 %406
        %410 = vset.pattern.permute.xlu0 0
        %411 = vperm.xlu0 %410, %v257
        %v412 = vpop.permute.xlu0 %411
        %415 = vset.pattern.permute.xlu0 0
        %416 = vperm.xlu0 %415, %v258
        %v417 = vpop.permute.xlu0 %416
        %v419 = vld [vmem:[%s2] sm:$0xff]
        %v420 = vld [vmem:[%s2 + $0x8] sm:$0xff]
        %v421 = vld [vmem:[%s2 + $0x10] sm:$0xff]
        %v422 = vld [vmem:[%s2 + $0x18] sm:$0xff]
        %v423 = vld [vmem:[%s2 + $0x20] sm:$0xff]
        %v424 = vld [vmem:[%s2 + $0x28] sm:$0xff]
        %v425 = vld [vmem:[%s2 + $0x30] sm:$0xff]
        %v426 = vld [vmem:[%s2 + $0x38] sm:$0xff]
        %v427 = vld [vmem:[%s2 + $0x40] sm:$0xff]
        %v428 = vld [vmem:[%s2 + $0x48] sm:$0xff]
        %v429 = vld [vmem:[%s2 + $0x50] sm:$0xff]
        %v430 = vld [vmem:[%s2 + $0x58] sm:$0xff]
        %v431 = vld [vmem:[%s2 + $0x60] sm:$0xff]
        %v432 = vld [vmem:[%s2 + $0x68] sm:$0xff]
        %v433 = vld [vmem:[%s2 + $0x70] sm:$0xff]
        %v434 = vld [vmem:[%s2 + $0x78] sm:$0xff]
        %v435 = vld [vmem:[%s2 + $0x80] sm:$0xff]
        %v436 = vld [vmem:[%s2 + $0x88] sm:$0xff]
        %v437 = vld [vmem:[%s2 + $0x90] sm:$0xff]
        %v438 = vld [vmem:[%s2 + $0x98] sm:$0xff]
        %v439 = vld [vmem:[%s2 + $0xa0] sm:$0xff]
        %v440 = vld [vmem:[%s2 + $0xa8] sm:$0xff]
        %v441 = vld [vmem:[%s2 + $0xb0] sm:$0xff]
        %v442 = vld [vmem:[%s2 + $0xb8] sm:$0xff]
        %v443 = vld [vmem:[%s2 + $0xc0] sm:$0xff]
        %v444 = vld [vmem:[%s2 + $0xc8] sm:$0xff]
        %v445 = vld [vmem:[%s2 + $0xd0] sm:$0xff]
        %v446 = vld [vmem:[%s2 + $0xd8] sm:$0xff]
        %v447 = vld [vmem:[%s2 + $0xe0] sm:$0xff]
        %v448 = vld [vmem:[%s2 + $0xe8] sm:$0xff]
        %v449 = vld [vmem:[%s2 + $0xf0] sm:$0xff]
        %v450 = vld [vmem:[%s2 + $0xf8] sm:$0xff]
        %452 = vset.pattern.permute.xlu0 0
        %453 = vperm.xlu0 %452, %v419
        %v454 = vpop.permute.xlu0 %453
        %457 = vset.pattern.permute.xlu0 0
        %458 = vperm.xlu0 %457, %v420
        %v459 = vpop.permute.xlu0 %458
        %462 = vset.pattern.permute.xlu0 0
        %463 = vperm.xlu0 %462, %v421
        %v464 = vpop.permute.xlu0 %463
        %467 = vset.pattern.permute.xlu0 0
        %468 = vperm.xlu0 %467, %v422
        %v469 = vpop.permute.xlu0 %468
        %472 = vset.pattern.permute.xlu0 0
        %473 = vperm.xlu0 %472, %v423
        %v474 = vpop.permute.xlu0 %473
        %477 = vset.pattern.permute.xlu0 0
        %478 = vperm.xlu0 %477, %v424
        %v479 = vpop.permute.xlu0 %478
        %482 = vset.pattern.permute.xlu0 0
        %483 = vperm.xlu0 %482, %v425
        %v484 = vpop.permute.xlu0 %483
        %487 = vset.pattern.permute.xlu0 0
        %488 = vperm.xlu0 %487, %v426
        %v489 = vpop.permute.xlu0 %488
        %492 = vset.pattern.permute.xlu0 0
        %493 = vperm.xlu0 %492, %v427
        %v494 = vpop.permute.xlu0 %493
        %497 = vset.pattern.permute.xlu0 0
        %498 = vperm.xlu0 %497, %v428
        %v499 = vpop.permute.xlu0 %498
        %502 = vset.pattern.permute.xlu0 0
        %503 = vperm.xlu0 %502, %v429
        %v504 = vpop.permute.xlu0 %503
        %507 = vset.pattern.permute.xlu0 0
        %508 = vperm.xlu0 %507, %v430
        %v509 = vpop.permute.xlu0 %508
        %512 = vset.pattern.permute.xlu0 0
        %513 = vperm.xlu0 %512, %v431
        %v514 = vpop.permute.xlu0 %513
        %517 = vset.pattern.permute.xlu0 0
        %518 = vperm.xlu0 %517, %v432
        %v519 = vpop.permute.xlu0 %518
        %522 = vset.pattern.permute.xlu0 0
        %523 = vperm.xlu0 %522, %v433
        %v524 = vpop.permute.xlu0 %523
        %527 = vset.pattern.permute.xlu0 0
        %528 = vperm.xlu0 %527, %v434
        %v529 = vpop.permute.xlu0 %528
        %532 = vset.pattern.permute.xlu0 0
        %533 = vperm.xlu0 %532, %v435
        %v534 = vpop.permute.xlu0 %533
        %537 = vset.pattern.permute.xlu0 0
        %538 = vperm.xlu0 %537, %v436
        %v539 = vpop.permute.xlu0 %538
        %542 = vset.pattern.permute.xlu0 0
        %543 = vperm.xlu0 %542, %v437
        %v544 = vpop.permute.xlu0 %543
        %547 = vset.pattern.permute.xlu0 0
        %548 = vperm.xlu0 %547, %v438
        %v549 = vpop.permute.xlu0 %548
        %552 = vset.pattern.permute.xlu0 0
        %553 = vperm.xlu0 %552, %v439
        %v554 = vpop.permute.xlu0 %553
        %557 = vset.pattern.permute.xlu0 0
        %558 = vperm.xlu0 %557, %v440
        %v559 = vpop.permute.xlu0 %558
        %562 = vset.pattern.permute.xlu0 0
        %563 = vperm.xlu0 %562, %v441
        %v564 = vpop.permute.xlu0 %563
        %567 = vset.pattern.permute.xlu0 0
        %568 = vperm.xlu0 %567, %v442
        %v569 = vpop.permute.xlu0 %568
        %572 = vset.pattern.permute.xlu0 0
        %573 = vperm.xlu0 %572, %v443
        %v574 = vpop.permute.xlu0 %573
        %577 = vset.pattern.permute.xlu0 0
        %578 = vperm.xlu0 %577, %v444
        %v579 = vpop.permute.xlu0 %578
        %582 = vset.pattern.permute.xlu0 0
        %583 = vperm.xlu0 %582, %v445
        %v584 = vpop.permute.xlu0 %583
        %587 = vset.pattern.permute.xlu0 0
        %588 = vperm.xlu0 %587, %v446
        %v589 = vpop.permute.xlu0 %588
        %592 = vset.pattern.permute.xlu0 0
        %593 = vperm.xlu0 %592, %v447
        %v594 = vpop.permute.xlu0 %593
        %597 = vset.pattern.permute.xlu0 0
        %598 = vperm.xlu0 %597, %v448
        %v599 = vpop.permute.xlu0 %598
        %602 = vset.pattern.permute.xlu0 0
        %603 = vperm.xlu0 %602, %v449
        %v604 = vpop.permute.xlu0 %603
        %607 = vset.pattern.permute.xlu0 0
        %608 = vperm.xlu0 %607, %v450
        %v609 = vpop.permute.xlu0 %608
        %v611 = vld [vmem:[%s3] sm:$0xff]
        %v612 = vld [vmem:[%s3 + $0x8] sm:$0xff]
        %v613 = vld [vmem:[%s3 + $0x10] sm:$0xff]
        %v614 = vld [vmem:[%s3 + $0x18] sm:$0xff]
        %v615 = vld [vmem:[%s3 + $0x20] sm:$0xff]
        %v616 = vld [vmem:[%s3 + $0x28] sm:$0xff]
        %v617 = vld [vmem:[%s3 + $0x30] sm:$0xff]
        %v618 = vld [vmem:[%s3 + $0x38] sm:$0xff]
        %v619 = vld [vmem:[%s3 + $0x40] sm:$0xff]
        %v620 = vld [vmem:[%s3 + $0x48] sm:$0xff]
        %v621 = vld [vmem:[%s3 + $0x50] sm:$0xff]
        %v622 = vld [vmem:[%s3 + $0x58] sm:$0xff]
        %v623 = vld [vmem:[%s3 + $0x60] sm:$0xff]
        %v624 = vld [vmem:[%s3 + $0x68] sm:$0xff]
        %v625 = vld [vmem:[%s3 + $0x70] sm:$0xff]
        %v626 = vld [vmem:[%s3 + $0x78] sm:$0xff]
        %v627 = vld [vmem:[%s3 + $0x80] sm:$0xff]
        %v628 = vld [vmem:[%s3 + $0x88] sm:$0xff]
        %v629 = vld [vmem:[%s3 + $0x90] sm:$0xff]
        %v630 = vld [vmem:[%s3 + $0x98] sm:$0xff]
        %v631 = vld [vmem:[%s3 + $0xa0] sm:$0xff]
        %v632 = vld [vmem:[%s3 + $0xa8] sm:$0xff]
        %v633 = vld [vmem:[%s3 + $0xb0] sm:$0xff]
        %v634 = vld [vmem:[%s3 + $0xb8] sm:$0xff]
        %v635 = vld [vmem:[%s3 + $0xc0] sm:$0xff]
        %v636 = vld [vmem:[%s3 + $0xc8] sm:$0xff]
        %v637 = vld [vmem:[%s3 + $0xd0] sm:$0xff]
        %v638 = vld [vmem:[%s3 + $0xd8] sm:$0xff]
        %v639 = vld [vmem:[%s3 + $0xe0] sm:$0xff]
        %v640 = vld [vmem:[%s3 + $0xe8] sm:$0xff]
        %v641 = vld [vmem:[%s3 + $0xf0] sm:$0xff]
        %v642 = vld [vmem:[%s3 + $0xf8] sm:$0xff]
        %644 = vset.pattern.permute.xlu0 0
        %645 = vperm.xlu0 %644, %v611
        %v646 = vpop.permute.xlu0 %645
        %649 = vset.pattern.permute.xlu0 0
        %650 = vperm.xlu0 %649, %v612
        %v651 = vpop.permute.xlu0 %650
        %654 = vset.pattern.permute.xlu0 0
        %655 = vperm.xlu0 %654, %v613
        %v656 = vpop.permute.xlu0 %655
        %659 = vset.pattern.permute.xlu0 0
        %660 = vperm.xlu0 %659, %v614
        %v661 = vpop.permute.xlu0 %660
        %664 = vset.pattern.permute.xlu0 0
        %665 = vperm.xlu0 %664, %v615
        %v666 = vpop.permute.xlu0 %665
        %669 = vset.pattern.permute.xlu0 0
        %670 = vperm.xlu0 %669, %v616
        %v671 = vpop.permute.xlu0 %670
        %674 = vset.pattern.permute.xlu0 0
        %675 = vperm.xlu0 %674, %v617
        %v676 = vpop.permute.xlu0 %675
        %679 = vset.pattern.permute.xlu0 0
        %680 = vperm.xlu0 %679, %v618
        %v681 = vpop.permute.xlu0 %680
        %684 = vset.pattern.permute.xlu0 0
        %685 = vperm.xlu0 %684, %v619
        %v686 = vpop.permute.xlu0 %685
        %689 = vset.pattern.permute.xlu0 0
        %690 = vperm.xlu0 %689, %v620
        %v691 = vpop.permute.xlu0 %690
        %694 = vset.pattern.permute.xlu0 0
        %695 = vperm.xlu0 %694, %v621
        %v696 = vpop.permute.xlu0 %695
        %699 = vset.pattern.permute.xlu0 0
        %700 = vperm.xlu0 %699, %v622
        %v701 = vpop.permute.xlu0 %700
        %704 = vset.pattern.permute.xlu0 0
        %705 = vperm.xlu0 %704, %v623
        %v706 = vpop.permute.xlu0 %705
        %709 = vset.pattern.permute.xlu0 0
        %710 = vperm.xlu0 %709, %v624
        %v711 = vpop.permute.xlu0 %710
        %714 = vset.pattern.permute.xlu0 0
        %715 = vperm.xlu0 %714, %v625
        %v716 = vpop.permute.xlu0 %715
        %719 = vset.pattern.permute.xlu0 0
        %720 = vperm.xlu0 %719, %v626
        %v721 = vpop.permute.xlu0 %720
        %724 = vset.pattern.permute.xlu0 0
        %725 = vperm.xlu0 %724, %v627
        %v726 = vpop.permute.xlu0 %725
        %729 = vset.pattern.permute.xlu0 0
        %730 = vperm.xlu0 %729, %v628
        %v731 = vpop.permute.xlu0 %730
        %734 = vset.pattern.permute.xlu0 0
        %735 = vperm.xlu0 %734, %v629
        %v736 = vpop.permute.xlu0 %735
        %739 = vset.pattern.permute.xlu0 0
        %740 = vperm.xlu0 %739, %v630
        %v741 = vpop.permute.xlu0 %740
        %744 = vset.pattern.permute.xlu0 0
        %745 = vperm.xlu0 %744, %v631
        %v746 = vpop.permute.xlu0 %745
        %749 = vset.pattern.permute.xlu0 0
        %750 = vperm.xlu0 %749, %v632
        %v751 = vpop.permute.xlu0 %750
        %754 = vset.pattern.permute.xlu0 0
        %755 = vperm.xlu0 %754, %v633
        %v756 = vpop.permute.xlu0 %755
        %759 = vset.pattern.permute.xlu0 0
        %760 = vperm.xlu0 %759, %v634
        %v761 = vpop.permute.xlu0 %760
        %764 = vset.pattern.permute.xlu0 0
        %765 = vperm.xlu0 %764, %v635
        %v766 = vpop.permute.xlu0 %765
        %769 = vset.pattern.permute.xlu0 0
        %770 = vperm.xlu0 %769, %v636
        %v771 = vpop.permute.xlu0 %770
        %774 = vset.pattern.permute.xlu0 0
        %775 = vperm.xlu0 %774, %v637
        %v776 = vpop.permute.xlu0 %775
        %779 = vset.pattern.permute.xlu0 0
        %780 = vperm.xlu0 %779, %v638
        %v781 = vpop.permute.xlu0 %780
        %784 = vset.pattern.permute.xlu0 0
        %785 = vperm.xlu0 %784, %v639
        %v786 = vpop.permute.xlu0 %785
        %789 = vset.pattern.permute.xlu0 0
        %790 = vperm.xlu0 %789, %v640
        %v791 = vpop.permute.xlu0 %790
        %794 = vset.pattern.permute.xlu0 0
        %795 = vperm.xlu0 %794, %v641
        %v796 = vpop.permute.xlu0 %795
        %799 = vset.pattern.permute.xlu0 0
        %800 = vperm.xlu0 %799, %v642
        %v801 = vpop.permute.xlu0 %800
        %v803 = vlaneseq
        %v804 = vshrl.u32 %v803, 7
        %v805 = vsub.s32 0, %v804
        %v806 = vrot.slane %v224, %v805
        %v807 = vlaneseq
        %v808 = vshrl.u32 %v807, 7
        %v809 = vsub.s32 0, %v808
        %v810 = vrot.slane %v225, %v809
        %v811 = vmul.f32 %v806, %v262
        %v812 = vmul.f32 %v810, %v262
        %v813 = vmul.f32 %v806, %v267
        %v814 = vmul.f32 %v810, %v267
        %v815 = vmul.f32 %v806, %v272
        %v816 = vmul.f32 %v810, %v272
        %v817 = vmul.f32 %v806, %v277
        %v818 = vmul.f32 %v810, %v277
        %v819 = vmul.f32 %v806, %v282
        %v820 = vmul.f32 %v810, %v282
        %v821 = vmul.f32 %v806, %v287
        %v822 = vmul.f32 %v810, %v287
        %v823 = vmul.f32 %v806, %v292
        %v824 = vmul.f32 %v810, %v292
        %v825 = vmul.f32 %v806, %v297
        %v826 = vmul.f32 %v810, %v297
        %v827 = vmul.f32 %v806, %v302
        %v828 = vmul.f32 %v810, %v302
        %v829 = vmul.f32 %v806, %v307
        %v830 = vmul.f32 %v810, %v307
        %v831 = vmul.f32 %v806, %v312
        %v832 = vmul.f32 %v810, %v312
        %v833 = vmul.f32 %v806, %v317
        %v834 = vmul.f32 %v810, %v317
        %v835 = vmul.f32 %v806, %v322
        %v836 = vmul.f32 %v810, %v322
        %v837 = vmul.f32 %v806, %v327
        %v838 = vmul.f32 %v810, %v327
        %v839 = vmul.f32 %v806, %v332
        %v840 = vmul.f32 %v810, %v332
        %v841 = vmul.f32 %v806, %v337
        %v842 = vmul.f32 %v810, %v337
        %v843 = vmul.f32 %v806, %v342
        %v844 = vmul.f32 %v810, %v342
        %v845 = vmul.f32 %v806, %v347
        %v846 = vmul.f32 %v810, %v347
        %v847 = vmul.f32 %v806, %v352
        %v848 = vmul.f32 %v810, %v352
        %v849 = vmul.f32 %v806, %v357
        %v850 = vmul.f32 %v810, %v357
        %v851 = vmul.f32 %v806, %v362
        %v852 = vmul.f32 %v810, %v362
        %v853 = vmul.f32 %v806, %v367
        %v854 = vmul.f32 %v810, %v367
        %v855 = vmul.f32 %v806, %v372
        %v856 = vmul.f32 %v810, %v372
        %v857 = vmul.f32 %v806, %v377
        %v858 = vmul.f32 %v810, %v377
        %v859 = vmul.f32 %v806, %v382
        %v860 = vmul.f32 %v810, %v382
        %v861 = vmul.f32 %v806, %v387
        %v862 = vmul.f32 %v810, %v387
        %v863 = vmul.f32 %v806, %v392
        %v864 = vmul.f32 %v810, %v392
        %v865 = vmul.f32 %v806, %v397
        %v866 = vmul.f32 %v810, %v397
        %v867 = vmul.f32 %v806, %v402
        %v868 = vmul.f32 %v810, %v402
        %v869 = vmul.f32 %v806, %v407
        %v870 = vmul.f32 %v810, %v407
        %v871 = vmul.f32 %v806, %v412
        %v872 = vmul.f32 %v810, %v412
        %v873 = vmul.f32 %v806, %v417
        %v874 = vmul.f32 %v810, %v417
        %v875 = vadd.f32 %v811, %v454
        %v876 = vadd.f32 %v812, %v454
        %v877 = vadd.f32 %v813, %v459
        %v878 = vadd.f32 %v814, %v459
        %v879 = vadd.f32 %v815, %v464
        %v880 = vadd.f32 %v816, %v464
        %v881 = vadd.f32 %v817, %v469
        %v882 = vadd.f32 %v818, %v469
        %v883 = vadd.f32 %v819, %v474
        %v884 = vadd.f32 %v820, %v474
        %v885 = vadd.f32 %v821, %v479
        %v886 = vadd.f32 %v822, %v479
        %v887 = vadd.f32 %v823, %v484
        %v888 = vadd.f32 %v824, %v484
        %v889 = vadd.f32 %v825, %v489
        %v890 = vadd.f32 %v826, %v489
        %v891 = vadd.f32 %v827, %v494
        %v892 = vadd.f32 %v828, %v494
        %v893 = vadd.f32 %v829, %v499
        %v894 = vadd.f32 %v830, %v499
        %v895 = vadd.f32 %v831, %v504
        %v896 = vadd.f32 %v832, %v504
        %v897 = vadd.f32 %v833, %v509
        %v898 = vadd.f32 %v834, %v509
        %v899 = vadd.f32 %v835, %v514
        %v900 = vadd.f32 %v836, %v514
        %v901 = vadd.f32 %v837, %v519
        %v902 = vadd.f32 %v838, %v519
        %v903 = vadd.f32 %v839, %v524
        %v904 = vadd.f32 %v840, %v524
        %v905 = vadd.f32 %v841, %v529
        %v906 = vadd.f32 %v842, %v529
        %v907 = vadd.f32 %v843, %v534
        %v908 = vadd.f32 %v844, %v534
        %v909 = vadd.f32 %v845, %v539
        %v910 = vadd.f32 %v846, %v539
        %v911 = vadd.f32 %v847, %v544
        %v912 = vadd.f32 %v848, %v544
        %v913 = vadd.f32 %v849, %v549
        %v914 = vadd.f32 %v850, %v549
        %v915 = vadd.f32 %v851, %v554
        %v916 = vadd.f32 %v852, %v554
        %v917 = vadd.f32 %v853, %v559
        %v918 = vadd.f32 %v854, %v559
        %v919 = vadd.f32 %v855, %v564
        %v920 = vadd.f32 %v856, %v564
        %v921 = vadd.f32 %v857, %v569
        %v922 = vadd.f32 %v858, %v569
        %v923 = vadd.f32 %v859, %v574
        %v924 = vadd.f32 %v860, %v574
        %v925 = vadd.f32 %v861, %v579
        %v926 = vadd.f32 %v862, %v579
        %v927 = vadd.f32 %v863, %v584
        %v928 = vadd.f32 %v864, %v584
        %v929 = vadd.f32 %v865, %v589
        %v930 = vadd.f32 %v866, %v589
        %v931 = vadd.f32 %v867, %v594
        %v932 = vadd.f32 %v868, %v594
        %v933 = vadd.f32 %v869, %v599
        %v934 = vadd.f32 %v870, %v599
        %v935 = vadd.f32 %v871, %v604
        %v936 = vadd.f32 %v872, %v604
        %v937 = vadd.f32 %v873, %v609
        %v938 = vadd.f32 %v874, %v609
        %vm939 = vcmp.gt.f32.partialorder %v875, 0.0
        %vm940 = vcmp.gt.f32.partialorder %v876, 0.0
        %vm941 = vcmp.gt.f32.partialorder %v877, 0.0
        %vm942 = vcmp.gt.f32.partialorder %v878, 0.0
        %vm943 = vcmp.gt.f32.partialorder %v879, 0.0
        %vm944 = vcmp.gt.f32.partialorder %v880, 0.0
        %vm945 = vcmp.gt.f32.partialorder %v881, 0.0
        %vm946 = vcmp.gt.f32.partialorder %v882, 0.0
        %vm947 = vcmp.gt.f32.partialorder %v883, 0.0
        %vm948 = vcmp.gt.f32.partialorder %v884, 0.0
        %vm949 = vcmp.gt.f32.partialorder %v885, 0.0
        %vm950 = vcmp.gt.f32.partialorder %v886, 0.0
        %vm951 = vcmp.gt.f32.partialorder %v887, 0.0
        %vm952 = vcmp.gt.f32.partialorder %v888, 0.0
        %vm953 = vcmp.gt.f32.partialorder %v889, 0.0
        %vm954 = vcmp.gt.f32.partialorder %v890, 0.0
        %vm955 = vcmp.gt.f32.partialorder %v891, 0.0
        %vm956 = vcmp.gt.f32.partialorder %v892, 0.0
        %vm957 = vcmp.gt.f32.partialorder %v893, 0.0
        %vm958 = vcmp.gt.f32.partialorder %v894, 0.0
        %vm959 = vcmp.gt.f32.partialorder %v895, 0.0
        %vm960 = vcmp.gt.f32.partialorder %v896, 0.0
        %vm961 = vcmp.gt.f32.partialorder %v897, 0.0
        %vm962 = vcmp.gt.f32.partialorder %v898, 0.0
        %vm963 = vcmp.gt.f32.partialorder %v899, 0.0
        %vm964 = vcmp.gt.f32.partialorder %v900, 0.0
        %vm965 = vcmp.gt.f32.partialorder %v901, 0.0
        %vm966 = vcmp.gt.f32.partialorder %v902, 0.0
        %vm967 = vcmp.gt.f32.partialorder %v903, 0.0
        %vm968 = vcmp.gt.f32.partialorder %v904, 0.0
        %vm969 = vcmp.gt.f32.partialorder %v905, 0.0
        %vm970 = vcmp.gt.f32.partialorder %v906, 0.0
        %vm971 = vcmp.gt.f32.partialorder %v907, 0.0
        %vm972 = vcmp.gt.f32.partialorder %v908, 0.0
        %vm973 = vcmp.gt.f32.partialorder %v909, 0.0
        %vm974 = vcmp.gt.f32.partialorder %v910, 0.0
        %vm975 = vcmp.gt.f32.partialorder %v911, 0.0
        %vm976 = vcmp.gt.f32.partialorder %v912, 0.0
        %vm977 = vcmp.gt.f32.partialorder %v913, 0.0
        %vm978 = vcmp.gt.f32.partialorder %v914, 0.0
        %vm979 = vcmp.gt.f32.partialorder %v915, 0.0
        %vm980 = vcmp.gt.f32.partialorder %v916, 0.0
        %vm981 = vcmp.gt.f32.partialorder %v917, 0.0
        %vm982 = vcmp.gt.f32.partialorder %v918, 0.0
        %vm983 = vcmp.gt.f32.partialorder %v919, 0.0
        %vm984 = vcmp.gt.f32.partialorder %v920, 0.0
        %vm985 = vcmp.gt.f32.partialorder %v921, 0.0
        %vm986 = vcmp.gt.f32.partialorder %v922, 0.0
        %vm987 = vcmp.gt.f32.partialorder %v923, 0.0
        %vm988 = vcmp.gt.f32.partialorder %v924, 0.0
        %vm989 = vcmp.gt.f32.partialorder %v925, 0.0
        %vm990 = vcmp.gt.f32.partialorder %v926, 0.0
        %vm991 = vcmp.gt.f32.partialorder %v927, 0.0
        %vm992 = vcmp.gt.f32.partialorder %v928, 0.0
        %vm993 = vcmp.gt.f32.partialorder %v929, 0.0
        %vm994 = vcmp.gt.f32.partialorder %v930, 0.0
        %vm995 = vcmp.gt.f32.partialorder %v931, 0.0
        %vm996 = vcmp.gt.f32.partialorder %v932, 0.0
        %vm997 = vcmp.gt.f32.partialorder %v933, 0.0
        %vm998 = vcmp.gt.f32.partialorder %v934, 0.0
        %vm999 = vcmp.gt.f32.partialorder %v935, 0.0
        %vm1000 = vcmp.gt.f32.partialorder %v936, 0.0
        %vm1001 = vcmp.gt.f32.partialorder %v937, 0.0
        %vm1002 = vcmp.gt.f32.partialorder %v938, 0.0
        %v1003 = vmul.f32 %v875, 0.01
        %v1004 = vmul.f32 %v876, 0.01
        %v1005 = vmul.f32 %v877, 0.01
        %v1006 = vmul.f32 %v878, 0.01
        %v1007 = vmul.f32 %v879, 0.01
        %v1008 = vmul.f32 %v880, 0.01
        %v1009 = vmul.f32 %v881, 0.01
        %v1010 = vmul.f32 %v882, 0.01
        %v1011 = vmul.f32 %v883, 0.01
        %v1012 = vmul.f32 %v884, 0.01
        %v1013 = vmul.f32 %v885, 0.01
        %v1014 = vmul.f32 %v886, 0.01
        %v1015 = vmul.f32 %v887, 0.01
        %v1016 = vmul.f32 %v888, 0.01
        %v1017 = vmul.f32 %v889, 0.01
        %v1018 = vmul.f32 %v890, 0.01
        %v1019 = vmul.f32 %v891, 0.01
        %v1020 = vmul.f32 %v892, 0.01
        %v1021 = vmul.f32 %v893, 0.01
        %v1022 = vmul.f32 %v894, 0.01
        %v1023 = vmul.f32 %v895, 0.01
        %v1024 = vmul.f32 %v896, 0.01
        %v1025 = vmul.f32 %v897, 0.01
        %v1026 = vmul.f32 %v898, 0.01
        %v1027 = vmul.f32 %v899, 0.01
        %v1028 = vmul.f32 %v900, 0.01
        %v1029 = vmul.f32 %v901, 0.01
        %v1030 = vmul.f32 %v902, 0.01
        %v1031 = vmul.f32 %v903, 0.01
        %v1032 = vmul.f32 %v904, 0.01
        %v1033 = vmul.f32 %v905, 0.01
        %v1034 = vmul.f32 %v906, 0.01
        %v1035 = vmul.f32 %v907, 0.01
        %v1036 = vmul.f32 %v908, 0.01
        %v1037 = vmul.f32 %v909, 0.01
        %v1038 = vmul.f32 %v910, 0.01
        %v1039 = vmul.f32 %v911, 0.01
        %v1040 = vmul.f32 %v912, 0.01
        %v1041 = vmul.f32 %v913, 0.01
        %v1042 = vmul.f32 %v914, 0.01
        %v1043 = vmul.f32 %v915, 0.01
        %v1044 = vmul.f32 %v916, 0.01
        %v1045 = vmul.f32 %v917, 0.01
        %v1046 = vmul.f32 %v918, 0.01
        %v1047 = vmul.f32 %v919, 0.01
        %v1048 = vmul.f32 %v920, 0.01
        %v1049 = vmul.f32 %v921, 0.01
        %v1050 = vmul.f32 %v922, 0.01
        %v1051 = vmul.f32 %v923, 0.01
        %v1052 = vmul.f32 %v924, 0.01
        %v1053 = vmul.f32 %v925, 0.01
        %v1054 = vmul.f32 %v926, 0.01
        %v1055 = vmul.f32 %v927, 0.01
        %v1056 = vmul.f32 %v928, 0.01
        %v1057 = vmul.f32 %v929, 0.01
        %v1058 = vmul.f32 %v930, 0.01
        %v1059 = vmul.f32 %v931, 0.01
        %v1060 = vmul.f32 %v932, 0.01
        %v1061 = vmul.f32 %v933, 0.01
        %v1062 = vmul.f32 %v934, 0.01
        %v1063 = vmul.f32 %v935, 0.01
        %v1064 = vmul.f32 %v936, 0.01
        %v1065 = vmul.f32 %v937, 0.01
        %v1066 = vmul.f32 %v938, 0.01
        %v1067 = vsel %vm939, %v875, %v1003
        %v1068 = vsel %vm940, %v876, %v1004
        %v1069 = vsel %vm941, %v877, %v1005
        %v1070 = vsel %vm942, %v878, %v1006
        %v1071 = vsel %vm943, %v879, %v1007
        %v1072 = vsel %vm944, %v880, %v1008
        %v1073 = vsel %vm945, %v881, %v1009
        %v1074 = vsel %vm946, %v882, %v1010
        %v1075 = vsel %vm947, %v883, %v1011
        %v1076 = vsel %vm948, %v884, %v1012
        %v1077 = vsel %vm949, %v885, %v1013
        %v1078 = vsel %vm950, %v886, %v1014
        %v1079 = vsel %vm951, %v887, %v1015
        %v1080 = vsel %vm952, %v888, %v1016
        %v1081 = vsel %vm953, %v889, %v1017
        %v1082 = vsel %vm954, %v890, %v1018
        %v1083 = vsel %vm955, %v891, %v1019
        %v1084 = vsel %vm956, %v892, %v1020
        %v1085 = vsel %vm957, %v893, %v1021
        %v1086 = vsel %vm958, %v894, %v1022
        %v1087 = vsel %vm959, %v895, %v1023
        %v1088 = vsel %vm960, %v896, %v1024
        %v1089 = vsel %vm961, %v897, %v1025
        %v1090 = vsel %vm962, %v898, %v1026
        %v1091 = vsel %vm963, %v899, %v1027
        %v1092 = vsel %vm964, %v900, %v1028
        %v1093 = vsel %vm965, %v901, %v1029
        %v1094 = vsel %vm966, %v902, %v1030
        %v1095 = vsel %vm967, %v903, %v1031
        %v1096 = vsel %vm968, %v904, %v1032
        %v1097 = vsel %vm969, %v905, %v1033
        %v1098 = vsel %vm970, %v906, %v1034
        %v1099 = vsel %vm971, %v907, %v1035
        %v1100 = vsel %vm972, %v908, %v1036
        %v1101 = vsel %vm973, %v909, %v1037
        %v1102 = vsel %vm974, %v910, %v1038
        %v1103 = vsel %vm975, %v911, %v1039
        %v1104 = vsel %vm976, %v912, %v1040
        %v1105 = vsel %vm977, %v913, %v1041
        %v1106 = vsel %vm978, %v914, %v1042
        %v1107 = vsel %vm979, %v915, %v1043
        %v1108 = vsel %vm980, %v916, %v1044
        %v1109 = vsel %vm981, %v917, %v1045
        %v1110 = vsel %vm982, %v918, %v1046
        %v1111 = vsel %vm983, %v919, %v1047
        %v1112 = vsel %vm984, %v920, %v1048
        %v1113 = vsel %vm985, %v921, %v1049
        %v1114 = vsel %vm986, %v922, %v1050
        %v1115 = vsel %vm987, %v923, %v1051
        %v1116 = vsel %vm988, %v924, %v1052
        %v1117 = vsel %vm989, %v925, %v1053
        %v1118 = vsel %vm990, %v926, %v1054
        %v1119 = vsel %vm991, %v927, %v1055
        %v1120 = vsel %vm992, %v928, %v1056
        %v1121 = vsel %vm993, %v929, %v1057
        %v1122 = vsel %vm994, %v930, %v1058
        %v1123 = vsel %vm995, %v931, %v1059
        %v1124 = vsel %vm996, %v932, %v1060
        %v1125 = vsel %vm997, %v933, %v1061
        %v1126 = vsel %vm998, %v934, %v1062
        %v1127 = vsel %vm999, %v935, %v1063
        %v1128 = vsel %vm1000, %v936, %v1064
        %v1129 = vsel %vm1001, %v937, %v1065
        %v1130 = vsel %vm1002, %v938, %v1066
        %v1131 = vmul.f32 %v1067, %v646
        %v1132 = vmul.f32 %v1068, %v646
        %v1133 = vmul.f32 %v1069, %v651
        %v1134 = vmul.f32 %v1070, %v651
        %v1135 = vmul.f32 %v1071, %v656
        %v1136 = vmul.f32 %v1072, %v656
        %v1137 = vmul.f32 %v1073, %v661
        %v1138 = vmul.f32 %v1074, %v661
        %v1139 = vmul.f32 %v1075, %v666
        %v1140 = vmul.f32 %v1076, %v666
        %v1141 = vmul.f32 %v1077, %v671
        %v1142 = vmul.f32 %v1078, %v671
        %v1143 = vmul.f32 %v1079, %v676
        %v1144 = vmul.f32 %v1080, %v676
        %v1145 = vmul.f32 %v1081, %v681
        %v1146 = vmul.f32 %v1082, %v681
        %v1147 = vmul.f32 %v1083, %v686
        %v1148 = vmul.f32 %v1084, %v686
        %v1149 = vmul.f32 %v1085, %v691
        %v1150 = vmul.f32 %v1086, %v691
        %v1151 = vmul.f32 %v1087, %v696
        %v1152 = vmul.f32 %v1088, %v696
        %v1153 = vmul.f32 %v1089, %v701
        %v1154 = vmul.f32 %v1090, %v701
        %v1155 = vmul.f32 %v1091, %v706
        %v1156 = vmul.f32 %v1092, %v706
        %v1157 = vmul.f32 %v1093, %v711
        %v1158 = vmul.f32 %v1094, %v711
        %v1159 = vmul.f32 %v1095, %v716
        %v1160 = vmul.f32 %v1096, %v716
        %v1161 = vmul.f32 %v1097, %v721
        %v1162 = vmul.f32 %v1098, %v721
        %v1163 = vmul.f32 %v1099, %v726
        %v1164 = vmul.f32 %v1100, %v726
        %v1165 = vmul.f32 %v1101, %v731
        %v1166 = vmul.f32 %v1102, %v731
        %v1167 = vmul.f32 %v1103, %v736
        %v1168 = vmul.f32 %v1104, %v736
        %v1169 = vmul.f32 %v1105, %v741
        %v1170 = vmul.f32 %v1106, %v741
        %v1171 = vmul.f32 %v1107, %v746
        %v1172 = vmul.f32 %v1108, %v746
        %v1173 = vmul.f32 %v1109, %v751
        %v1174 = vmul.f32 %v1110, %v751
        %v1175 = vmul.f32 %v1111, %v756
        %v1176 = vmul.f32 %v1112, %v756
        %v1177 = vmul.f32 %v1113, %v761
        %v1178 = vmul.f32 %v1114, %v761
        %v1179 = vmul.f32 %v1115, %v766
        %v1180 = vmul.f32 %v1116, %v766
        %v1181 = vmul.f32 %v1117, %v771
        %v1182 = vmul.f32 %v1118, %v771
        %v1183 = vmul.f32 %v1119, %v776
        %v1184 = vmul.f32 %v1120, %v776
        %v1185 = vmul.f32 %v1121, %v781
        %v1186 = vmul.f32 %v1122, %v781
        %v1187 = vmul.f32 %v1123, %v786
        %v1188 = vmul.f32 %v1124, %v786
        %v1189 = vmul.f32 %v1125, %v791
        %v1190 = vmul.f32 %v1126, %v791
        %v1191 = vmul.f32 %v1127, %v796
        %v1192 = vmul.f32 %v1128, %v796
        %v1193 = vmul.f32 %v1129, %v801
        %v1194 = vmul.f32 %v1130, %v801
        %v1195 = vadd.f32 %v1131, %v1133
        %v1196 = vadd.f32 %v1195, %v1135
        %v1197 = vadd.f32 %v1196, %v1137
        %v1198 = vadd.f32 %v1197, %v1139
        %v1199 = vadd.f32 %v1198, %v1141
        %v1200 = vadd.f32 %v1199, %v1143
        %v1201 = vadd.f32 %v1200, %v1145
        %v1202 = vadd.f32 %v1201, %v1147
        %v1203 = vadd.f32 %v1202, %v1149
        %v1204 = vadd.f32 %v1203, %v1151
        %v1205 = vadd.f32 %v1204, %v1153
        %v1206 = vadd.f32 %v1205, %v1155
        %v1207 = vadd.f32 %v1206, %v1157
        %v1208 = vadd.f32 %v1207, %v1159
        %v1209 = vadd.f32 %v1208, %v1161
        %v1210 = vadd.f32 %v1209, %v1163
        %v1211 = vadd.f32 %v1210, %v1165
        %v1212 = vadd.f32 %v1211, %v1167
        %v1213 = vadd.f32 %v1212, %v1169
        %v1214 = vadd.f32 %v1213, %v1171
        %v1215 = vadd.f32 %v1214, %v1173
        %v1216 = vadd.f32 %v1215, %v1175
        %v1217 = vadd.f32 %v1216, %v1177
        %v1218 = vadd.f32 %v1217, %v1179
        %v1219 = vadd.f32 %v1218, %v1181
        %v1220 = vadd.f32 %v1219, %v1183
        %v1221 = vadd.f32 %v1220, %v1185
        %v1222 = vadd.f32 %v1221, %v1187
        %v1223 = vadd.f32 %v1222, %v1189
        %v1224 = vadd.f32 %v1223, %v1191
        %v1225 = vadd.f32 %v1224, %v1193
        %v1226 = vrot.slane %v1225, 4
        %v1227 = vadd.f32 %v1225, %v1226
        %v1228 = vrot.slane %v1227, 2
        %v1229 = vadd.f32 %v1227, %v1228
        %v1230 = vrot.slane %v1229, 1
        %v1231 = vadd.f32 %v1229, %v1230
        %v1232 = vadd.f32 %v1132, %v1134
        %v1233 = vadd.f32 %v1232, %v1136
        %v1234 = vadd.f32 %v1233, %v1138
        %v1235 = vadd.f32 %v1234, %v1140
        %v1236 = vadd.f32 %v1235, %v1142
        %v1237 = vadd.f32 %v1236, %v1144
        %v1238 = vadd.f32 %v1237, %v1146
        %v1239 = vadd.f32 %v1238, %v1148
        %v1240 = vadd.f32 %v1239, %v1150
        %v1241 = vadd.f32 %v1240, %v1152
        %v1242 = vadd.f32 %v1241, %v1154
        %v1243 = vadd.f32 %v1242, %v1156
        %v1244 = vadd.f32 %v1243, %v1158
        %v1245 = vadd.f32 %v1244, %v1160
        %v1246 = vadd.f32 %v1245, %v1162
        %v1247 = vadd.f32 %v1246, %v1164
        %v1248 = vadd.f32 %v1247, %v1166
        %v1249 = vadd.f32 %v1248, %v1168
        %v1250 = vadd.f32 %v1249, %v1170
        %v1251 = vadd.f32 %v1250, %v1172
        %v1252 = vadd.f32 %v1251, %v1174
        %v1253 = vadd.f32 %v1252, %v1176
        %v1254 = vadd.f32 %v1253, %v1178
        %v1255 = vadd.f32 %v1254, %v1180
        %v1256 = vadd.f32 %v1255, %v1182
        %v1257 = vadd.f32 %v1256, %v1184
        %v1258 = vadd.f32 %v1257, %v1186
        %v1259 = vadd.f32 %v1258, %v1188
        %v1260 = vadd.f32 %v1259, %v1190
        %v1261 = vadd.f32 %v1260, %v1192
        %v1262 = vadd.f32 %v1261, %v1194
        %v1263 = vrot.slane %v1262, 4
        %v1264 = vadd.f32 %v1262, %v1263
        %v1265 = vrot.slane %v1264, 2
        %v1266 = vadd.f32 %v1264, %v1265
        %v1267 = vrot.slane %v1266, 1
        %v1268 = vadd.f32 %v1266, %v1267
        %v1269 = vstv %s226
        %v1270 = vadd.f32 %v1231, %v1269
        %v1271 = vadd.f32 %v1268, %v1269
        %v1272 = vmul.f32 %v1270, 2.0
        %v1273 = vmul.f32 %v1271, 2.0
        %v1274 = vtanh.pop %v1272
        %v1275 = vtanh.pop %v1273
        %v1278 = vcombine.low %v1274, %v1275
        %v1280 = vunpack.c.l.s4 1966171168
        %v1281 = vunpack.c.0.s8 %v1280
        %v1282 = vlaneseq
        %v1283 = vshrl.u32 %v1282, 7
        %v1284 = vsub.s32 %v1281, %v1283
        %v1285 = vrot.slane %v1278, %v1284
        %v1287 = vunpack.c.l.s4 1966171168
        %v1288 = vunpack.c.0.s8 %v1287
        %v1289 = vlaneseq
        %v1290 = vshrl.u32 %v1289, 7
        %v1291 = vsub.s32 %v1288, %v1290
        %v1292 = vrot.slane %v1285, %v1291
        %v1294 = vlaneseq
        %vm1295 = vcmp.ge.s32.totalorder %v1294, 0
        %vm1296 = vcmp.lt.s32.totalorder %v1294, 256
        %vm1297 = vmand %vm1295, %vm1296
        %1298 = vst.msk [vmem:[%s218] ss:$8 sm:$0x3] %vm1297, %v1292
        %1299 = vst.msk [vmem:[%s218] ss:$8 sm:$0x0] %vm1297, %v1292
        %v1300 = vlaneseq
        %v1301 = vshrl.u32 %v1300, 7
        %v1302 = vsub.s32 1, %v1301
        %v1303 = vrot.slane %v224, %v1302
        %v1304 = vlaneseq
        %v1305 = vshrl.u32 %v1304, 7
        %v1306 = vsub.s32 1, %v1305
        %v1307 = vrot.slane %v225, %v1306
        %v1308 = vmul.f32 %v1303, %v262
        %v1309 = vmul.f32 %v1307, %v262
        %v1310 = vmul.f32 %v1303, %v267
        %v1311 = vmul.f32 %v1307, %v267
        %v1312 = vmul.f32 %v1303, %v272
        %v1313 = vmul.f32 %v1307, %v272
        %v1314 = vmul.f32 %v1303, %v277
        %v1315 = vmul.f32 %v1307, %v277
        %v1316 = vmul.f32 %v1303, %v282
        %v1317 = vmul.f32 %v1307, %v282
        %v1318 = vmul.f32 %v1303, %v287
        %v1319 = vmul.f32 %v1307, %v287
        %v1320 = vmul.f32 %v1303, %v292
        %v1321 = vmul.f32 %v1307, %v292
        %v1322 = vmul.f32 %v1303, %v297
        %v1323 = vmul.f32 %v1307, %v297
        %v1324 = vmul.f32 %v1303, %v302
        %v1325 = vmul.f32 %v1307, %v302
        %v1326 = vmul.f32 %v1303, %v307
        %v1327 = vmul.f32 %v1307, %v307
        %v1328 = vmul.f32 %v1303, %v312
        %v1329 = vmul.f32 %v1307, %v312
        %v1330 = vmul.f32 %v1303, %v317
        %v1331 = vmul.f32 %v1307, %v317
        %v1332 = vmul.f32 %v1303, %v322
        %v1333 = vmul.f32 %v1307, %v322
        %v1334 = vmul.f32 %v1303, %v327
        %v1335 = vmul.f32 %v1307, %v327
        %v1336 = vmul.f32 %v1303, %v332
        %v1337 = vmul.f32 %v1307, %v332
        %v1338 = vmul.f32 %v1303, %v337
        %v1339 = vmul.f32 %v1307, %v337
        %v1340 = vmul.f32 %v1303, %v342
        %v1341 = vmul.f32 %v1307, %v342
        %v1342 = vmul.f32 %v1303, %v347
        %v1343 = vmul.f32 %v1307, %v347
        %v1344 = vmul.f32 %v1303, %v352
        %v1345 = vmul.f32 %v1307, %v352
        %v1346 = vmul.f32 %v1303, %v357
        %v1347 = vmul.f32 %v1307, %v357
        %v1348 = vmul.f32 %v1303, %v362
        %v1349 = vmul.f32 %v1307, %v362
        %v1350 = vmul.f32 %v1303, %v367
        %v1351 = vmul.f32 %v1307, %v367
        %v1352 = vmul.f32 %v1303, %v372
        %v1353 = vmul.f32 %v1307, %v372
        %v1354 = vmul.f32 %v1303, %v377
        %v1355 = vmul.f32 %v1307, %v377
        %v1356 = vmul.f32 %v1303, %v382
        %v1357 = vmul.f32 %v1307, %v382
        %v1358 = vmul.f32 %v1303, %v387
        %v1359 = vmul.f32 %v1307, %v387
        %v1360 = vmul.f32 %v1303, %v392
        %v1361 = vmul.f32 %v1307, %v392
        %v1362 = vmul.f32 %v1303, %v397
        %v1363 = vmul.f32 %v1307, %v397
        %v1364 = vmul.f32 %v1303, %v402
        %v1365 = vmul.f32 %v1307, %v402
        %v1366 = vmul.f32 %v1303, %v407
        %v1367 = vmul.f32 %v1307, %v407
        %v1368 = vmul.f32 %v1303, %v412
        %v1369 = vmul.f32 %v1307, %v412
        %v1370 = vmul.f32 %v1303, %v417
        %v1371 = vmul.f32 %v1307, %v417
        %v1372 = vadd.f32 %v1308, %v454
        %v1373 = vadd.f32 %v1309, %v454
        %v1374 = vadd.f32 %v1310, %v459
        %v1375 = vadd.f32 %v1311, %v459
        %v1376 = vadd.f32 %v1312, %v464
        %v1377 = vadd.f32 %v1313, %v464
        %v1378 = vadd.f32 %v1314, %v469
        %v1379 = vadd.f32 %v1315, %v469
        %v1380 = vadd.f32 %v1316, %v474
        %v1381 = vadd.f32 %v1317, %v474
        %v1382 = vadd.f32 %v1318, %v479
        %v1383 = vadd.f32 %v1319, %v479
        %v1384 = vadd.f32 %v1320, %v484
        %v1385 = vadd.f32 %v1321, %v484
        %v1386 = vadd.f32 %v1322, %v489
        %v1387 = vadd.f32 %v1323, %v489
        %v1388 = vadd.f32 %v1324, %v494
        %v1389 = vadd.f32 %v1325, %v494
        %v1390 = vadd.f32 %v1326, %v499
        %v1391 = vadd.f32 %v1327, %v499
        %v1392 = vadd.f32 %v1328, %v504
        %v1393 = vadd.f32 %v1329, %v504
        %v1394 = vadd.f32 %v1330, %v509
        %v1395 = vadd.f32 %v1331, %v509
        %v1396 = vadd.f32 %v1332, %v514
        %v1397 = vadd.f32 %v1333, %v514
        %v1398 = vadd.f32 %v1334, %v519
        %v1399 = vadd.f32 %v1335, %v519
        %v1400 = vadd.f32 %v1336, %v524
        %v1401 = vadd.f32 %v1337, %v524
        %v1402 = vadd.f32 %v1338, %v529
        %v1403 = vadd.f32 %v1339, %v529
        %v1404 = vadd.f32 %v1340, %v534
        %v1405 = vadd.f32 %v1341, %v534
        %v1406 = vadd.f32 %v1342, %v539
        %v1407 = vadd.f32 %v1343, %v539
        %v1408 = vadd.f32 %v1344, %v544
        %v1409 = vadd.f32 %v1345, %v544
        %v1410 = vadd.f32 %v1346, %v549
        %v1411 = vadd.f32 %v1347, %v549
        %v1412 = vadd.f32 %v1348, %v554
        %v1413 = vadd.f32 %v1349, %v554
        %v1414 = vadd.f32 %v1350, %v559
        %v1415 = vadd.f32 %v1351, %v559
        %v1416 = vadd.f32 %v1352, %v564
        %v1417 = vadd.f32 %v1353, %v564
        %v1418 = vadd.f32 %v1354, %v569
        %v1419 = vadd.f32 %v1355, %v569
        %v1420 = vadd.f32 %v1356, %v574
        %v1421 = vadd.f32 %v1357, %v574
        %v1422 = vadd.f32 %v1358, %v579
        %v1423 = vadd.f32 %v1359, %v579
        %v1424 = vadd.f32 %v1360, %v584
        %v1425 = vadd.f32 %v1361, %v584
        %v1426 = vadd.f32 %v1362, %v589
        %v1427 = vadd.f32 %v1363, %v589
        %v1428 = vadd.f32 %v1364, %v594
        %v1429 = vadd.f32 %v1365, %v594
        %v1430 = vadd.f32 %v1366, %v599
        %v1431 = vadd.f32 %v1367, %v599
        %v1432 = vadd.f32 %v1368, %v604
        %v1433 = vadd.f32 %v1369, %v604
        %v1434 = vadd.f32 %v1370, %v609
        %v1435 = vadd.f32 %v1371, %v609
        %vm1436 = vcmp.gt.f32.partialorder %v1372, 0.0
        %vm1437 = vcmp.gt.f32.partialorder %v1373, 0.0
        %vm1438 = vcmp.gt.f32.partialorder %v1374, 0.0
        %vm1439 = vcmp.gt.f32.partialorder %v1375, 0.0
        %vm1440 = vcmp.gt.f32.partialorder %v1376, 0.0
        %vm1441 = vcmp.gt.f32.partialorder %v1377, 0.0
        %vm1442 = vcmp.gt.f32.partialorder %v1378, 0.0
        %vm1443 = vcmp.gt.f32.partialorder %v1379, 0.0
        %vm1444 = vcmp.gt.f32.partialorder %v1380, 0.0
        %vm1445 = vcmp.gt.f32.partialorder %v1381, 0.0
        %vm1446 = vcmp.gt.f32.partialorder %v1382, 0.0
        %vm1447 = vcmp.gt.f32.partialorder %v1383, 0.0
        %vm1448 = vcmp.gt.f32.partialorder %v1384, 0.0
        %vm1449 = vcmp.gt.f32.partialorder %v1385, 0.0
        %vm1450 = vcmp.gt.f32.partialorder %v1386, 0.0
        %vm1451 = vcmp.gt.f32.partialorder %v1387, 0.0
        %vm1452 = vcmp.gt.f32.partialorder %v1388, 0.0
        %vm1453 = vcmp.gt.f32.partialorder %v1389, 0.0
        %vm1454 = vcmp.gt.f32.partialorder %v1390, 0.0
        %vm1455 = vcmp.gt.f32.partialorder %v1391, 0.0
        %vm1456 = vcmp.gt.f32.partialorder %v1392, 0.0
        %vm1457 = vcmp.gt.f32.partialorder %v1393, 0.0
        %vm1458 = vcmp.gt.f32.partialorder %v1394, 0.0
        %vm1459 = vcmp.gt.f32.partialorder %v1395, 0.0
        %vm1460 = vcmp.gt.f32.partialorder %v1396, 0.0
        %vm1461 = vcmp.gt.f32.partialorder %v1397, 0.0
        %vm1462 = vcmp.gt.f32.partialorder %v1398, 0.0
        %vm1463 = vcmp.gt.f32.partialorder %v1399, 0.0
        %vm1464 = vcmp.gt.f32.partialorder %v1400, 0.0
        %vm1465 = vcmp.gt.f32.partialorder %v1401, 0.0
        %vm1466 = vcmp.gt.f32.partialorder %v1402, 0.0
        %vm1467 = vcmp.gt.f32.partialorder %v1403, 0.0
        %vm1468 = vcmp.gt.f32.partialorder %v1404, 0.0
        %vm1469 = vcmp.gt.f32.partialorder %v1405, 0.0
        %vm1470 = vcmp.gt.f32.partialorder %v1406, 0.0
        %vm1471 = vcmp.gt.f32.partialorder %v1407, 0.0
        %vm1472 = vcmp.gt.f32.partialorder %v1408, 0.0
        %vm1473 = vcmp.gt.f32.partialorder %v1409, 0.0
        %vm1474 = vcmp.gt.f32.partialorder %v1410, 0.0
        %vm1475 = vcmp.gt.f32.partialorder %v1411, 0.0
        %vm1476 = vcmp.gt.f32.partialorder %v1412, 0.0
        %vm1477 = vcmp.gt.f32.partialorder %v1413, 0.0
        %vm1478 = vcmp.gt.f32.partialorder %v1414, 0.0
        %vm1479 = vcmp.gt.f32.partialorder %v1415, 0.0
        %vm1480 = vcmp.gt.f32.partialorder %v1416, 0.0
        %vm1481 = vcmp.gt.f32.partialorder %v1417, 0.0
        %vm1482 = vcmp.gt.f32.partialorder %v1418, 0.0
        %vm1483 = vcmp.gt.f32.partialorder %v1419, 0.0
        %vm1484 = vcmp.gt.f32.partialorder %v1420, 0.0
        %vm1485 = vcmp.gt.f32.partialorder %v1421, 0.0
        %vm1486 = vcmp.gt.f32.partialorder %v1422, 0.0
        %vm1487 = vcmp.gt.f32.partialorder %v1423, 0.0
        %vm1488 = vcmp.gt.f32.partialorder %v1424, 0.0
        %vm1489 = vcmp.gt.f32.partialorder %v1425, 0.0
        %vm1490 = vcmp.gt.f32.partialorder %v1426, 0.0
        %vm1491 = vcmp.gt.f32.partialorder %v1427, 0.0
        %vm1492 = vcmp.gt.f32.partialorder %v1428, 0.0
        %vm1493 = vcmp.gt.f32.partialorder %v1429, 0.0
        %vm1494 = vcmp.gt.f32.partialorder %v1430, 0.0
        %vm1495 = vcmp.gt.f32.partialorder %v1431, 0.0
        %vm1496 = vcmp.gt.f32.partialorder %v1432, 0.0
        %vm1497 = vcmp.gt.f32.partialorder %v1433, 0.0
        %vm1498 = vcmp.gt.f32.partialorder %v1434, 0.0
        %vm1499 = vcmp.gt.f32.partialorder %v1435, 0.0
        %v1500 = vmul.f32 %v1372, 0.01
        %v1501 = vmul.f32 %v1373, 0.01
        %v1502 = vmul.f32 %v1374, 0.01
        %v1503 = vmul.f32 %v1375, 0.01
        %v1504 = vmul.f32 %v1376, 0.01
        %v1505 = vmul.f32 %v1377, 0.01
        %v1506 = vmul.f32 %v1378, 0.01
        %v1507 = vmul.f32 %v1379, 0.01
        %v1508 = vmul.f32 %v1380, 0.01
        %v1509 = vmul.f32 %v1381, 0.01
        %v1510 = vmul.f32 %v1382, 0.01
        %v1511 = vmul.f32 %v1383, 0.01
        %v1512 = vmul.f32 %v1384, 0.01
        %v1513 = vmul.f32 %v1385, 0.01
        %v1514 = vmul.f32 %v1386, 0.01
        %v1515 = vmul.f32 %v1387, 0.01
        %v1516 = vmul.f32 %v1388, 0.01
        %v1517 = vmul.f32 %v1389, 0.01
        %v1518 = vmul.f32 %v1390, 0.01
        %v1519 = vmul.f32 %v1391, 0.01
        %v1520 = vmul.f32 %v1392, 0.01
        %v1521 = vmul.f32 %v1393, 0.01
        %v1522 = vmul.f32 %v1394, 0.01
        %v1523 = vmul.f32 %v1395, 0.01
        %v1524 = vmul.f32 %v1396, 0.01
        %v1525 = vmul.f32 %v1397, 0.01
        %v1526 = vmul.f32 %v1398, 0.01
        %v1527 = vmul.f32 %v1399, 0.01
        %v1528 = vmul.f32 %v1400, 0.01
        %v1529 = vmul.f32 %v1401, 0.01
        %v1530 = vmul.f32 %v1402, 0.01
        %v1531 = vmul.f32 %v1403, 0.01
        %v1532 = vmul.f32 %v1404, 0.01
        %v1533 = vmul.f32 %v1405, 0.01
        %v1534 = vmul.f32 %v1406, 0.01
        %v1535 = vmul.f32 %v1407, 0.01
        %v1536 = vmul.f32 %v1408, 0.01
        %v1537 = vmul.f32 %v1409, 0.01
        %v1538 = vmul.f32 %v1410, 0.01
        %v1539 = vmul.f32 %v1411, 0.01
        %v1540 = vmul.f32 %v1412, 0.01
        %v1541 = vmul.f32 %v1413, 0.01
        %v1542 = vmul.f32 %v1414, 0.01
        %v1543 = vmul.f32 %v1415, 0.01
        %v1544 = vmul.f32 %v1416, 0.01
        %v1545 = vmul.f32 %v1417, 0.01
        %v1546 = vmul.f32 %v1418, 0.01
        %v1547 = vmul.f32 %v1419, 0.01
        %v1548 = vmul.f32 %v1420, 0.01
        %v1549 = vmul.f32 %v1421, 0.01
        %v1550 = vmul.f32 %v1422, 0.01
        %v1551 = vmul.f32 %v1423, 0.01
        %v1552 = vmul.f32 %v1424, 0.01
        %v1553 = vmul.f32 %v1425, 0.01
        %v1554 = vmul.f32 %v1426, 0.01
        %v1555 = vmul.f32 %v1427, 0.01
        %v1556 = vmul.f32 %v1428, 0.01
        %v1557 = vmul.f32 %v1429, 0.01
        %v1558 = vmul.f32 %v1430, 0.01
        %v1559 = vmul.f32 %v1431, 0.01
        %v1560 = vmul.f32 %v1432, 0.01
        %v1561 = vmul.f32 %v1433, 0.01
        %v1562 = vmul.f32 %v1434, 0.01
        %v1563 = vmul.f32 %v1435, 0.01
        %v1564 = vsel %vm1436, %v1372, %v1500
        %v1565 = vsel %vm1437, %v1373, %v1501
        %v1566 = vsel %vm1438, %v1374, %v1502
        %v1567 = vsel %vm1439, %v1375, %v1503
        %v1568 = vsel %vm1440, %v1376, %v1504
        %v1569 = vsel %vm1441, %v1377, %v1505
        %v1570 = vsel %vm1442, %v1378, %v1506
        %v1571 = vsel %vm1443, %v1379, %v1507
        %v1572 = vsel %vm1444, %v1380, %v1508
        %v1573 = vsel %vm1445, %v1381, %v1509
        %v1574 = vsel %vm1446, %v1382, %v1510
        %v1575 = vsel %vm1447, %v1383, %v1511
        %v1576 = vsel %vm1448, %v1384, %v1512
        %v1577 = vsel %vm1449, %v1385, %v1513
        %v1578 = vsel %vm1450, %v1386, %v1514
        %v1579 = vsel %vm1451, %v1387, %v1515
        %v1580 = vsel %vm1452, %v1388, %v1516
        %v1581 = vsel %vm1453, %v1389, %v1517
        %v1582 = vsel %vm1454, %v1390, %v1518
        %v1583 = vsel %vm1455, %v1391, %v1519
        %v1584 = vsel %vm1456, %v1392, %v1520
        %v1585 = vsel %vm1457, %v1393, %v1521
        %v1586 = vsel %vm1458, %v1394, %v1522
        %v1587 = vsel %vm1459, %v1395, %v1523
        %v1588 = vsel %vm1460, %v1396, %v1524
        %v1589 = vsel %vm1461, %v1397, %v1525
        %v1590 = vsel %vm1462, %v1398, %v1526
        %v1591 = vsel %vm1463, %v1399, %v1527
        %v1592 = vsel %vm1464, %v1400, %v1528
        %v1593 = vsel %vm1465, %v1401, %v1529
        %v1594 = vsel %vm1466, %v1402, %v1530
        %v1595 = vsel %vm1467, %v1403, %v1531
        %v1596 = vsel %vm1468, %v1404, %v1532
        %v1597 = vsel %vm1469, %v1405, %v1533
        %v1598 = vsel %vm1470, %v1406, %v1534
        %v1599 = vsel %vm1471, %v1407, %v1535
        %v1600 = vsel %vm1472, %v1408, %v1536
        %v1601 = vsel %vm1473, %v1409, %v1537
        %v1602 = vsel %vm1474, %v1410, %v1538
        %v1603 = vsel %vm1475, %v1411, %v1539
        %v1604 = vsel %vm1476, %v1412, %v1540
        %v1605 = vsel %vm1477, %v1413, %v1541
        %v1606 = vsel %vm1478, %v1414, %v1542
        %v1607 = vsel %vm1479, %v1415, %v1543
        %v1608 = vsel %vm1480, %v1416, %v1544
        %v1609 = vsel %vm1481, %v1417, %v1545
        %v1610 = vsel %vm1482, %v1418, %v1546
        %v1611 = vsel %vm1483, %v1419, %v1547
        %v1612 = vsel %vm1484, %v1420, %v1548
        %v1613 = vsel %vm1485, %v1421, %v1549
        %v1614 = vsel %vm1486, %v1422, %v1550
        %v1615 = vsel %vm1487, %v1423, %v1551
        %v1616 = vsel %vm1488, %v1424, %v1552
        %v1617 = vsel %vm1489, %v1425, %v1553
        %v1618 = vsel %vm1490, %v1426, %v1554
        %v1619 = vsel %vm1491, %v1427, %v1555
        %v1620 = vsel %vm1492, %v1428, %v1556
        %v1621 = vsel %vm1493, %v1429, %v1557
        %v1622 = vsel %vm1494, %v1430, %v1558
        %v1623 = vsel %vm1495, %v1431, %v1559
        %v1624 = vsel %vm1496, %v1432, %v1560
        %v1625 = vsel %vm1497, %v1433, %v1561
        %v1626 = vsel %vm1498, %v1434, %v1562
        %v1627 = vsel %vm1499, %v1435, %v1563
        %v1628 = vmul.f32 %v1564, %v646
        %v1629 = vmul.f32 %v1565, %v646
        %v1630 = vmul.f32 %v1566, %v651
        %v1631 = vmul.f32 %v1567, %v651
        %v1632 = vmul.f32 %v1568, %v656
        %v1633 = vmul.f32 %v1569, %v656
        %v1634 = vmul.f32 %v1570, %v661
        %v1635 = vmul.f32 %v1571, %v661
        %v1636 = vmul.f32 %v1572, %v666
        %v1637 = vmul.f32 %v1573, %v666
        %v1638 = vmul.f32 %v1574, %v671
        %v1639 = vmul.f32 %v1575, %v671
        %v1640 = vmul.f32 %v1576, %v676
        %v1641 = vmul.f32 %v1577, %v676
        %v1642 = vmul.f32 %v1578, %v681
        %v1643 = vmul.f32 %v1579, %v681
        %v1644 = vmul.f32 %v1580, %v686
        %v1645 = vmul.f32 %v1581, %v686
        %v1646 = vmul.f32 %v1582, %v691
        %v1647 = vmul.f32 %v1583, %v691
        %v1648 = vmul.f32 %v1584, %v696
        %v1649 = vmul.f32 %v1585, %v696
        %v1650 = vmul.f32 %v1586, %v701
        %v1651 = vmul.f32 %v1587, %v701
        %v1652 = vmul.f32 %v1588, %v706
        %v1653 = vmul.f32 %v1589, %v706
        %v1654 = vmul.f32 %v1590, %v711
        %v1655 = vmul.f32 %v1591, %v711
        %v1656 = vmul.f32 %v1592, %v716
        %v1657 = vmul.f32 %v1593, %v716
        %v1658 = vmul.f32 %v1594, %v721
        %v1659 = vmul.f32 %v1595, %v721
        %v1660 = vmul.f32 %v1596, %v726
        %v1661 = vmul.f32 %v1597, %v726
        %v1662 = vmul.f32 %v1598, %v731
        %v1663 = vmul.f32 %v1599, %v731
        %v1664 = vmul.f32 %v1600, %v736
        %v1665 = vmul.f32 %v1601, %v736
        %v1666 = vmul.f32 %v1602, %v741
        %v1667 = vmul.f32 %v1603, %v741
        %v1668 = vmul.f32 %v1604, %v746
        %v1669 = vmul.f32 %v1605, %v746
        %v1670 = vmul.f32 %v1606, %v751
        %v1671 = vmul.f32 %v1607, %v751
        %v1672 = vmul.f32 %v1608, %v756
        %v1673 = vmul.f32 %v1609, %v756
        %v1674 = vmul.f32 %v1610, %v761
        %v1675 = vmul.f32 %v1611, %v761
        %v1676 = vmul.f32 %v1612, %v766
        %v1677 = vmul.f32 %v1613, %v766
        %v1678 = vmul.f32 %v1614, %v771
        %v1679 = vmul.f32 %v1615, %v771
        %v1680 = vmul.f32 %v1616, %v776
        %v1681 = vmul.f32 %v1617, %v776
        %v1682 = vmul.f32 %v1618, %v781
        %v1683 = vmul.f32 %v1619, %v781
        %v1684 = vmul.f32 %v1620, %v786
        %v1685 = vmul.f32 %v1621, %v786
        %v1686 = vmul.f32 %v1622, %v791
        %v1687 = vmul.f32 %v1623, %v791
        %v1688 = vmul.f32 %v1624, %v796
        %v1689 = vmul.f32 %v1625, %v796
        %v1690 = vmul.f32 %v1626, %v801
        %v1691 = vmul.f32 %v1627, %v801
        %v1692 = vadd.f32 %v1628, %v1630
        %v1693 = vadd.f32 %v1692, %v1632
        %v1694 = vadd.f32 %v1693, %v1634
        %v1695 = vadd.f32 %v1694, %v1636
        %v1696 = vadd.f32 %v1695, %v1638
        %v1697 = vadd.f32 %v1696, %v1640
        %v1698 = vadd.f32 %v1697, %v1642
        %v1699 = vadd.f32 %v1698, %v1644
        %v1700 = vadd.f32 %v1699, %v1646
        %v1701 = vadd.f32 %v1700, %v1648
        %v1702 = vadd.f32 %v1701, %v1650
        %v1703 = vadd.f32 %v1702, %v1652
        %v1704 = vadd.f32 %v1703, %v1654
        %v1705 = vadd.f32 %v1704, %v1656
        %v1706 = vadd.f32 %v1705, %v1658
        %v1707 = vadd.f32 %v1706, %v1660
        %v1708 = vadd.f32 %v1707, %v1662
        %v1709 = vadd.f32 %v1708, %v1664
        %v1710 = vadd.f32 %v1709, %v1666
        %v1711 = vadd.f32 %v1710, %v1668
        %v1712 = vadd.f32 %v1711, %v1670
        %v1713 = vadd.f32 %v1712, %v1672
        %v1714 = vadd.f32 %v1713, %v1674
        %v1715 = vadd.f32 %v1714, %v1676
        %v1716 = vadd.f32 %v1715, %v1678
        %v1717 = vadd.f32 %v1716, %v1680
        %v1718 = vadd.f32 %v1717, %v1682
        %v1719 = vadd.f32 %v1718, %v1684
        %v1720 = vadd.f32 %v1719, %v1686
        %v1721 = vadd.f32 %v1720, %v1688
        %v1722 = vadd.f32 %v1721, %v1690
        %v1723 = vrot.slane %v1722, 4
        %v1724 = vadd.f32 %v1722, %v1723
        %v1725 = vrot.slane %v1724, 2
        %v1726 = vadd.f32 %v1724, %v1725
        %v1727 = vrot.slane %v1726, 1
        %v1728 = vadd.f32 %v1726, %v1727
        %v1729 = vadd.f32 %v1629, %v1631
        %v1730 = vadd.f32 %v1729, %v1633
        %v1731 = vadd.f32 %v1730, %v1635
        %v1732 = vadd.f32 %v1731, %v1637
        %v1733 = vadd.f32 %v1732, %v1639
        %v1734 = vadd.f32 %v1733, %v1641
        %v1735 = vadd.f32 %v1734, %v1643
        %v1736 = vadd.f32 %v1735, %v1645
        %v1737 = vadd.f32 %v1736, %v1647
        %v1738 = vadd.f32 %v1737, %v1649
        %v1739 = vadd.f32 %v1738, %v1651
        %v1740 = vadd.f32 %v1739, %v1653
        %v1741 = vadd.f32 %v1740, %v1655
        %v1742 = vadd.f32 %v1741, %v1657
        %v1743 = vadd.f32 %v1742, %v1659
        %v1744 = vadd.f32 %v1743, %v1661
        %v1745 = vadd.f32 %v1744, %v1663
        %v1746 = vadd.f32 %v1745, %v1665
        %v1747 = vadd.f32 %v1746, %v1667
        %v1748 = vadd.f32 %v1747, %v1669
        %v1749 = vadd.f32 %v1748, %v1671
        %v1750 = vadd.f32 %v1749, %v1673
        %v1751 = vadd.f32 %v1750, %v1675
        %v1752 = vadd.f32 %v1751, %v1677
        %v1753 = vadd.f32 %v1752, %v1679
        %v1754 = vadd.f32 %v1753, %v1681
        %v1755 = vadd.f32 %v1754, %v1683
        %v1756 = vadd.f32 %v1755, %v1685
        %v1757 = vadd.f32 %v1756, %v1687
        %v1758 = vadd.f32 %v1757, %v1689
        %v1759 = vadd.f32 %v1758, %v1691
        %v1760 = vrot.slane %v1759, 4
        %v1761 = vadd.f32 %v1759, %v1760
        %v1762 = vrot.slane %v1761, 2
        %v1763 = vadd.f32 %v1761, %v1762
        %v1764 = vrot.slane %v1763, 1
        %v1765 = vadd.f32 %v1763, %v1764
        %v1766 = vadd.f32 %v1728, %v1269
        %v1767 = vadd.f32 %v1765, %v1269
        %v1768 = vmul.f32 %v1766, 2.0
        %v1769 = vmul.f32 %v1767, 2.0
        %v1770 = vtanh.pop %v1768
        %v1771 = vtanh.pop %v1769
        %v1774 = vcombine.low %v1770, %v1771
        %v1776 = vunpack.c.l.s4 1966171168
        %v1777 = vunpack.c.0.s8 %v1776
        %v1778 = vlaneseq
        %v1779 = vshrl.u32 %v1778, 7
        %v1780 = vsub.s32 %v1777, %v1779
        %v1781 = vrot.slane %v1774, %v1780
        %v1783 = vunpack.c.l.s4 1966171168
        %v1784 = vunpack.c.0.s8 %v1783
        %v1785 = vlaneseq
        %v1786 = vshrl.u32 %v1785, 7
        %v1787 = vsub.s32 %v1784, %v1786
        %v1788 = vrot.slane %v1781, %v1787
        %s1790 = scalar_lea.vmem %s218, 1 [#allocation3]
        %1791 = vst.msk [vmem:[%s1790] ss:$8 sm:$0x3] %vm1297, %v1788
        %1792 = vst.msk [vmem:[%s1790] ss:$8 sm:$0x0] %vm1297, %v1788
        %v1793 = vlaneseq
        %v1794 = vshrl.u32 %v1793, 7
        %v1795 = vsub.s32 2, %v1794
        %v1796 = vrot.slane %v224, %v1795
        %v1797 = vlaneseq
        %v1798 = vshrl.u32 %v1797, 7
        %v1799 = vsub.s32 2, %v1798
        %v1800 = vrot.slane %v225, %v1799
        %v1801 = vmul.f32 %v1796, %v262
        %v1802 = vmul.f32 %v1800, %v262
        %v1803 = vmul.f32 %v1796, %v267
        %v1804 = vmul.f32 %v1800, %v267
        %v1805 = vmul.f32 %v1796, %v272
        %v1806 = vmul.f32 %v1800, %v272
        %v1807 = vmul.f32 %v1796, %v277
        %v1808 = vmul.f32 %v1800, %v277
        %v1809 = vmul.f32 %v1796, %v282
        %v1810 = vmul.f32 %v1800, %v282
        %v1811 = vmul.f32 %v1796, %v287
        %v1812 = vmul.f32 %v1800, %v287
        %v1813 = vmul.f32 %v1796, %v292
        %v1814 = vmul.f32 %v1800, %v292
        %v1815 = vmul.f32 %v1796, %v297
        %v1816 = vmul.f32 %v1800, %v297
        %v1817 = vmul.f32 %v1796, %v302
        %v1818 = vmul.f32 %v1800, %v302
        %v1819 = vmul.f32 %v1796, %v307
        %v1820 = vmul.f32 %v1800, %v307
        %v1821 = vmul.f32 %v1796, %v312
        %v1822 = vmul.f32 %v1800, %v312
        %v1823 = vmul.f32 %v1796, %v317
        %v1824 = vmul.f32 %v1800, %v317
        %v1825 = vmul.f32 %v1796, %v322
        %v1826 = vmul.f32 %v1800, %v322
        %v1827 = vmul.f32 %v1796, %v327
        %v1828 = vmul.f32 %v1800, %v327
        %v1829 = vmul.f32 %v1796, %v332
        %v1830 = vmul.f32 %v1800, %v332
        %v1831 = vmul.f32 %v1796, %v337
        %v1832 = vmul.f32 %v1800, %v337
        %v1833 = vmul.f32 %v1796, %v342
        %v1834 = vmul.f32 %v1800, %v342
        %v1835 = vmul.f32 %v1796, %v347
        %v1836 = vmul.f32 %v1800, %v347
        %v1837 = vmul.f32 %v1796, %v352
        %v1838 = vmul.f32 %v1800, %v352
        %v1839 = vmul.f32 %v1796, %v357
        %v1840 = vmul.f32 %v1800, %v357
        %v1841 = vmul.f32 %v1796, %v362
        %v1842 = vmul.f32 %v1800, %v362
        %v1843 = vmul.f32 %v1796, %v367
        %v1844 = vmul.f32 %v1800, %v367
        %v1845 = vmul.f32 %v1796, %v372
        %v1846 = vmul.f32 %v1800, %v372
        %v1847 = vmul.f32 %v1796, %v377
        %v1848 = vmul.f32 %v1800, %v377
        %v1849 = vmul.f32 %v1796, %v382
        %v1850 = vmul.f32 %v1800, %v382
        %v1851 = vmul.f32 %v1796, %v387
        %v1852 = vmul.f32 %v1800, %v387
        %v1853 = vmul.f32 %v1796, %v392
        %v1854 = vmul.f32 %v1800, %v392
        %v1855 = vmul.f32 %v1796, %v397
        %v1856 = vmul.f32 %v1800, %v397
        %v1857 = vmul.f32 %v1796, %v402
        %v1858 = vmul.f32 %v1800, %v402
        %v1859 = vmul.f32 %v1796, %v407
        %v1860 = vmul.f32 %v1800, %v407
        %v1861 = vmul.f32 %v1796, %v412
        %v1862 = vmul.f32 %v1800, %v412
        %v1863 = vmul.f32 %v1796, %v417
        %v1864 = vmul.f32 %v1800, %v417
        %v1865 = vadd.f32 %v1801, %v454
        %v1866 = vadd.f32 %v1802, %v454
        %v1867 = vadd.f32 %v1803, %v459
        %v1868 = vadd.f32 %v1804, %v459
        %v1869 = vadd.f32 %v1805, %v464
        %v1870 = vadd.f32 %v1806, %v464
        %v1871 = vadd.f32 %v1807, %v469
        %v1872 = vadd.f32 %v1808, %v469
        %v1873 = vadd.f32 %v1809, %v474
        %v1874 = vadd.f32 %v1810, %v474
        %v1875 = vadd.f32 %v1811, %v479
        %v1876 = vadd.f32 %v1812, %v479
        %v1877 = vadd.f32 %v1813, %v484
        %v1878 = vadd.f32 %v1814, %v484
        %v1879 = vadd.f32 %v1815, %v489
        %v1880 = vadd.f32 %v1816, %v489
        %v1881 = vadd.f32 %v1817, %v494
        %v1882 = vadd.f32 %v1818, %v494
        %v1883 = vadd.f32 %v1819, %v499
        %v1884 = vadd.f32 %v1820, %v499
        %v1885 = vadd.f32 %v1821, %v504
        %v1886 = vadd.f32 %v1822, %v504
        %v1887 = vadd.f32 %v1823, %v509
        %v1888 = vadd.f32 %v1824, %v509
        %v1889 = vadd.f32 %v1825, %v514
        %v1890 = vadd.f32 %v1826, %v514
        %v1891 = vadd.f32 %v1827, %v519
        %v1892 = vadd.f32 %v1828, %v519
        %v1893 = vadd.f32 %v1829, %v524
        %v1894 = vadd.f32 %v1830, %v524
        %v1895 = vadd.f32 %v1831, %v529
        %v1896 = vadd.f32 %v1832, %v529
        %v1897 = vadd.f32 %v1833, %v534
        %v1898 = vadd.f32 %v1834, %v534
        %v1899 = vadd.f32 %v1835, %v539
        %v1900 = vadd.f32 %v1836, %v539
        %v1901 = vadd.f32 %v1837, %v544
        %v1902 = vadd.f32 %v1838, %v544
        %v1903 = vadd.f32 %v1839, %v549
        %v1904 = vadd.f32 %v1840, %v549
        %v1905 = vadd.f32 %v1841, %v554
        %v1906 = vadd.f32 %v1842, %v554
        %v1907 = vadd.f32 %v1843, %v559
        %v1908 = vadd.f32 %v1844, %v559
        %v1909 = vadd.f32 %v1845, %v564
        %v1910 = vadd.f32 %v1846, %v564
        %v1911 = vadd.f32 %v1847, %v569
        %v1912 = vadd.f32 %v1848, %v569
        %v1913 = vadd.f32 %v1849, %v574
        %v1914 = vadd.f32 %v1850, %v574
        %v1915 = vadd.f32 %v1851, %v579
        %v1916 = vadd.f32 %v1852, %v579
        %v1917 = vadd.f32 %v1853, %v584
        %v1918 = vadd.f32 %v1854, %v584
        %v1919 = vadd.f32 %v1855, %v589
        %v1920 = vadd.f32 %v1856, %v589
        %v1921 = vadd.f32 %v1857, %v594
        %v1922 = vadd.f32 %v1858, %v594
        %v1923 = vadd.f32 %v1859, %v599
        %v1924 = vadd.f32 %v1860, %v599
        %v1925 = vadd.f32 %v1861, %v604
        %v1926 = vadd.f32 %v1862, %v604
        %v1927 = vadd.f32 %v1863, %v609
        %v1928 = vadd.f32 %v1864, %v609
        %vm1929 = vcmp.gt.f32.partialorder %v1865, 0.0
        %vm1930 = vcmp.gt.f32.partialorder %v1866, 0.0
        %vm1931 = vcmp.gt.f32.partialorder %v1867, 0.0
        %vm1932 = vcmp.gt.f32.partialorder %v1868, 0.0
        %vm1933 = vcmp.gt.f32.partialorder %v1869, 0.0
        %vm1934 = vcmp.gt.f32.partialorder %v1870, 0.0
        %vm1935 = vcmp.gt.f32.partialorder %v1871, 0.0
        %vm1936 = vcmp.gt.f32.partialorder %v1872, 0.0
        %vm1937 = vcmp.gt.f32.partialorder %v1873, 0.0
        %vm1938 = vcmp.gt.f32.partialorder %v1874, 0.0
        %vm1939 = vcmp.gt.f32.partialorder %v1875, 0.0
        %vm1940 = vcmp.gt.f32.partialorder %v1876, 0.0
        %vm1941 = vcmp.gt.f32.partialorder %v1877, 0.0
        %vm1942 = vcmp.gt.f32.partialorder %v1878, 0.0
        %vm1943 = vcmp.gt.f32.partialorder %v1879, 0.0
        %vm1944 = vcmp.gt.f32.partialorder %v1880, 0.0
        %vm1945 = vcmp.gt.f32.partialorder %v1881, 0.0
        %vm1946 = vcmp.gt.f32.partialorder %v1882, 0.0
        %vm1947 = vcmp.gt.f32.partialorder %v1883, 0.0
        %vm1948 = vcmp.gt.f32.partialorder %v1884, 0.0
        %vm1949 = vcmp.gt.f32.partialorder %v1885, 0.0
        %vm1950 = vcmp.gt.f32.partialorder %v1886, 0.0
        %vm1951 = vcmp.gt.f32.partialorder %v1887, 0.0
        %vm1952 = vcmp.gt.f32.partialorder %v1888, 0.0
        %vm1953 = vcmp.gt.f32.partialorder %v1889, 0.0
        %vm1954 = vcmp.gt.f32.partialorder %v1890, 0.0
        %vm1955 = vcmp.gt.f32.partialorder %v1891, 0.0
        %vm1956 = vcmp.gt.f32.partialorder %v1892, 0.0
        %vm1957 = vcmp.gt.f32.partialorder %v1893, 0.0
        %vm1958 = vcmp.gt.f32.partialorder %v1894, 0.0
        %vm1959 = vcmp.gt.f32.partialorder %v1895, 0.0
        %vm1960 = vcmp.gt.f32.partialorder %v1896, 0.0
        %vm1961 = vcmp.gt.f32.partialorder %v1897, 0.0
        %vm1962 = vcmp.gt.f32.partialorder %v1898, 0.0
        %vm1963 = vcmp.gt.f32.partialorder %v1899, 0.0
        %vm1964 = vcmp.gt.f32.partialorder %v1900, 0.0
        %vm1965 = vcmp.gt.f32.partialorder %v1901, 0.0
        %vm1966 = vcmp.gt.f32.partialorder %v1902, 0.0
        %vm1967 = vcmp.gt.f32.partialorder %v1903, 0.0
        %vm1968 = vcmp.gt.f32.partialorder %v1904, 0.0
        %vm1969 = vcmp.gt.f32.partialorder %v1905, 0.0
        %vm1970 = vcmp.gt.f32.partialorder %v1906, 0.0
        %vm1971 = vcmp.gt.f32.partialorder %v1907, 0.0
        %vm1972 = vcmp.gt.f32.partialorder %v1908, 0.0
        %vm1973 = vcmp.gt.f32.partialorder %v1909, 0.0
        %vm1974 = vcmp.gt.f32.partialorder %v1910, 0.0
        %vm1975 = vcmp.gt.f32.partialorder %v1911, 0.0
        %vm1976 = vcmp.gt.f32.partialorder %v1912, 0.0
        %vm1977 = vcmp.gt.f32.partialorder %v1913, 0.0
        %vm1978 = vcmp.gt.f32.partialorder %v1914, 0.0
        %vm1979 = vcmp.gt.f32.partialorder %v1915, 0.0
        %vm1980 = vcmp.gt.f32.partialorder %v1916, 0.0
        %vm1981 = vcmp.gt.f32.partialorder %v1917, 0.0
        %vm1982 = vcmp.gt.f32.partialorder %v1918, 0.0
        %vm1983 = vcmp.gt.f32.partialorder %v1919, 0.0
        %vm1984 = vcmp.gt.f32.partialorder %v1920, 0.0
        %vm1985 = vcmp.gt.f32.partialorder %v1921, 0.0
        %vm1986 = vcmp.gt.f32.partialorder %v1922, 0.0
        %vm1987 = vcmp.gt.f32.partialorder %v1923, 0.0
        %vm1988 = vcmp.gt.f32.partialorder %v1924, 0.0
        %vm1989 = vcmp.gt.f32.partialorder %v1925, 0.0
        %vm1990 = vcmp.gt.f32.partialorder %v1926, 0.0
        %vm1991 = vcmp.gt.f32.partialorder %v1927, 0.0
        %vm1992 = vcmp.gt.f32.partialorder %v1928, 0.0
        %v1993 = vmul.f32 %v1865, 0.01
        %v1994 = vmul.f32 %v1866, 0.01
        %v1995 = vmul.f32 %v1867, 0.01
        %v1996 = vmul.f32 %v1868, 0.01
        %v1997 = vmul.f32 %v1869, 0.01
        %v1998 = vmul.f32 %v1870, 0.01
        %v1999 = vmul.f32 %v1871, 0.01
        %v2000 = vmul.f32 %v1872, 0.01
        %v2001 = vmul.f32 %v1873, 0.01
        %v2002 = vmul.f32 %v1874, 0.01
        %v2003 = vmul.f32 %v1875, 0.01
        %v2004 = vmul.f32 %v1876, 0.01
        %v2005 = vmul.f32 %v1877, 0.01
        %v2006 = vmul.f32 %v1878, 0.01
        %v2007 = vmul.f32 %v1879, 0.01
        %v2008 = vmul.f32 %v1880, 0.01
        %v2009 = vmul.f32 %v1881, 0.01
        %v2010 = vmul.f32 %v1882, 0.01
        %v2011 = vmul.f32 %v1883, 0.01
        %v2012 = vmul.f32 %v1884, 0.01
        %v2013 = vmul.f32 %v1885, 0.01
        %v2014 = vmul.f32 %v1886, 0.01
        %v2015 = vmul.f32 %v1887, 0.01
        %v2016 = vmul.f32 %v1888, 0.01
        %v2017 = vmul.f32 %v1889, 0.01
        %v2018 = vmul.f32 %v1890, 0.01
        %v2019 = vmul.f32 %v1891, 0.01
        %v2020 = vmul.f32 %v1892, 0.01
        %v2021 = vmul.f32 %v1893, 0.01
        %v2022 = vmul.f32 %v1894, 0.01
        %v2023 = vmul.f32 %v1895, 0.01
        %v2024 = vmul.f32 %v1896, 0.01
        %v2025 = vmul.f32 %v1897, 0.01
        %v2026 = vmul.f32 %v1898, 0.01
        %v2027 = vmul.f32 %v1899, 0.01
        %v2028 = vmul.f32 %v1900, 0.01
        %v2029 = vmul.f32 %v1901, 0.01
        %v2030 = vmul.f32 %v1902, 0.01
        %v2031 = vmul.f32 %v1903, 0.01
        %v2032 = vmul.f32 %v1904, 0.01
        %v2033 = vmul.f32 %v1905, 0.01
        %v2034 = vmul.f32 %v1906, 0.01
        %v2035 = vmul.f32 %v1907, 0.01
        %v2036 = vmul.f32 %v1908, 0.01
        %v2037 = vmul.f32 %v1909, 0.01
        %v2038 = vmul.f32 %v1910, 0.01
        %v2039 = vmul.f32 %v1911, 0.01
        %v2040 = vmul.f32 %v1912, 0.01
        %v2041 = vmul.f32 %v1913, 0.01
        %v2042 = vmul.f32 %v1914, 0.01
        %v2043 = vmul.f32 %v1915, 0.01
        %v2044 = vmul.f32 %v1916, 0.01
        %v2045 = vmul.f32 %v1917, 0.01
        %v2046 = vmul.f32 %v1918, 0.01
        %v2047 = vmul.f32 %v1919, 0.01
        %v2048 = vmul.f32 %v1920, 0.01
        %v2049 = vmul.f32 %v1921, 0.01
        %v2050 = vmul.f32 %v1922, 0.01
        %v2051 = vmul.f32 %v1923, 0.01
        %v2052 = vmul.f32 %v1924, 0.01
        %v2053 = vmul.f32 %v1925, 0.01
        %v2054 = vmul.f32 %v1926, 0.01
        %v2055 = vmul.f32 %v1927, 0.01
        %v2056 = vmul.f32 %v1928, 0.01
        %v2057 = vsel %vm1929, %v1865, %v1993
        %v2058 = vsel %vm1930, %v1866, %v1994
        %v2059 = vsel %vm1931, %v1867, %v1995
        %v2060 = vsel %vm1932, %v1868, %v1996
        %v2061 = vsel %vm1933, %v1869, %v1997
        %v2062 = vsel %vm1934, %v1870, %v1998
        %v2063 = vsel %vm1935, %v1871, %v1999
        %v2064 = vsel %vm1936, %v1872, %v2000
        %v2065 = vsel %vm1937, %v1873, %v2001
        %v2066 = vsel %vm1938, %v1874, %v2002
        %v2067 = vsel %vm1939, %v1875, %v2003
        %v2068 = vsel %vm1940, %v1876, %v2004
        %v2069 = vsel %vm1941, %v1877, %v2005
        %v2070 = vsel %vm1942, %v1878, %v2006
        %v2071 = vsel %vm1943, %v1879, %v2007
        %v2072 = vsel %vm1944, %v1880, %v2008
        %v2073 = vsel %vm1945, %v1881, %v2009
        %v2074 = vsel %vm1946, %v1882, %v2010
        %v2075 = vsel %vm1947, %v1883, %v2011
        %v2076 = vsel %vm1948, %v1884, %v2012
        %v2077 = vsel %vm1949, %v1885, %v2013
        %v2078 = vsel %vm1950, %v1886, %v2014
        %v2079 = vsel %vm1951, %v1887, %v2015
        %v2080 = vsel %vm1952, %v1888, %v2016
        %v2081 = vsel %vm1953, %v1889, %v2017
        %v2082 = vsel %vm1954, %v1890, %v2018
        %v2083 = vsel %vm1955, %v1891, %v2019
        %v2084 = vsel %vm1956, %v1892, %v2020
        %v2085 = vsel %vm1957, %v1893, %v2021
        %v2086 = vsel %vm1958, %v1894, %v2022
        %v2087 = vsel %vm1959, %v1895, %v2023
        %v2088 = vsel %vm1960, %v1896, %v2024
        %v2089 = vsel %vm1961, %v1897, %v2025
        %v2090 = vsel %vm1962, %v1898, %v2026
        %v2091 = vsel %vm1963, %v1899, %v2027
        %v2092 = vsel %vm1964, %v1900, %v2028
        %v2093 = vsel %vm1965, %v1901, %v2029
        %v2094 = vsel %vm1966, %v1902, %v2030
        %v2095 = vsel %vm1967, %v1903, %v2031
        %v2096 = vsel %vm1968, %v1904, %v2032
        %v2097 = vsel %vm1969, %v1905, %v2033
        %v2098 = vsel %vm1970, %v1906, %v2034
        %v2099 = vsel %vm1971, %v1907, %v2035
        %v2100 = vsel %vm1972, %v1908, %v2036
        %v2101 = vsel %vm1973, %v1909, %v2037
        %v2102 = vsel %vm1974, %v1910, %v2038
        %v2103 = vsel %vm1975, %v1911, %v2039
        %v2104 = vsel %vm1976, %v1912, %v2040
        %v2105 = vsel %vm1977, %v1913, %v2041
        %v2106 = vsel %vm1978, %v1914, %v2042
        %v2107 = vsel %vm1979, %v1915, %v2043
        %v2108 = vsel %vm1980, %v1916, %v2044
        %v2109 = vsel %vm1981, %v1917, %v2045
        %v2110 = vsel %vm1982, %v1918, %v2046
        %v2111 = vsel %vm1983, %v1919, %v2047
        %v2112 = vsel %vm1984, %v1920, %v2048
        %v2113 = vsel %vm1985, %v1921, %v2049
        %v2114 = vsel %vm1986, %v1922, %v2050
        %v2115 = vsel %vm1987, %v1923, %v2051
        %v2116 = vsel %vm1988, %v1924, %v2052
        %v2117 = vsel %vm1989, %v1925, %v2053
        %v2118 = vsel %vm1990, %v1926, %v2054
        %v2119 = vsel %vm1991, %v1927, %v2055
        %v2120 = vsel %vm1992, %v1928, %v2056
        %v2121 = vmul.f32 %v2057, %v646
        %v2122 = vmul.f32 %v2058, %v646
        %v2123 = vmul.f32 %v2059, %v651
        %v2124 = vmul.f32 %v2060, %v651
        %v2125 = vmul.f32 %v2061, %v656
        %v2126 = vmul.f32 %v2062, %v656
        %v2127 = vmul.f32 %v2063, %v661
        %v2128 = vmul.f32 %v2064, %v661
        %v2129 = vmul.f32 %v2065, %v666
        %v2130 = vmul.f32 %v2066, %v666
        %v2131 = vmul.f32 %v2067, %v671
        %v2132 = vmul.f32 %v2068, %v671
        %v2133 = vmul.f32 %v2069, %v676
        %v2134 = vmul.f32 %v2070, %v676
        %v2135 = vmul.f32 %v2071, %v681
        %v2136 = vmul.f32 %v2072, %v681
        %v2137 = vmul.f32 %v2073, %v686
        %v2138 = vmul.f32 %v2074, %v686
        %v2139 = vmul.f32 %v2075, %v691
        %v2140 = vmul.f32 %v2076, %v691
        %v2141 = vmul.f32 %v2077, %v696
        %v2142 = vmul.f32 %v2078, %v696
        %v2143 = vmul.f32 %v2079, %v701
        %v2144 = vmul.f32 %v2080, %v701
        %v2145 = vmul.f32 %v2081, %v706
        %v2146 = vmul.f32 %v2082, %v706
        %v2147 = vmul.f32 %v2083, %v711
        %v2148 = vmul.f32 %v2084, %v711
        %v2149 = vmul.f32 %v2085, %v716
        %v2150 = vmul.f32 %v2086, %v716
        %v2151 = vmul.f32 %v2087, %v721
        %v2152 = vmul.f32 %v2088, %v721
        %v2153 = vmul.f32 %v2089, %v726
        %v2154 = vmul.f32 %v2090, %v726
        %v2155 = vmul.f32 %v2091, %v731
        %v2156 = vmul.f32 %v2092, %v731
        %v2157 = vmul.f32 %v2093, %v736
        %v2158 = vmul.f32 %v2094, %v736
        %v2159 = vmul.f32 %v2095, %v741
        %v2160 = vmul.f32 %v2096, %v741
        %v2161 = vmul.f32 %v2097, %v746
        %v2162 = vmul.f32 %v2098, %v746
        %v2163 = vmul.f32 %v2099, %v751
        %v2164 = vmul.f32 %v2100, %v751
        %v2165 = vmul.f32 %v2101, %v756
        %v2166 = vmul.f32 %v2102, %v756
        %v2167 = vmul.f32 %v2103, %v761
        %v2168 = vmul.f32 %v2104, %v761
        %v2169 = vmul.f32 %v2105, %v766
        %v2170 = vmul.f32 %v2106, %v766
        %v2171 = vmul.f32 %v2107, %v771
        %v2172 = vmul.f32 %v2108, %v771
        %v2173 = vmul.f32 %v2109, %v776
        %v2174 = vmul.f32 %v2110, %v776
        %v2175 = vmul.f32 %v2111, %v781
        %v2176 = vmul.f32 %v2112, %v781
        %v2177 = vmul.f32 %v2113, %v786
        %v2178 = vmul.f32 %v2114, %v786
        %v2179 = vmul.f32 %v2115, %v791
        %v2180 = vmul.f32 %v2116, %v791
        %v2181 = vmul.f32 %v2117, %v796
        %v2182 = vmul.f32 %v2118, %v796
        %v2183 = vmul.f32 %v2119, %v801
        %v2184 = vmul.f32 %v2120, %v801
        %v2185 = vadd.f32 %v2121, %v2123
        %v2186 = vadd.f32 %v2185, %v2125
        %v2187 = vadd.f32 %v2186, %v2127
        %v2188 = vadd.f32 %v2187, %v2129
        %v2189 = vadd.f32 %v2188, %v2131
        %v2190 = vadd.f32 %v2189, %v2133
        %v2191 = vadd.f32 %v2190, %v2135
        %v2192 = vadd.f32 %v2191, %v2137
        %v2193 = vadd.f32 %v2192, %v2139
        %v2194 = vadd.f32 %v2193, %v2141
        %v2195 = vadd.f32 %v2194, %v2143
        %v2196 = vadd.f32 %v2195, %v2145
        %v2197 = vadd.f32 %v2196, %v2147
        %v2198 = vadd.f32 %v2197, %v2149
        %v2199 = vadd.f32 %v2198, %v2151
        %v2200 = vadd.f32 %v2199, %v2153
        %v2201 = vadd.f32 %v2200, %v2155
        %v2202 = vadd.f32 %v2201, %v2157
        %v2203 = vadd.f32 %v2202, %v2159
        %v2204 = vadd.f32 %v2203, %v2161
        %v2205 = vadd.f32 %v2204, %v2163
        %v2206 = vadd.f32 %v2205, %v2165
        %v2207 = vadd.f32 %v2206, %v2167
        %v2208 = vadd.f32 %v2207, %v2169
        %v2209 = vadd.f32 %v2208, %v2171
        %v2210 = vadd.f32 %v2209, %v2173
        %v2211 = vadd.f32 %v2210, %v2175
        %v2212 = vadd.f32 %v2211, %v2177
        %v2213 = vadd.f32 %v2212, %v2179
        %v2214 = vadd.f32 %v2213, %v2181
        %v2215 = vadd.f32 %v2214, %v2183
        %v2216 = vrot.slane %v2215, 4
        %v2217 = vadd.f32 %v2215, %v2216
        %v2218 = vrot.slane %v2217, 2
        %v2219 = vadd.f32 %v2217, %v2218
        %v2220 = vrot.slane %v2219, 1
        %v2221 = vadd.f32 %v2219, %v2220
        %v2222 = vadd.f32 %v2122, %v2124
        %v2223 = vadd.f32 %v2222, %v2126
        %v2224 = vadd.f32 %v2223, %v2128
        %v2225 = vadd.f32 %v2224, %v2130
        %v2226 = vadd.f32 %v2225, %v2132
        %v2227 = vadd.f32 %v2226, %v2134
        %v2228 = vadd.f32 %v2227, %v2136
        %v2229 = vadd.f32 %v2228, %v2138
        %v2230 = vadd.f32 %v2229, %v2140
        %v2231 = vadd.f32 %v2230, %v2142
        %v2232 = vadd.f32 %v2231, %v2144
        %v2233 = vadd.f32 %v2232, %v2146
        %v2234 = vadd.f32 %v2233, %v2148
        %v2235 = vadd.f32 %v2234, %v2150
        %v2236 = vadd.f32 %v2235, %v2152
        %v2237 = vadd.f32 %v2236, %v2154
        %v2238 = vadd.f32 %v2237, %v2156
        %v2239 = vadd.f32 %v2238, %v2158
        %v2240 = vadd.f32 %v2239, %v2160
        %v2241 = vadd.f32 %v2240, %v2162
        %v2242 = vadd.f32 %v2241, %v2164
        %v2243 = vadd.f32 %v2242, %v2166
        %v2244 = vadd.f32 %v2243, %v2168
        %v2245 = vadd.f32 %v2244, %v2170
        %v2246 = vadd.f32 %v2245, %v2172
        %v2247 = vadd.f32 %v2246, %v2174
        %v2248 = vadd.f32 %v2247, %v2176
        %v2249 = vadd.f32 %v2248, %v2178
        %v2250 = vadd.f32 %v2249, %v2180
        %v2251 = vadd.f32 %v2250, %v2182
        %v2252 = vadd.f32 %v2251, %v2184
        %v2253 = vrot.slane %v2252, 4
        %v2254 = vadd.f32 %v2252, %v2253
        %v2255 = vrot.slane %v2254, 2
        %v2256 = vadd.f32 %v2254, %v2255
        %v2257 = vrot.slane %v2256, 1
        %v2258 = vadd.f32 %v2256, %v2257
        %v2259 = vadd.f32 %v2221, %v1269
        %v2260 = vadd.f32 %v2258, %v1269
        %v2261 = vmul.f32 %v2259, 2.0
        %v2262 = vmul.f32 %v2260, 2.0
        %v2263 = vtanh.pop %v2261
        %v2264 = vtanh.pop %v2262
        %v2267 = vcombine.low %v2263, %v2264
        %v2269 = vunpack.c.l.s4 1966171168
        %v2270 = vunpack.c.0.s8 %v2269
        %v2271 = vlaneseq
        %v2272 = vshrl.u32 %v2271, 7
        %v2273 = vsub.s32 %v2270, %v2272
        %v2274 = vrot.slane %v2267, %v2273
        %v2276 = vunpack.c.l.s4 1966171168
        %v2277 = vunpack.c.0.s8 %v2276
        %v2278 = vlaneseq
        %v2279 = vshrl.u32 %v2278, 7
        %v2280 = vsub.s32 %v2277, %v2279
        %v2281 = vrot.slane %v2274, %v2280
        %s2283 = scalar_lea.vmem %s218, 2 [#allocation3]
        %2284 = vst.msk [vmem:[%s2283] ss:$8 sm:$0x3] %vm1297, %v2281
        %2285 = vst.msk [vmem:[%s2283] ss:$8 sm:$0x0] %vm1297, %v2281
        %v2286 = vlaneseq
        %v2287 = vshrl.u32 %v2286, 7
        %v2288 = vsub.s32 3, %v2287
        %v2289 = vrot.slane %v224, %v2288
        %v2290 = vlaneseq
        %v2291 = vshrl.u32 %v2290, 7
        %v2292 = vsub.s32 3, %v2291
        %v2293 = vrot.slane %v225, %v2292
        %v2294 = vmul.f32 %v2289, %v262
        %v2295 = vmul.f32 %v2293, %v262
        %v2296 = vmul.f32 %v2289, %v267
        %v2297 = vmul.f32 %v2293, %v267
        %v2298 = vmul.f32 %v2289, %v272
        %v2299 = vmul.f32 %v2293, %v272
        %v2300 = vmul.f32 %v2289, %v277
        %v2301 = vmul.f32 %v2293, %v277
        %v2302 = vmul.f32 %v2289, %v282
        %v2303 = vmul.f32 %v2293, %v282
        %v2304 = vmul.f32 %v2289, %v287
        %v2305 = vmul.f32 %v2293, %v287
        %v2306 = vmul.f32 %v2289, %v292
        %v2307 = vmul.f32 %v2293, %v292
        %v2308 = vmul.f32 %v2289, %v297
        %v2309 = vmul.f32 %v2293, %v297
        %v2310 = vmul.f32 %v2289, %v302
        %v2311 = vmul.f32 %v2293, %v302
        %v2312 = vmul.f32 %v2289, %v307
        %v2313 = vmul.f32 %v2293, %v307
        %v2314 = vmul.f32 %v2289, %v312
        %v2315 = vmul.f32 %v2293, %v312
        %v2316 = vmul.f32 %v2289, %v317
        %v2317 = vmul.f32 %v2293, %v317
        %v2318 = vmul.f32 %v2289, %v322
        %v2319 = vmul.f32 %v2293, %v322
        %v2320 = vmul.f32 %v2289, %v327
        %v2321 = vmul.f32 %v2293, %v327
        %v2322 = vmul.f32 %v2289, %v332
        %v2323 = vmul.f32 %v2293, %v332
        %v2324 = vmul.f32 %v2289, %v337
        %v2325 = vmul.f32 %v2293, %v337
        %v2326 = vmul.f32 %v2289, %v342
        %v2327 = vmul.f32 %v2293, %v342
        %v2328 = vmul.f32 %v2289, %v347
        %v2329 = vmul.f32 %v2293, %v347
        %v2330 = vmul.f32 %v2289, %v352
        %v2331 = vmul.f32 %v2293, %v352
        %v2332 = vmul.f32 %v2289, %v357
        %v2333 = vmul.f32 %v2293, %v357
        %v2334 = vmul.f32 %v2289, %v362
        %v2335 = vmul.f32 %v2293, %v362
        %v2336 = vmul.f32 %v2289, %v367
        %v2337 = vmul.f32 %v2293, %v367
        %v2338 = vmul.f32 %v2289, %v372
        %v2339 = vmul.f32 %v2293, %v372
        %v2340 = vmul.f32 %v2289, %v377
        %v2341 = vmul.f32 %v2293, %v377
        %v2342 = vmul.f32 %v2289, %v382
        %v2343 = vmul.f32 %v2293, %v382
        %v2344 = vmul.f32 %v2289, %v387
        %v2345 = vmul.f32 %v2293, %v387
        %v2346 = vmul.f32 %v2289, %v392
        %v2347 = vmul.f32 %v2293, %v392
        %v2348 = vmul.f32 %v2289, %v397
        %v2349 = vmul.f32 %v2293, %v397
        %v2350 = vmul.f32 %v2289, %v402
        %v2351 = vmul.f32 %v2293, %v402
        %v2352 = vmul.f32 %v2289, %v407
        %v2353 = vmul.f32 %v2293, %v407
        %v2354 = vmul.f32 %v2289, %v412
        %v2355 = vmul.f32 %v2293, %v412
        %v2356 = vmul.f32 %v2289, %v417
        %v2357 = vmul.f32 %v2293, %v417
        %v2358 = vadd.f32 %v2294, %v454
        %v2359 = vadd.f32 %v2295, %v454
        %v2360 = vadd.f32 %v2296, %v459
        %v2361 = vadd.f32 %v2297, %v459
        %v2362 = vadd.f32 %v2298, %v464
        %v2363 = vadd.f32 %v2299, %v464
        %v2364 = vadd.f32 %v2300, %v469
        %v2365 = vadd.f32 %v2301, %v469
        %v2366 = vadd.f32 %v2302, %v474
        %v2367 = vadd.f32 %v2303, %v474
        %v2368 = vadd.f32 %v2304, %v479
        %v2369 = vadd.f32 %v2305, %v479
        %v2370 = vadd.f32 %v2306, %v484
        %v2371 = vadd.f32 %v2307, %v484
        %v2372 = vadd.f32 %v2308, %v489
        %v2373 = vadd.f32 %v2309, %v489
        %v2374 = vadd.f32 %v2310, %v494
        %v2375 = vadd.f32 %v2311, %v494
        %v2376 = vadd.f32 %v2312, %v499
        %v2377 = vadd.f32 %v2313, %v499
        %v2378 = vadd.f32 %v2314, %v504
        %v2379 = vadd.f32 %v2315, %v504
        %v2380 = vadd.f32 %v2316, %v509
        %v2381 = vadd.f32 %v2317, %v509
        %v2382 = vadd.f32 %v2318, %v514
        %v2383 = vadd.f32 %v2319, %v514
        %v2384 = vadd.f32 %v2320, %v519
        %v2385 = vadd.f32 %v2321, %v519
        %v2386 = vadd.f32 %v2322, %v524
        %v2387 = vadd.f32 %v2323, %v524
        %v2388 = vadd.f32 %v2324, %v529
        %v2389 = vadd.f32 %v2325, %v529
        %v2390 = vadd.f32 %v2326, %v534
        %v2391 = vadd.f32 %v2327, %v534
        %v2392 = vadd.f32 %v2328, %v539
        %v2393 = vadd.f32 %v2329, %v539
        %v2394 = vadd.f32 %v2330, %v544
        %v2395 = vadd.f32 %v2331, %v544
        %v2396 = vadd.f32 %v2332, %v549
        %v2397 = vadd.f32 %v2333, %v549
        %v2398 = vadd.f32 %v2334, %v554
        %v2399 = vadd.f32 %v2335, %v554
        %v2400 = vadd.f32 %v2336, %v559
        %v2401 = vadd.f32 %v2337, %v559
        %v2402 = vadd.f32 %v2338, %v564
        %v2403 = vadd.f32 %v2339, %v564
        %v2404 = vadd.f32 %v2340, %v569
        %v2405 = vadd.f32 %v2341, %v569
        %v2406 = vadd.f32 %v2342, %v574
        %v2407 = vadd.f32 %v2343, %v574
        %v2408 = vadd.f32 %v2344, %v579
        %v2409 = vadd.f32 %v2345, %v579
        %v2410 = vadd.f32 %v2346, %v584
        %v2411 = vadd.f32 %v2347, %v584
        %v2412 = vadd.f32 %v2348, %v589
        %v2413 = vadd.f32 %v2349, %v589
        %v2414 = vadd.f32 %v2350, %v594
        %v2415 = vadd.f32 %v2351, %v594
        %v2416 = vadd.f32 %v2352, %v599
        %v2417 = vadd.f32 %v2353, %v599
        %v2418 = vadd.f32 %v2354, %v604
        %v2419 = vadd.f32 %v2355, %v604
        %v2420 = vadd.f32 %v2356, %v609
        %v2421 = vadd.f32 %v2357, %v609
        %vm2422 = vcmp.gt.f32.partialorder %v2358, 0.0
        %vm2423 = vcmp.gt.f32.partialorder %v2359, 0.0
        %vm2424 = vcmp.gt.f32.partialorder %v2360, 0.0
        %vm2425 = vcmp.gt.f32.partialorder %v2361, 0.0
        %vm2426 = vcmp.gt.f32.partialorder %v2362, 0.0
        %vm2427 = vcmp.gt.f32.partialorder %v2363, 0.0
        %vm2428 = vcmp.gt.f32.partialorder %v2364, 0.0
        %vm2429 = vcmp.gt.f32.partialorder %v2365, 0.0
        %vm2430 = vcmp.gt.f32.partialorder %v2366, 0.0
        %vm2431 = vcmp.gt.f32.partialorder %v2367, 0.0
        %vm2432 = vcmp.gt.f32.partialorder %v2368, 0.0
        %vm2433 = vcmp.gt.f32.partialorder %v2369, 0.0
        %vm2434 = vcmp.gt.f32.partialorder %v2370, 0.0
        %vm2435 = vcmp.gt.f32.partialorder %v2371, 0.0
        %vm2436 = vcmp.gt.f32.partialorder %v2372, 0.0
        %vm2437 = vcmp.gt.f32.partialorder %v2373, 0.0
        %vm2438 = vcmp.gt.f32.partialorder %v2374, 0.0
        %vm2439 = vcmp.gt.f32.partialorder %v2375, 0.0
        %vm2440 = vcmp.gt.f32.partialorder %v2376, 0.0
        %vm2441 = vcmp.gt.f32.partialorder %v2377, 0.0
        %vm2442 = vcmp.gt.f32.partialorder %v2378, 0.0
        %vm2443 = vcmp.gt.f32.partialorder %v2379, 0.0
        %vm2444 = vcmp.gt.f32.partialorder %v2380, 0.0
        %vm2445 = vcmp.gt.f32.partialorder %v2381, 0.0
        %vm2446 = vcmp.gt.f32.partialorder %v2382, 0.0
        %vm2447 = vcmp.gt.f32.partialorder %v2383, 0.0
        %vm2448 = vcmp.gt.f32.partialorder %v2384, 0.0
        %vm2449 = vcmp.gt.f32.partialorder %v2385, 0.0
        %vm2450 = vcmp.gt.f32.partialorder %v2386, 0.0
        %vm2451 = vcmp.gt.f32.partialorder %v2387, 0.0
        %vm2452 = vcmp.gt.f32.partialorder %v2388, 0.0
        %vm2453 = vcmp.gt.f32.partialorder %v2389, 0.0
        %vm2454 = vcmp.gt.f32.partialorder %v2390, 0.0
        %vm2455 = vcmp.gt.f32.partialorder %v2391, 0.0
        %vm2456 = vcmp.gt.f32.partialorder %v2392, 0.0
        %vm2457 = vcmp.gt.f32.partialorder %v2393, 0.0
        %vm2458 = vcmp.gt.f32.partialorder %v2394, 0.0
        %vm2459 = vcmp.gt.f32.partialorder %v2395, 0.0
        %vm2460 = vcmp.gt.f32.partialorder %v2396, 0.0
        %vm2461 = vcmp.gt.f32.partialorder %v2397, 0.0
        %vm2462 = vcmp.gt.f32.partialorder %v2398, 0.0
        %vm2463 = vcmp.gt.f32.partialorder %v2399, 0.0
        %vm2464 = vcmp.gt.f32.partialorder %v2400, 0.0
        %vm2465 = vcmp.gt.f32.partialorder %v2401, 0.0
        %vm2466 = vcmp.gt.f32.partialorder %v2402, 0.0
        %vm2467 = vcmp.gt.f32.partialorder %v2403, 0.0
        %vm2468 = vcmp.gt.f32.partialorder %v2404, 0.0
        %vm2469 = vcmp.gt.f32.partialorder %v2405, 0.0
        %vm2470 = vcmp.gt.f32.partialorder %v2406, 0.0
        %vm2471 = vcmp.gt.f32.partialorder %v2407, 0.0
        %vm2472 = vcmp.gt.f32.partialorder %v2408, 0.0
        %vm2473 = vcmp.gt.f32.partialorder %v2409, 0.0
        %vm2474 = vcmp.gt.f32.partialorder %v2410, 0.0
        %vm2475 = vcmp.gt.f32.partialorder %v2411, 0.0
        %vm2476 = vcmp.gt.f32.partialorder %v2412, 0.0
        %vm2477 = vcmp.gt.f32.partialorder %v2413, 0.0
        %vm2478 = vcmp.gt.f32.partialorder %v2414, 0.0
        %vm2479 = vcmp.gt.f32.partialorder %v2415, 0.0
        %vm2480 = vcmp.gt.f32.partialorder %v2416, 0.0
        %vm2481 = vcmp.gt.f32.partialorder %v2417, 0.0
        %vm2482 = vcmp.gt.f32.partialorder %v2418, 0.0
        %vm2483 = vcmp.gt.f32.partialorder %v2419, 0.0
        %vm2484 = vcmp.gt.f32.partialorder %v2420, 0.0
        %vm2485 = vcmp.gt.f32.partialorder %v2421, 0.0
        %v2486 = vmul.f32 %v2358, 0.01
        %v2487 = vmul.f32 %v2359, 0.01
        %v2488 = vmul.f32 %v2360, 0.01
        %v2489 = vmul.f32 %v2361, 0.01
        %v2490 = vmul.f32 %v2362, 0.01
        %v2491 = vmul.f32 %v2363, 0.01
        %v2492 = vmul.f32 %v2364, 0.01
        %v2493 = vmul.f32 %v2365, 0.01
        %v2494 = vmul.f32 %v2366, 0.01
        %v2495 = vmul.f32 %v2367, 0.01
        %v2496 = vmul.f32 %v2368, 0.01
        %v2497 = vmul.f32 %v2369, 0.01
        %v2498 = vmul.f32 %v2370, 0.01
        %v2499 = vmul.f32 %v2371, 0.01
        %v2500 = vmul.f32 %v2372, 0.01
        %v2501 = vmul.f32 %v2373, 0.01
        %v2502 = vmul.f32 %v2374, 0.01
        %v2503 = vmul.f32 %v2375, 0.01
        %v2504 = vmul.f32 %v2376, 0.01
        %v2505 = vmul.f32 %v2377, 0.01
        %v2506 = vmul.f32 %v2378, 0.01
        %v2507 = vmul.f32 %v2379, 0.01
        %v2508 = vmul.f32 %v2380, 0.01
        %v2509 = vmul.f32 %v2381, 0.01
        %v2510 = vmul.f32 %v2382, 0.01
        %v2511 = vmul.f32 %v2383, 0.01
        %v2512 = vmul.f32 %v2384, 0.01
        %v2513 = vmul.f32 %v2385, 0.01
        %v2514 = vmul.f32 %v2386, 0.01
        %v2515 = vmul.f32 %v2387, 0.01
        %v2516 = vmul.f32 %v2388, 0.01
        %v2517 = vmul.f32 %v2389, 0.01
        %v2518 = vmul.f32 %v2390, 0.01
        %v2519 = vmul.f32 %v2391, 0.01
        %v2520 = vmul.f32 %v2392, 0.01
        %v2521 = vmul.f32 %v2393, 0.01
        %v2522 = vmul.f32 %v2394, 0.01
        %v2523 = vmul.f32 %v2395, 0.01
        %v2524 = vmul.f32 %v2396, 0.01
        %v2525 = vmul.f32 %v2397, 0.01
        %v2526 = vmul.f32 %v2398, 0.01
        %v2527 = vmul.f32 %v2399, 0.01
        %v2528 = vmul.f32 %v2400, 0.01
        %v2529 = vmul.f32 %v2401, 0.01
        %v2530 = vmul.f32 %v2402, 0.01
        %v2531 = vmul.f32 %v2403, 0.01
        %v2532 = vmul.f32 %v2404, 0.01
        %v2533 = vmul.f32 %v2405, 0.01
        %v2534 = vmul.f32 %v2406, 0.01
        %v2535 = vmul.f32 %v2407, 0.01
        %v2536 = vmul.f32 %v2408, 0.01
        %v2537 = vmul.f32 %v2409, 0.01
        %v2538 = vmul.f32 %v2410, 0.01
        %v2539 = vmul.f32 %v2411, 0.01
        %v2540 = vmul.f32 %v2412, 0.01
        %v2541 = vmul.f32 %v2413, 0.01
        %v2542 = vmul.f32 %v2414, 0.01
        %v2543 = vmul.f32 %v2415, 0.01
        %v2544 = vmul.f32 %v2416, 0.01
        %v2545 = vmul.f32 %v2417, 0.01
        %v2546 = vmul.f32 %v2418, 0.01
        %v2547 = vmul.f32 %v2419, 0.01
        %v2548 = vmul.f32 %v2420, 0.01
        %v2549 = vmul.f32 %v2421, 0.01
        %v2550 = vsel %vm2422, %v2358, %v2486
        %v2551 = vsel %vm2423, %v2359, %v2487
        %v2552 = vsel %vm2424, %v2360, %v2488
        %v2553 = vsel %vm2425, %v2361, %v2489
        %v2554 = vsel %vm2426, %v2362, %v2490
        %v2555 = vsel %vm2427, %v2363, %v2491
        %v2556 = vsel %vm2428, %v2364, %v2492
        %v2557 = vsel %vm2429, %v2365, %v2493
        %v2558 = vsel %vm2430, %v2366, %v2494
        %v2559 = vsel %vm2431, %v2367, %v2495
        %v2560 = vsel %vm2432, %v2368, %v2496
        %v2561 = vsel %vm2433, %v2369, %v2497
        %v2562 = vsel %vm2434, %v2370, %v2498
        %v2563 = vsel %vm2435, %v2371, %v2499
        %v2564 = vsel %vm2436, %v2372, %v2500
        %v2565 = vsel %vm2437, %v2373, %v2501
        %v2566 = vsel %vm2438, %v2374, %v2502
        %v2567 = vsel %vm2439, %v2375, %v2503
        %v2568 = vsel %vm2440, %v2376, %v2504
        %v2569 = vsel %vm2441, %v2377, %v2505
        %v2570 = vsel %vm2442, %v2378, %v2506
        %v2571 = vsel %vm2443, %v2379, %v2507
        %v2572 = vsel %vm2444, %v2380, %v2508
        %v2573 = vsel %vm2445, %v2381, %v2509
        %v2574 = vsel %vm2446, %v2382, %v2510
        %v2575 = vsel %vm2447, %v2383, %v2511
        %v2576 = vsel %vm2448, %v2384, %v2512
        %v2577 = vsel %vm2449, %v2385, %v2513
        %v2578 = vsel %vm2450, %v2386, %v2514
        %v2579 = vsel %vm2451, %v2387, %v2515
        %v2580 = vsel %vm2452, %v2388, %v2516
        %v2581 = vsel %vm2453, %v2389, %v2517
        %v2582 = vsel %vm2454, %v2390, %v2518
        %v2583 = vsel %vm2455, %v2391, %v2519
        %v2584 = vsel %vm2456, %v2392, %v2520
        %v2585 = vsel %vm2457, %v2393, %v2521
        %v2586 = vsel %vm2458, %v2394, %v2522
        %v2587 = vsel %vm2459, %v2395, %v2523
        %v2588 = vsel %vm2460, %v2396, %v2524
        %v2589 = vsel %vm2461, %v2397, %v2525
        %v2590 = vsel %vm2462, %v2398, %v2526
        %v2591 = vsel %vm2463, %v2399, %v2527
        %v2592 = vsel %vm2464, %v2400, %v2528
        %v2593 = vsel %vm2465, %v2401, %v2529
        %v2594 = vsel %vm2466, %v2402, %v2530
        %v2595 = vsel %vm2467, %v2403, %v2531
        %v2596 = vsel %vm2468, %v2404, %v2532
        %v2597 = vsel %vm2469, %v2405, %v2533
        %v2598 = vsel %vm2470, %v2406, %v2534
        %v2599 = vsel %vm2471, %v2407, %v2535
        %v2600 = vsel %vm2472, %v2408, %v2536
        %v2601 = vsel %vm2473, %v2409, %v2537
        %v2602 = vsel %vm2474, %v2410, %v2538
        %v2603 = vsel %vm2475, %v2411, %v2539
        %v2604 = vsel %vm2476, %v2412, %v2540
        %v2605 = vsel %vm2477, %v2413, %v2541
        %v2606 = vsel %vm2478, %v2414, %v2542
        %v2607 = vsel %vm2479, %v2415, %v2543
        %v2608 = vsel %vm2480, %v2416, %v2544
        %v2609 = vsel %vm2481, %v2417, %v2545
        %v2610 = vsel %vm2482, %v2418, %v2546
        %v2611 = vsel %vm2483, %v2419, %v2547
        %v2612 = vsel %vm2484, %v2420, %v2548
        %v2613 = vsel %vm2485, %v2421, %v2549
        %v2614 = vmul.f32 %v2550, %v646
        %v2615 = vmul.f32 %v2551, %v646
        %v2616 = vmul.f32 %v2552, %v651
        %v2617 = vmul.f32 %v2553, %v651
        %v2618 = vmul.f32 %v2554, %v656
        %v2619 = vmul.f32 %v2555, %v656
        %v2620 = vmul.f32 %v2556, %v661
        %v2621 = vmul.f32 %v2557, %v661
        %v2622 = vmul.f32 %v2558, %v666
        %v2623 = vmul.f32 %v2559, %v666
        %v2624 = vmul.f32 %v2560, %v671
        %v2625 = vmul.f32 %v2561, %v671
        %v2626 = vmul.f32 %v2562, %v676
        %v2627 = vmul.f32 %v2563, %v676
        %v2628 = vmul.f32 %v2564, %v681
        %v2629 = vmul.f32 %v2565, %v681
        %v2630 = vmul.f32 %v2566, %v686
        %v2631 = vmul.f32 %v2567, %v686
        %v2632 = vmul.f32 %v2568, %v691
        %v2633 = vmul.f32 %v2569, %v691
        %v2634 = vmul.f32 %v2570, %v696
        %v2635 = vmul.f32 %v2571, %v696
        %v2636 = vmul.f32 %v2572, %v701
        %v2637 = vmul.f32 %v2573, %v701
        %v2638 = vmul.f32 %v2574, %v706
        %v2639 = vmul.f32 %v2575, %v706
        %v2640 = vmul.f32 %v2576, %v711
        %v2641 = vmul.f32 %v2577, %v711
        %v2642 = vmul.f32 %v2578, %v716
        %v2643 = vmul.f32 %v2579, %v716
        %v2644 = vmul.f32 %v2580, %v721
        %v2645 = vmul.f32 %v2581, %v721
        %v2646 = vmul.f32 %v2582, %v726
        %v2647 = vmul.f32 %v2583, %v726
        %v2648 = vmul.f32 %v2584, %v731
        %v2649 = vmul.f32 %v2585, %v731
        %v2650 = vmul.f32 %v2586, %v736
        %v2651 = vmul.f32 %v2587, %v736
        %v2652 = vmul.f32 %v2588, %v741
        %v2653 = vmul.f32 %v2589, %v741
        %v2654 = vmul.f32 %v2590, %v746
        %v2655 = vmul.f32 %v2591, %v746
        %v2656 = vmul.f32 %v2592, %v751
        %v2657 = vmul.f32 %v2593, %v751
        %v2658 = vmul.f32 %v2594, %v756
        %v2659 = vmul.f32 %v2595, %v756
        %v2660 = vmul.f32 %v2596, %v761
        %v2661 = vmul.f32 %v2597, %v761
        %v2662 = vmul.f32 %v2598, %v766
        %v2663 = vmul.f32 %v2599, %v766
        %v2664 = vmul.f32 %v2600, %v771
        %v2665 = vmul.f32 %v2601, %v771
        %v2666 = vmul.f32 %v2602, %v776
        %v2667 = vmul.f32 %v2603, %v776
        %v2668 = vmul.f32 %v2604, %v781
        %v2669 = vmul.f32 %v2605, %v781
        %v2670 = vmul.f32 %v2606, %v786
        %v2671 = vmul.f32 %v2607, %v786
        %v2672 = vmul.f32 %v2608, %v791
        %v2673 = vmul.f32 %v2609, %v791
        %v2674 = vmul.f32 %v2610, %v796
        %v2675 = vmul.f32 %v2611, %v796
        %v2676 = vmul.f32 %v2612, %v801
        %v2677 = vmul.f32 %v2613, %v801
        %v2678 = vadd.f32 %v2614, %v2616
        %v2679 = vadd.f32 %v2678, %v2618
        %v2680 = vadd.f32 %v2679, %v2620
        %v2681 = vadd.f32 %v2680, %v2622
        %v2682 = vadd.f32 %v2681, %v2624
        %v2683 = vadd.f32 %v2682, %v2626
        %v2684 = vadd.f32 %v2683, %v2628
        %v2685 = vadd.f32 %v2684, %v2630
        %v2686 = vadd.f32 %v2685, %v2632
        %v2687 = vadd.f32 %v2686, %v2634
        %v2688 = vadd.f32 %v2687, %v2636
        %v2689 = vadd.f32 %v2688, %v2638
        %v2690 = vadd.f32 %v2689, %v2640
        %v2691 = vadd.f32 %v2690, %v2642
        %v2692 = vadd.f32 %v2691, %v2644
        %v2693 = vadd.f32 %v2692, %v2646
        %v2694 = vadd.f32 %v2693, %v2648
        %v2695 = vadd.f32 %v2694, %v2650
        %v2696 = vadd.f32 %v2695, %v2652
        %v2697 = vadd.f32 %v2696, %v2654
        %v2698 = vadd.f32 %v2697, %v2656
        %v2699 = vadd.f32 %v2698, %v2658
        %v2700 = vadd.f32 %v2699, %v2660
        %v2701 = vadd.f32 %v2700, %v2662
        %v2702 = vadd.f32 %v2701, %v2664
        %v2703 = vadd.f32 %v2702, %v2666
        %v2704 = vadd.f32 %v2703, %v2668
        %v2705 = vadd.f32 %v2704, %v2670
        %v2706 = vadd.f32 %v2705, %v2672
        %v2707 = vadd.f32 %v2706, %v2674
        %v2708 = vadd.f32 %v2707, %v2676
        %v2709 = vrot.slane %v2708, 4
        %v2710 = vadd.f32 %v2708, %v2709
        %v2711 = vrot.slane %v2710, 2
        %v2712 = vadd.f32 %v2710, %v2711
        %v2713 = vrot.slane %v2712, 1
        %v2714 = vadd.f32 %v2712, %v2713
        %v2715 = vadd.f32 %v2615, %v2617
        %v2716 = vadd.f32 %v2715, %v2619
        %v2717 = vadd.f32 %v2716, %v2621
        %v2718 = vadd.f32 %v2717, %v2623
        %v2719 = vadd.f32 %v2718, %v2625
        %v2720 = vadd.f32 %v2719, %v2627
        %v2721 = vadd.f32 %v2720, %v2629
        %v2722 = vadd.f32 %v2721, %v2631
        %v2723 = vadd.f32 %v2722, %v2633
        %v2724 = vadd.f32 %v2723, %v2635
        %v2725 = vadd.f32 %v2724, %v2637
        %v2726 = vadd.f32 %v2725, %v2639
        %v2727 = vadd.f32 %v2726, %v2641
        %v2728 = vadd.f32 %v2727, %v2643
        %v2729 = vadd.f32 %v2728, %v2645
        %v2730 = vadd.f32 %v2729, %v2647
        %v2731 = vadd.f32 %v2730, %v2649
        %v2732 = vadd.f32 %v2731, %v2651
        %v2733 = vadd.f32 %v2732, %v2653
        %v2734 = vadd.f32 %v2733, %v2655
        %v2735 = vadd.f32 %v2734, %v2657
        %v2736 = vadd.f32 %v2735, %v2659
        %v2737 = vadd.f32 %v2736, %v2661
        %v2738 = vadd.f32 %v2737, %v2663
        %v2739 = vadd.f32 %v2738, %v2665
        %v2740 = vadd.f32 %v2739, %v2667
        %v2741 = vadd.f32 %v2740, %v2669
        %v2742 = vadd.f32 %v2741, %v2671
        %v2743 = vadd.f32 %v2742, %v2673
        %v2744 = vadd.f32 %v2743, %v2675
        %v2745 = vadd.f32 %v2744, %v2677
        %v2746 = vrot.slane %v2745, 4
        %v2747 = vadd.f32 %v2745, %v2746
        %v2748 = vrot.slane %v2747, 2
        %v2749 = vadd.f32 %v2747, %v2748
        %v2750 = vrot.slane %v2749, 1
        %v2751 = vadd.f32 %v2749, %v2750
        %v2752 = vadd.f32 %v2714, %v1269
        %v2753 = vadd.f32 %v2751, %v1269
        %v2754 = vmul.f32 %v2752, 2.0
        %v2755 = vmul.f32 %v2753, 2.0
        %v2756 = vtanh.pop %v2754
        %v2757 = vtanh.pop %v2755
        %v2760 = vcombine.low %v2756, %v2757
        %v2762 = vunpack.c.l.s4 1966171168
        %v2763 = vunpack.c.0.s8 %v2762
        %v2764 = vlaneseq
        %v2765 = vshrl.u32 %v2764, 7
        %v2766 = vsub.s32 %v2763, %v2765
        %v2767 = vrot.slane %v2760, %v2766
        %v2769 = vunpack.c.l.s4 1966171168
        %v2770 = vunpack.c.0.s8 %v2769
        %v2771 = vlaneseq
        %v2772 = vshrl.u32 %v2771, 7
        %v2773 = vsub.s32 %v2770, %v2772
        %v2774 = vrot.slane %v2767, %v2773
        %s2776 = scalar_lea.vmem %s218, 3 [#allocation3]
        %2777 = vst.msk [vmem:[%s2776] ss:$8 sm:$0x3] %vm1297, %v2774
        %2778 = vst.msk [vmem:[%s2776] ss:$8 sm:$0x0] %vm1297, %v2774
        %v2779 = vlaneseq
        %v2780 = vshrl.u32 %v2779, 7
        %v2781 = vsub.s32 4, %v2780
        %v2782 = vrot.slane %v224, %v2781
        %v2783 = vlaneseq
        %v2784 = vshrl.u32 %v2783, 7
        %v2785 = vsub.s32 4, %v2784
        %v2786 = vrot.slane %v225, %v2785
        %v2787 = vmul.f32 %v2782, %v262
        %v2788 = vmul.f32 %v2786, %v262
        %v2789 = vmul.f32 %v2782, %v267
        %v2790 = vmul.f32 %v2786, %v267
        %v2791 = vmul.f32 %v2782, %v272
        %v2792 = vmul.f32 %v2786, %v272
        %v2793 = vmul.f32 %v2782, %v277
        %v2794 = vmul.f32 %v2786, %v277
        %v2795 = vmul.f32 %v2782, %v282
        %v2796 = vmul.f32 %v2786, %v282
        %v2797 = vmul.f32 %v2782, %v287
        %v2798 = vmul.f32 %v2786, %v287
        %v2799 = vmul.f32 %v2782, %v292
        %v2800 = vmul.f32 %v2786, %v292
        %v2801 = vmul.f32 %v2782, %v297
        %v2802 = vmul.f32 %v2786, %v297
        %v2803 = vmul.f32 %v2782, %v302
        %v2804 = vmul.f32 %v2786, %v302
        %v2805 = vmul.f32 %v2782, %v307
        %v2806 = vmul.f32 %v2786, %v307
        %v2807 = vmul.f32 %v2782, %v312
        %v2808 = vmul.f32 %v2786, %v312
        %v2809 = vmul.f32 %v2782, %v317
        %v2810 = vmul.f32 %v2786, %v317
        %v2811 = vmul.f32 %v2782, %v322
        %v2812 = vmul.f32 %v2786, %v322
        %v2813 = vmul.f32 %v2782, %v327
        %v2814 = vmul.f32 %v2786, %v327
        %v2815 = vmul.f32 %v2782, %v332
        %v2816 = vmul.f32 %v2786, %v332
        %v2817 = vmul.f32 %v2782, %v337
        %v2818 = vmul.f32 %v2786, %v337
        %v2819 = vmul.f32 %v2782, %v342
        %v2820 = vmul.f32 %v2786, %v342
        %v2821 = vmul.f32 %v2782, %v347
        %v2822 = vmul.f32 %v2786, %v347
        %v2823 = vmul.f32 %v2782, %v352
        %v2824 = vmul.f32 %v2786, %v352
        %v2825 = vmul.f32 %v2782, %v357
        %v2826 = vmul.f32 %v2786, %v357
        %v2827 = vmul.f32 %v2782, %v362
        %v2828 = vmul.f32 %v2786, %v362
        %v2829 = vmul.f32 %v2782, %v367
        %v2830 = vmul.f32 %v2786, %v367
        %v2831 = vmul.f32 %v2782, %v372
        %v2832 = vmul.f32 %v2786, %v372
        %v2833 = vmul.f32 %v2782, %v377
        %v2834 = vmul.f32 %v2786, %v377
        %v2835 = vmul.f32 %v2782, %v382
        %v2836 = vmul.f32 %v2786, %v382
        %v2837 = vmul.f32 %v2782, %v387
        %v2838 = vmul.f32 %v2786, %v387
        %v2839 = vmul.f32 %v2782, %v392
        %v2840 = vmul.f32 %v2786, %v392
        %v2841 = vmul.f32 %v2782, %v397
        %v2842 = vmul.f32 %v2786, %v397
        %v2843 = vmul.f32 %v2782, %v402
        %v2844 = vmul.f32 %v2786, %v402
        %v2845 = vmul.f32 %v2782, %v407
        %v2846 = vmul.f32 %v2786, %v407
        %v2847 = vmul.f32 %v2782, %v412
        %v2848 = vmul.f32 %v2786, %v412
        %v2849 = vmul.f32 %v2782, %v417
        %v2850 = vmul.f32 %v2786, %v417
        %v2851 = vadd.f32 %v2787, %v454
        %v2852 = vadd.f32 %v2788, %v454
        %v2853 = vadd.f32 %v2789, %v459
        %v2854 = vadd.f32 %v2790, %v459
        %v2855 = vadd.f32 %v2791, %v464
        %v2856 = vadd.f32 %v2792, %v464
        %v2857 = vadd.f32 %v2793, %v469
        %v2858 = vadd.f32 %v2794, %v469
        %v2859 = vadd.f32 %v2795, %v474
        %v2860 = vadd.f32 %v2796, %v474
        %v2861 = vadd.f32 %v2797, %v479
        %v2862 = vadd.f32 %v2798, %v479
        %v2863 = vadd.f32 %v2799, %v484
        %v2864 = vadd.f32 %v2800, %v484
        %v2865 = vadd.f32 %v2801, %v489
        %v2866 = vadd.f32 %v2802, %v489
        %v2867 = vadd.f32 %v2803, %v494
        %v2868 = vadd.f32 %v2804, %v494
        %v2869 = vadd.f32 %v2805, %v499
        %v2870 = vadd.f32 %v2806, %v499
        %v2871 = vadd.f32 %v2807, %v504
        %v2872 = vadd.f32 %v2808, %v504
        %v2873 = vadd.f32 %v2809, %v509
        %v2874 = vadd.f32 %v2810, %v509
        %v2875 = vadd.f32 %v2811, %v514
        %v2876 = vadd.f32 %v2812, %v514
        %v2877 = vadd.f32 %v2813, %v519
        %v2878 = vadd.f32 %v2814, %v519
        %v2879 = vadd.f32 %v2815, %v524
        %v2880 = vadd.f32 %v2816, %v524
        %v2881 = vadd.f32 %v2817, %v529
        %v2882 = vadd.f32 %v2818, %v529
        %v2883 = vadd.f32 %v2819, %v534
        %v2884 = vadd.f32 %v2820, %v534
        %v2885 = vadd.f32 %v2821, %v539
        %v2886 = vadd.f32 %v2822, %v539
        %v2887 = vadd.f32 %v2823, %v544
        %v2888 = vadd.f32 %v2824, %v544
        %v2889 = vadd.f32 %v2825, %v549
        %v2890 = vadd.f32 %v2826, %v549
        %v2891 = vadd.f32 %v2827, %v554
        %v2892 = vadd.f32 %v2828, %v554
        %v2893 = vadd.f32 %v2829, %v559
        %v2894 = vadd.f32 %v2830, %v559
        %v2895 = vadd.f32 %v2831, %v564
        %v2896 = vadd.f32 %v2832, %v564
        %v2897 = vadd.f32 %v2833, %v569
        %v2898 = vadd.f32 %v2834, %v569
        %v2899 = vadd.f32 %v2835, %v574
        %v2900 = vadd.f32 %v2836, %v574
        %v2901 = vadd.f32 %v2837, %v579
        %v2902 = vadd.f32 %v2838, %v579
        %v2903 = vadd.f32 %v2839, %v584
        %v2904 = vadd.f32 %v2840, %v584
        %v2905 = vadd.f32 %v2841, %v589
        %v2906 = vadd.f32 %v2842, %v589
        %v2907 = vadd.f32 %v2843, %v594
        %v2908 = vadd.f32 %v2844, %v594
        %v2909 = vadd.f32 %v2845, %v599
        %v2910 = vadd.f32 %v2846, %v599
        %v2911 = vadd.f32 %v2847, %v604
        %v2912 = vadd.f32 %v2848, %v604
        %v2913 = vadd.f32 %v2849, %v609
        %v2914 = vadd.f32 %v2850, %v609
        %vm2915 = vcmp.gt.f32.partialorder %v2851, 0.0
        %vm2916 = vcmp.gt.f32.partialorder %v2852, 0.0
        %vm2917 = vcmp.gt.f32.partialorder %v2853, 0.0
        %vm2918 = vcmp.gt.f32.partialorder %v2854, 0.0
        %vm2919 = vcmp.gt.f32.partialorder %v2855, 0.0
        %vm2920 = vcmp.gt.f32.partialorder %v2856, 0.0
        %vm2921 = vcmp.gt.f32.partialorder %v2857, 0.0
        %vm2922 = vcmp.gt.f32.partialorder %v2858, 0.0
        %vm2923 = vcmp.gt.f32.partialorder %v2859, 0.0
        %vm2924 = vcmp.gt.f32.partialorder %v2860, 0.0
        %vm2925 = vcmp.gt.f32.partialorder %v2861, 0.0
        %vm2926 = vcmp.gt.f32.partialorder %v2862, 0.0
        %vm2927 = vcmp.gt.f32.partialorder %v2863, 0.0
        %vm2928 = vcmp.gt.f32.partialorder %v2864, 0.0
        %vm2929 = vcmp.gt.f32.partialorder %v2865, 0.0
        %vm2930 = vcmp.gt.f32.partialorder %v2866, 0.0
        %vm2931 = vcmp.gt.f32.partialorder %v2867, 0.0
        %vm2932 = vcmp.gt.f32.partialorder %v2868, 0.0
        %vm2933 = vcmp.gt.f32.partialorder %v2869, 0.0
        %vm2934 = vcmp.gt.f32.partialorder %v2870, 0.0
        %vm2935 = vcmp.gt.f32.partialorder %v2871, 0.0
        %vm2936 = vcmp.gt.f32.partialorder %v2872, 0.0
        %vm2937 = vcmp.gt.f32.partialorder %v2873, 0.0
        %vm2938 = vcmp.gt.f32.partialorder %v2874, 0.0
        %vm2939 = vcmp.gt.f32.partialorder %v2875, 0.0
        %vm2940 = vcmp.gt.f32.partialorder %v2876, 0.0
        %vm2941 = vcmp.gt.f32.partialorder %v2877, 0.0
        %vm2942 = vcmp.gt.f32.partialorder %v2878, 0.0
        %vm2943 = vcmp.gt.f32.partialorder %v2879, 0.0
        %vm2944 = vcmp.gt.f32.partialorder %v2880, 0.0
        %vm2945 = vcmp.gt.f32.partialorder %v2881, 0.0
        %vm2946 = vcmp.gt.f32.partialorder %v2882, 0.0
        %vm2947 = vcmp.gt.f32.partialorder %v2883, 0.0
        %vm2948 = vcmp.gt.f32.partialorder %v2884, 0.0
        %vm2949 = vcmp.gt.f32.partialorder %v2885, 0.0
        %vm2950 = vcmp.gt.f32.partialorder %v2886, 0.0
        %vm2951 = vcmp.gt.f32.partialorder %v2887, 0.0
        %vm2952 = vcmp.gt.f32.partialorder %v2888, 0.0
        %vm2953 = vcmp.gt.f32.partialorder %v2889, 0.0
        %vm2954 = vcmp.gt.f32.partialorder %v2890, 0.0
        %vm2955 = vcmp.gt.f32.partialorder %v2891, 0.0
        %vm2956 = vcmp.gt.f32.partialorder %v2892, 0.0
        %vm2957 = vcmp.gt.f32.partialorder %v2893, 0.0
        %vm2958 = vcmp.gt.f32.partialorder %v2894, 0.0
        %vm2959 = vcmp.gt.f32.partialorder %v2895, 0.0
        %vm2960 = vcmp.gt.f32.partialorder %v2896, 0.0
        %vm2961 = vcmp.gt.f32.partialorder %v2897, 0.0
        %vm2962 = vcmp.gt.f32.partialorder %v2898, 0.0
        %vm2963 = vcmp.gt.f32.partialorder %v2899, 0.0
        %vm2964 = vcmp.gt.f32.partialorder %v2900, 0.0
        %vm2965 = vcmp.gt.f32.partialorder %v2901, 0.0
        %vm2966 = vcmp.gt.f32.partialorder %v2902, 0.0
        %vm2967 = vcmp.gt.f32.partialorder %v2903, 0.0
        %vm2968 = vcmp.gt.f32.partialorder %v2904, 0.0
        %vm2969 = vcmp.gt.f32.partialorder %v2905, 0.0
        %vm2970 = vcmp.gt.f32.partialorder %v2906, 0.0
        %vm2971 = vcmp.gt.f32.partialorder %v2907, 0.0
        %vm2972 = vcmp.gt.f32.partialorder %v2908, 0.0
        %vm2973 = vcmp.gt.f32.partialorder %v2909, 0.0
        %vm2974 = vcmp.gt.f32.partialorder %v2910, 0.0
        %vm2975 = vcmp.gt.f32.partialorder %v2911, 0.0
        %vm2976 = vcmp.gt.f32.partialorder %v2912, 0.0
        %vm2977 = vcmp.gt.f32.partialorder %v2913, 0.0
        %vm2978 = vcmp.gt.f32.partialorder %v2914, 0.0
        %v2979 = vmul.f32 %v2851, 0.01
        %v2980 = vmul.f32 %v2852, 0.01
        %v2981 = vmul.f32 %v2853, 0.01
        %v2982 = vmul.f32 %v2854, 0.01
        %v2983 = vmul.f32 %v2855, 0.01
        %v2984 = vmul.f32 %v2856, 0.01
        %v2985 = vmul.f32 %v2857, 0.01
        %v2986 = vmul.f32 %v2858, 0.01
        %v2987 = vmul.f32 %v2859, 0.01
        %v2988 = vmul.f32 %v2860, 0.01
        %v2989 = vmul.f32 %v2861, 0.01
        %v2990 = vmul.f32 %v2862, 0.01
        %v2991 = vmul.f32 %v2863, 0.01
        %v2992 = vmul.f32 %v2864, 0.01
        %v2993 = vmul.f32 %v2865, 0.01
        %v2994 = vmul.f32 %v2866, 0.01
        %v2995 = vmul.f32 %v2867, 0.01
        %v2996 = vmul.f32 %v2868, 0.01
        %v2997 = vmul.f32 %v2869, 0.01
        %v2998 = vmul.f32 %v2870, 0.01
        %v2999 = vmul.f32 %v2871, 0.01
        %v3000 = vmul.f32 %v2872, 0.01
        %v3001 = vmul.f32 %v2873, 0.01
        %v3002 = vmul.f32 %v2874, 0.01
        %v3003 = vmul.f32 %v2875, 0.01
        %v3004 = vmul.f32 %v2876, 0.01
        %v3005 = vmul.f32 %v2877, 0.01
        %v3006 = vmul.f32 %v2878, 0.01
        %v3007 = vmul.f32 %v2879, 0.01
        %v3008 = vmul.f32 %v2880, 0.01
        %v3009 = vmul.f32 %v2881, 0.01
        %v3010 = vmul.f32 %v2882, 0.01
        %v3011 = vmul.f32 %v2883, 0.01
        %v3012 = vmul.f32 %v2884, 0.01
        %v3013 = vmul.f32 %v2885, 0.01
        %v3014 = vmul.f32 %v2886, 0.01
        %v3015 = vmul.f32 %v2887, 0.01
        %v3016 = vmul.f32 %v2888, 0.01
        %v3017 = vmul.f32 %v2889, 0.01
        %v3018 = vmul.f32 %v2890, 0.01
        %v3019 = vmul.f32 %v2891, 0.01
        %v3020 = vmul.f32 %v2892, 0.01
        %v3021 = vmul.f32 %v2893, 0.01
        %v3022 = vmul.f32 %v2894, 0.01
        %v3023 = vmul.f32 %v2895, 0.01
        %v3024 = vmul.f32 %v2896, 0.01
        %v3025 = vmul.f32 %v2897, 0.01
        %v3026 = vmul.f32 %v2898, 0.01
        %v3027 = vmul.f32 %v2899, 0.01
        %v3028 = vmul.f32 %v2900, 0.01
        %v3029 = vmul.f32 %v2901, 0.01
        %v3030 = vmul.f32 %v2902, 0.01
        %v3031 = vmul.f32 %v2903, 0.01
        %v3032 = vmul.f32 %v2904, 0.01
        %v3033 = vmul.f32 %v2905, 0.01
        %v3034 = vmul.f32 %v2906, 0.01
        %v3035 = vmul.f32 %v2907, 0.01
        %v3036 = vmul.f32 %v2908, 0.01
        %v3037 = vmul.f32 %v2909, 0.01
        %v3038 = vmul.f32 %v2910, 0.01
        %v3039 = vmul.f32 %v2911, 0.01
        %v3040 = vmul.f32 %v2912, 0.01
        %v3041 = vmul.f32 %v2913, 0.01
        %v3042 = vmul.f32 %v2914, 0.01
        %v3043 = vsel %vm2915, %v2851, %v2979
        %v3044 = vsel %vm2916, %v2852, %v2980
        %v3045 = vsel %vm2917, %v2853, %v2981
        %v3046 = vsel %vm2918, %v2854, %v2982
        %v3047 = vsel %vm2919, %v2855, %v2983
        %v3048 = vsel %vm2920, %v2856, %v2984
        %v3049 = vsel %vm2921, %v2857, %v2985
        %v3050 = vsel %vm2922, %v2858, %v2986
        %v3051 = vsel %vm2923, %v2859, %v2987
        %v3052 = vsel %vm2924, %v2860, %v2988
        %v3053 = vsel %vm2925, %v2861, %v2989
        %v3054 = vsel %vm2926, %v2862, %v2990
        %v3055 = vsel %vm2927, %v2863, %v2991
        %v3056 = vsel %vm2928, %v2864, %v2992
        %v3057 = vsel %vm2929, %v2865, %v2993
        %v3058 = vsel %vm2930, %v2866, %v2994
        %v3059 = vsel %vm2931, %v2867, %v2995
        %v3060 = vsel %vm2932, %v2868, %v2996
        %v3061 = vsel %vm2933, %v2869, %v2997
        %v3062 = vsel %vm2934, %v2870, %v2998
        %v3063 = vsel %vm2935, %v2871, %v2999
        %v3064 = vsel %vm2936, %v2872, %v3000
        %v3065 = vsel %vm2937, %v2873, %v3001
        %v3066 = vsel %vm2938, %v2874, %v3002
        %v3067 = vsel %vm2939, %v2875, %v3003
        %v3068 = vsel %vm2940, %v2876, %v3004
        %v3069 = vsel %vm2941, %v2877, %v3005
        %v3070 = vsel %vm2942, %v2878, %v3006
        %v3071 = vsel %vm2943, %v2879, %v3007
        %v3072 = vsel %vm2944, %v2880, %v3008
        %v3073 = vsel %vm2945, %v2881, %v3009
        %v3074 = vsel %vm2946, %v2882, %v3010
        %v3075 = vsel %vm2947, %v2883, %v3011
        %v3076 = vsel %vm2948, %v2884, %v3012
        %v3077 = vsel %vm2949, %v2885, %v3013
        %v3078 = vsel %vm2950, %v2886, %v3014
        %v3079 = vsel %vm2951, %v2887, %v3015
        %v3080 = vsel %vm2952, %v2888, %v3016
        %v3081 = vsel %vm2953, %v2889, %v3017
        %v3082 = vsel %vm2954, %v2890, %v3018
        %v3083 = vsel %vm2955, %v2891, %v3019
        %v3084 = vsel %vm2956, %v2892, %v3020
        %v3085 = vsel %vm2957, %v2893, %v3021
        %v3086 = vsel %vm2958, %v2894, %v3022
        %v3087 = vsel %vm2959, %v2895, %v3023
        %v3088 = vsel %vm2960, %v2896, %v3024
        %v3089 = vsel %vm2961, %v2897, %v3025
        %v3090 = vsel %vm2962, %v2898, %v3026
        %v3091 = vsel %vm2963, %v2899, %v3027
        %v3092 = vsel %vm2964, %v2900, %v3028
        %v3093 = vsel %vm2965, %v2901, %v3029
        %v3094 = vsel %vm2966, %v2902, %v3030
        %v3095 = vsel %vm2967, %v2903, %v3031
        %v3096 = vsel %vm2968, %v2904, %v3032
        %v3097 = vsel %vm2969, %v2905, %v3033
        %v3098 = vsel %vm2970, %v2906, %v3034
        %v3099 = vsel %vm2971, %v2907, %v3035
        %v3100 = vsel %vm2972, %v2908, %v3036
        %v3101 = vsel %vm2973, %v2909, %v3037
        %v3102 = vsel %vm2974, %v2910, %v3038
        %v3103 = vsel %vm2975, %v2911, %v3039
        %v3104 = vsel %vm2976, %v2912, %v3040
        %v3105 = vsel %vm2977, %v2913, %v3041
        %v3106 = vsel %vm2978, %v2914, %v3042
        %v3107 = vmul.f32 %v3043, %v646
        %v3108 = vmul.f32 %v3044, %v646
        %v3109 = vmul.f32 %v3045, %v651
        %v3110 = vmul.f32 %v3046, %v651
        %v3111 = vmul.f32 %v3047, %v656
        %v3112 = vmul.f32 %v3048, %v656
        %v3113 = vmul.f32 %v3049, %v661
        %v3114 = vmul.f32 %v3050, %v661
        %v3115 = vmul.f32 %v3051, %v666
        %v3116 = vmul.f32 %v3052, %v666
        %v3117 = vmul.f32 %v3053, %v671
        %v3118 = vmul.f32 %v3054, %v671
        %v3119 = vmul.f32 %v3055, %v676
        %v3120 = vmul.f32 %v3056, %v676
        %v3121 = vmul.f32 %v3057, %v681
        %v3122 = vmul.f32 %v3058, %v681
        %v3123 = vmul.f32 %v3059, %v686
        %v3124 = vmul.f32 %v3060, %v686
        %v3125 = vmul.f32 %v3061, %v691
        %v3126 = vmul.f32 %v3062, %v691
        %v3127 = vmul.f32 %v3063, %v696
        %v3128 = vmul.f32 %v3064, %v696
        %v3129 = vmul.f32 %v3065, %v701
        %v3130 = vmul.f32 %v3066, %v701
        %v3131 = vmul.f32 %v3067, %v706
        %v3132 = vmul.f32 %v3068, %v706
        %v3133 = vmul.f32 %v3069, %v711
        %v3134 = vmul.f32 %v3070, %v711
        %v3135 = vmul.f32 %v3071, %v716
        %v3136 = vmul.f32 %v3072, %v716
        %v3137 = vmul.f32 %v3073, %v721
        %v3138 = vmul.f32 %v3074, %v721
        %v3139 = vmul.f32 %v3075, %v726
        %v3140 = vmul.f32 %v3076, %v726
        %v3141 = vmul.f32 %v3077, %v731
        %v3142 = vmul.f32 %v3078, %v731
        %v3143 = vmul.f32 %v3079, %v736
        %v3144 = vmul.f32 %v3080, %v736
        %v3145 = vmul.f32 %v3081, %v741
        %v3146 = vmul.f32 %v3082, %v741
        %v3147 = vmul.f32 %v3083, %v746
        %v3148 = vmul.f32 %v3084, %v746
        %v3149 = vmul.f32 %v3085, %v751
        %v3150 = vmul.f32 %v3086, %v751
        %v3151 = vmul.f32 %v3087, %v756
        %v3152 = vmul.f32 %v3088, %v756
        %v3153 = vmul.f32 %v3089, %v761
        %v3154 = vmul.f32 %v3090, %v761
        %v3155 = vmul.f32 %v3091, %v766
        %v3156 = vmul.f32 %v3092, %v766
        %v3157 = vmul.f32 %v3093, %v771
        %v3158 = vmul.f32 %v3094, %v771
        %v3159 = vmul.f32 %v3095, %v776
        %v3160 = vmul.f32 %v3096, %v776
        %v3161 = vmul.f32 %v3097, %v781
        %v3162 = vmul.f32 %v3098, %v781
        %v3163 = vmul.f32 %v3099, %v786
        %v3164 = vmul.f32 %v3100, %v786
        %v3165 = vmul.f32 %v3101, %v791
        %v3166 = vmul.f32 %v3102, %v791
        %v3167 = vmul.f32 %v3103, %v796
        %v3168 = vmul.f32 %v3104, %v796
        %v3169 = vmul.f32 %v3105, %v801
        %v3170 = vmul.f32 %v3106, %v801
        %v3171 = vadd.f32 %v3107, %v3109
        %v3172 = vadd.f32 %v3171, %v3111
        %v3173 = vadd.f32 %v3172, %v3113
        %v3174 = vadd.f32 %v3173, %v3115
        %v3175 = vadd.f32 %v3174, %v3117
        %v3176 = vadd.f32 %v3175, %v3119
        %v3177 = vadd.f32 %v3176, %v3121
        %v3178 = vadd.f32 %v3177, %v3123
        %v3179 = vadd.f32 %v3178, %v3125
        %v3180 = vadd.f32 %v3179, %v3127
        %v3181 = vadd.f32 %v3180, %v3129
        %v3182 = vadd.f32 %v3181, %v3131
        %v3183 = vadd.f32 %v3182, %v3133
        %v3184 = vadd.f32 %v3183, %v3135
        %v3185 = vadd.f32 %v3184, %v3137
        %v3186 = vadd.f32 %v3185, %v3139
        %v3187 = vadd.f32 %v3186, %v3141
        %v3188 = vadd.f32 %v3187, %v3143
        %v3189 = vadd.f32 %v3188, %v3145
        %v3190 = vadd.f32 %v3189, %v3147
        %v3191 = vadd.f32 %v3190, %v3149
        %v3192 = vadd.f32 %v3191, %v3151
        %v3193 = vadd.f32 %v3192, %v3153
        %v3194 = vadd.f32 %v3193, %v3155
        %v3195 = vadd.f32 %v3194, %v3157
        %v3196 = vadd.f32 %v3195, %v3159
        %v3197 = vadd.f32 %v3196, %v3161
        %v3198 = vadd.f32 %v3197, %v3163
        %v3199 = vadd.f32 %v3198, %v3165
        %v3200 = vadd.f32 %v3199, %v3167
        %v3201 = vadd.f32 %v3200, %v3169
        %v3202 = vrot.slane %v3201, 4
        %v3203 = vadd.f32 %v3201, %v3202
        %v3204 = vrot.slane %v3203, 2
        %v3205 = vadd.f32 %v3203, %v3204
        %v3206 = vrot.slane %v3205, 1
        %v3207 = vadd.f32 %v3205, %v3206
        %v3208 = vadd.f32 %v3108, %v3110
        %v3209 = vadd.f32 %v3208, %v3112
        %v3210 = vadd.f32 %v3209, %v3114
        %v3211 = vadd.f32 %v3210, %v3116
        %v3212 = vadd.f32 %v3211, %v3118
        %v3213 = vadd.f32 %v3212, %v3120
        %v3214 = vadd.f32 %v3213, %v3122
        %v3215 = vadd.f32 %v3214, %v3124
        %v3216 = vadd.f32 %v3215, %v3126
        %v3217 = vadd.f32 %v3216, %v3128
        %v3218 = vadd.f32 %v3217, %v3130
        %v3219 = vadd.f32 %v3218, %v3132
        %v3220 = vadd.f32 %v3219, %v3134
        %v3221 = vadd.f32 %v3220, %v3136
        %v3222 = vadd.f32 %v3221, %v3138
        %v3223 = vadd.f32 %v3222, %v3140
        %v3224 = vadd.f32 %v3223, %v3142
        %v3225 = vadd.f32 %v3224, %v3144
        %v3226 = vadd.f32 %v3225, %v3146
        %v3227 = vadd.f32 %v3226, %v3148
        %v3228 = vadd.f32 %v3227, %v3150
        %v3229 = vadd.f32 %v3228, %v3152
        %v3230 = vadd.f32 %v3229, %v3154
        %v3231 = vadd.f32 %v3230, %v3156
        %v3232 = vadd.f32 %v3231, %v3158
        %v3233 = vadd.f32 %v3232, %v3160
        %v3234 = vadd.f32 %v3233, %v3162
        %v3235 = vadd.f32 %v3234, %v3164
        %v3236 = vadd.f32 %v3235, %v3166
        %v3237 = vadd.f32 %v3236, %v3168
        %v3238 = vadd.f32 %v3237, %v3170
        %v3239 = vrot.slane %v3238, 4
        %v3240 = vadd.f32 %v3238, %v3239
        %v3241 = vrot.slane %v3240, 2
        %v3242 = vadd.f32 %v3240, %v3241
        %v3243 = vrot.slane %v3242, 1
        %v3244 = vadd.f32 %v3242, %v3243
        %v3245 = vadd.f32 %v3207, %v1269
        %v3246 = vadd.f32 %v3244, %v1269
        %v3247 = vmul.f32 %v3245, 2.0
        %v3248 = vmul.f32 %v3246, 2.0
        %v3249 = vtanh.pop %v3247
        %v3250 = vtanh.pop %v3248
        %v3253 = vcombine.low %v3249, %v3250
        %v3255 = vunpack.c.l.s4 1966171168
        %v3256 = vunpack.c.0.s8 %v3255
        %v3257 = vlaneseq
        %v3258 = vshrl.u32 %v3257, 7
        %v3259 = vsub.s32 %v3256, %v3258
        %v3260 = vrot.slane %v3253, %v3259
        %v3262 = vunpack.c.l.s4 1966171168
        %v3263 = vunpack.c.0.s8 %v3262
        %v3264 = vlaneseq
        %v3265 = vshrl.u32 %v3264, 7
        %v3266 = vsub.s32 %v3263, %v3265
        %v3267 = vrot.slane %v3260, %v3266
        %s3269 = scalar_lea.vmem %s218, 4 [#allocation3]
        %3270 = vst.msk [vmem:[%s3269] ss:$8 sm:$0x3] %vm1297, %v3267
        %3271 = vst.msk [vmem:[%s3269] ss:$8 sm:$0x0] %vm1297, %v3267
        %v3272 = vlaneseq
        %v3273 = vshrl.u32 %v3272, 7
        %v3274 = vsub.s32 5, %v3273
        %v3275 = vrot.slane %v224, %v3274
        %v3276 = vlaneseq
        %v3277 = vshrl.u32 %v3276, 7
        %v3278 = vsub.s32 5, %v3277
        %v3279 = vrot.slane %v225, %v3278
        %v3280 = vmul.f32 %v3275, %v262
        %v3281 = vmul.f32 %v3279, %v262
        %v3282 = vmul.f32 %v3275, %v267
        %v3283 = vmul.f32 %v3279, %v267
        %v3284 = vmul.f32 %v3275, %v272
        %v3285 = vmul.f32 %v3279, %v272
        %v3286 = vmul.f32 %v3275, %v277
        %v3287 = vmul.f32 %v3279, %v277
        %v3288 = vmul.f32 %v3275, %v282
        %v3289 = vmul.f32 %v3279, %v282
        %v3290 = vmul.f32 %v3275, %v287
        %v3291 = vmul.f32 %v3279, %v287
        %v3292 = vmul.f32 %v3275, %v292
        %v3293 = vmul.f32 %v3279, %v292
        %v3294 = vmul.f32 %v3275, %v297
        %v3295 = vmul.f32 %v3279, %v297
        %v3296 = vmul.f32 %v3275, %v302
        %v3297 = vmul.f32 %v3279, %v302
        %v3298 = vmul.f32 %v3275, %v307
        %v3299 = vmul.f32 %v3279, %v307
        %v3300 = vmul.f32 %v3275, %v312
        %v3301 = vmul.f32 %v3279, %v312
        %v3302 = vmul.f32 %v3275, %v317
        %v3303 = vmul.f32 %v3279, %v317
        %v3304 = vmul.f32 %v3275, %v322
        %v3305 = vmul.f32 %v3279, %v322
        %v3306 = vmul.f32 %v3275, %v327
        %v3307 = vmul.f32 %v3279, %v327
        %v3308 = vmul.f32 %v3275, %v332
        %v3309 = vmul.f32 %v3279, %v332
        %v3310 = vmul.f32 %v3275, %v337
        %v3311 = vmul.f32 %v3279, %v337
        %v3312 = vmul.f32 %v3275, %v342
        %v3313 = vmul.f32 %v3279, %v342
        %v3314 = vmul.f32 %v3275, %v347
        %v3315 = vmul.f32 %v3279, %v347
        %v3316 = vmul.f32 %v3275, %v352
        %v3317 = vmul.f32 %v3279, %v352
        %v3318 = vmul.f32 %v3275, %v357
        %v3319 = vmul.f32 %v3279, %v357
        %v3320 = vmul.f32 %v3275, %v362
        %v3321 = vmul.f32 %v3279, %v362
        %v3322 = vmul.f32 %v3275, %v367
        %v3323 = vmul.f32 %v3279, %v367
        %v3324 = vmul.f32 %v3275, %v372
        %v3325 = vmul.f32 %v3279, %v372
        %v3326 = vmul.f32 %v3275, %v377
        %v3327 = vmul.f32 %v3279, %v377
        %v3328 = vmul.f32 %v3275, %v382
        %v3329 = vmul.f32 %v3279, %v382
        %v3330 = vmul.f32 %v3275, %v387
        %v3331 = vmul.f32 %v3279, %v387
        %v3332 = vmul.f32 %v3275, %v392
        %v3333 = vmul.f32 %v3279, %v392
        %v3334 = vmul.f32 %v3275, %v397
        %v3335 = vmul.f32 %v3279, %v397
        %v3336 = vmul.f32 %v3275, %v402
        %v3337 = vmul.f32 %v3279, %v402
        %v3338 = vmul.f32 %v3275, %v407
        %v3339 = vmul.f32 %v3279, %v407
        %v3340 = vmul.f32 %v3275, %v412
        %v3341 = vmul.f32 %v3279, %v412
        %v3342 = vmul.f32 %v3275, %v417
        %v3343 = vmul.f32 %v3279, %v417
        %v3344 = vadd.f32 %v3280, %v454
        %v3345 = vadd.f32 %v3281, %v454
        %v3346 = vadd.f32 %v3282, %v459
        %v3347 = vadd.f32 %v3283, %v459
        %v3348 = vadd.f32 %v3284, %v464
        %v3349 = vadd.f32 %v3285, %v464
        %v3350 = vadd.f32 %v3286, %v469
        %v3351 = vadd.f32 %v3287, %v469
        %v3352 = vadd.f32 %v3288, %v474
        %v3353 = vadd.f32 %v3289, %v474
        %v3354 = vadd.f32 %v3290, %v479
        %v3355 = vadd.f32 %v3291, %v479
        %v3356 = vadd.f32 %v3292, %v484
        %v3357 = vadd.f32 %v3293, %v484
        %v3358 = vadd.f32 %v3294, %v489
        %v3359 = vadd.f32 %v3295, %v489
        %v3360 = vadd.f32 %v3296, %v494
        %v3361 = vadd.f32 %v3297, %v494
        %v3362 = vadd.f32 %v3298, %v499
        %v3363 = vadd.f32 %v3299, %v499
        %v3364 = vadd.f32 %v3300, %v504
        %v3365 = vadd.f32 %v3301, %v504
        %v3366 = vadd.f32 %v3302, %v509
        %v3367 = vadd.f32 %v3303, %v509
        %v3368 = vadd.f32 %v3304, %v514
        %v3369 = vadd.f32 %v3305, %v514
        %v3370 = vadd.f32 %v3306, %v519
        %v3371 = vadd.f32 %v3307, %v519
        %v3372 = vadd.f32 %v3308, %v524
        %v3373 = vadd.f32 %v3309, %v524
        %v3374 = vadd.f32 %v3310, %v529
        %v3375 = vadd.f32 %v3311, %v529
        %v3376 = vadd.f32 %v3312, %v534
        %v3377 = vadd.f32 %v3313, %v534
        %v3378 = vadd.f32 %v3314, %v539
        %v3379 = vadd.f32 %v3315, %v539
        %v3380 = vadd.f32 %v3316, %v544
        %v3381 = vadd.f32 %v3317, %v544
        %v3382 = vadd.f32 %v3318, %v549
        %v3383 = vadd.f32 %v3319, %v549
        %v3384 = vadd.f32 %v3320, %v554
        %v3385 = vadd.f32 %v3321, %v554
        %v3386 = vadd.f32 %v3322, %v559
        %v3387 = vadd.f32 %v3323, %v559
        %v3388 = vadd.f32 %v3324, %v564
        %v3389 = vadd.f32 %v3325, %v564
        %v3390 = vadd.f32 %v3326, %v569
        %v3391 = vadd.f32 %v3327, %v569
        %v3392 = vadd.f32 %v3328, %v574
        %v3393 = vadd.f32 %v3329, %v574
        %v3394 = vadd.f32 %v3330, %v579
        %v3395 = vadd.f32 %v3331, %v579
        %v3396 = vadd.f32 %v3332, %v584
        %v3397 = vadd.f32 %v3333, %v584
        %v3398 = vadd.f32 %v3334, %v589
        %v3399 = vadd.f32 %v3335, %v589
        %v3400 = vadd.f32 %v3336, %v594
        %v3401 = vadd.f32 %v3337, %v594
        %v3402 = vadd.f32 %v3338, %v599
        %v3403 = vadd.f32 %v3339, %v599
        %v3404 = vadd.f32 %v3340, %v604
        %v3405 = vadd.f32 %v3341, %v604
        %v3406 = vadd.f32 %v3342, %v609
        %v3407 = vadd.f32 %v3343, %v609
        %vm3408 = vcmp.gt.f32.partialorder %v3344, 0.0
        %vm3409 = vcmp.gt.f32.partialorder %v3345, 0.0
        %vm3410 = vcmp.gt.f32.partialorder %v3346, 0.0
        %vm3411 = vcmp.gt.f32.partialorder %v3347, 0.0
        %vm3412 = vcmp.gt.f32.partialorder %v3348, 0.0
        %vm3413 = vcmp.gt.f32.partialorder %v3349, 0.0
        %vm3414 = vcmp.gt.f32.partialorder %v3350, 0.0
        %vm3415 = vcmp.gt.f32.partialorder %v3351, 0.0
        %vm3416 = vcmp.gt.f32.partialorder %v3352, 0.0
        %vm3417 = vcmp.gt.f32.partialorder %v3353, 0.0
        %vm3418 = vcmp.gt.f32.partialorder %v3354, 0.0
        %vm3419 = vcmp.gt.f32.partialorder %v3355, 0.0
        %vm3420 = vcmp.gt.f32.partialorder %v3356, 0.0
        %vm3421 = vcmp.gt.f32.partialorder %v3357, 0.0
        %vm3422 = vcmp.gt.f32.partialorder %v3358, 0.0
        %vm3423 = vcmp.gt.f32.partialorder %v3359, 0.0
        %vm3424 = vcmp.gt.f32.partialorder %v3360, 0.0
        %vm3425 = vcmp.gt.f32.partialorder %v3361, 0.0
        %vm3426 = vcmp.gt.f32.partialorder %v3362, 0.0
        %vm3427 = vcmp.gt.f32.partialorder %v3363, 0.0
        %vm3428 = vcmp.gt.f32.partialorder %v3364, 0.0
        %vm3429 = vcmp.gt.f32.partialorder %v3365, 0.0
        %vm3430 = vcmp.gt.f32.partialorder %v3366, 0.0
        %vm3431 = vcmp.gt.f32.partialorder %v3367, 0.0
        %vm3432 = vcmp.gt.f32.partialorder %v3368, 0.0
        %vm3433 = vcmp.gt.f32.partialorder %v3369, 0.0
        %vm3434 = vcmp.gt.f32.partialorder %v3370, 0.0
        %vm3435 = vcmp.gt.f32.partialorder %v3371, 0.0
        %vm3436 = vcmp.gt.f32.partialorder %v3372, 0.0
        %vm3437 = vcmp.gt.f32.partialorder %v3373, 0.0
        %vm3438 = vcmp.gt.f32.partialorder %v3374, 0.0
        %vm3439 = vcmp.gt.f32.partialorder %v3375, 0.0
        %vm3440 = vcmp.gt.f32.partialorder %v3376, 0.0
        %vm3441 = vcmp.gt.f32.partialorder %v3377, 0.0
        %vm3442 = vcmp.gt.f32.partialorder %v3378, 0.0
        %vm3443 = vcmp.gt.f32.partialorder %v3379, 0.0
        %vm3444 = vcmp.gt.f32.partialorder %v3380, 0.0
        %vm3445 = vcmp.gt.f32.partialorder %v3381, 0.0
        %vm3446 = vcmp.gt.f32.partialorder %v3382, 0.0
        %vm3447 = vcmp.gt.f32.partialorder %v3383, 0.0
        %vm3448 = vcmp.gt.f32.partialorder %v3384, 0.0
        %vm3449 = vcmp.gt.f32.partialorder %v3385, 0.0
        %vm3450 = vcmp.gt.f32.partialorder %v3386, 0.0
        %vm3451 = vcmp.gt.f32.partialorder %v3387, 0.0
        %vm3452 = vcmp.gt.f32.partialorder %v3388, 0.0
        %vm3453 = vcmp.gt.f32.partialorder %v3389, 0.0
        %vm3454 = vcmp.gt.f32.partialorder %v3390, 0.0
        %vm3455 = vcmp.gt.f32.partialorder %v3391, 0.0
        %vm3456 = vcmp.gt.f32.partialorder %v3392, 0.0
        %vm3457 = vcmp.gt.f32.partialorder %v3393, 0.0
        %vm3458 = vcmp.gt.f32.partialorder %v3394, 0.0
        %vm3459 = vcmp.gt.f32.partialorder %v3395, 0.0
        %vm3460 = vcmp.gt.f32.partialorder %v3396, 0.0
        %vm3461 = vcmp.gt.f32.partialorder %v3397, 0.0
        %vm3462 = vcmp.gt.f32.partialorder %v3398, 0.0
        %vm3463 = vcmp.gt.f32.partialorder %v3399, 0.0
        %vm3464 = vcmp.gt.f32.partialorder %v3400, 0.0
        %vm3465 = vcmp.gt.f32.partialorder %v3401, 0.0
        %vm3466 = vcmp.gt.f32.partialorder %v3402, 0.0
        %vm3467 = vcmp.gt.f32.partialorder %v3403, 0.0
        %vm3468 = vcmp.gt.f32.partialorder %v3404, 0.0
        %vm3469 = vcmp.gt.f32.partialorder %v3405, 0.0
        %vm3470 = vcmp.gt.f32.partialorder %v3406, 0.0
        %vm3471 = vcmp.gt.f32.partialorder %v3407, 0.0
        %v3472 = vmul.f32 %v3344, 0.01
        %v3473 = vmul.f32 %v3345, 0.01
        %v3474 = vmul.f32 %v3346, 0.01
        %v3475 = vmul.f32 %v3347, 0.01
        %v3476 = vmul.f32 %v3348, 0.01
        %v3477 = vmul.f32 %v3349, 0.01
        %v3478 = vmul.f32 %v3350, 0.01
        %v3479 = vmul.f32 %v3351, 0.01
        %v3480 = vmul.f32 %v3352, 0.01
        %v3481 = vmul.f32 %v3353, 0.01
        %v3482 = vmul.f32 %v3354, 0.01
        %v3483 = vmul.f32 %v3355, 0.01
        %v3484 = vmul.f32 %v3356, 0.01
        %v3485 = vmul.f32 %v3357, 0.01
        %v3486 = vmul.f32 %v3358, 0.01
        %v3487 = vmul.f32 %v3359, 0.01
        %v3488 = vmul.f32 %v3360, 0.01
        %v3489 = vmul.f32 %v3361, 0.01
        %v3490 = vmul.f32 %v3362, 0.01
        %v3491 = vmul.f32 %v3363, 0.01
        %v3492 = vmul.f32 %v3364, 0.01
        %v3493 = vmul.f32 %v3365, 0.01
        %v3494 = vmul.f32 %v3366, 0.01
        %v3495 = vmul.f32 %v3367, 0.01
        %v3496 = vmul.f32 %v3368, 0.01
        %v3497 = vmul.f32 %v3369, 0.01
        %v3498 = vmul.f32 %v3370, 0.01
        %v3499 = vmul.f32 %v3371, 0.01
        %v3500 = vmul.f32 %v3372, 0.01
        %v3501 = vmul.f32 %v3373, 0.01
        %v3502 = vmul.f32 %v3374, 0.01
        %v3503 = vmul.f32 %v3375, 0.01
        %v3504 = vmul.f32 %v3376, 0.01
        %v3505 = vmul.f32 %v3377, 0.01
        %v3506 = vmul.f32 %v3378, 0.01
        %v3507 = vmul.f32 %v3379, 0.01
        %v3508 = vmul.f32 %v3380, 0.01
        %v3509 = vmul.f32 %v3381, 0.01
        %v3510 = vmul.f32 %v3382, 0.01
        %v3511 = vmul.f32 %v3383, 0.01
        %v3512 = vmul.f32 %v3384, 0.01
        %v3513 = vmul.f32 %v3385, 0.01
        %v3514 = vmul.f32 %v3386, 0.01
        %v3515 = vmul.f32 %v3387, 0.01
        %v3516 = vmul.f32 %v3388, 0.01
        %v3517 = vmul.f32 %v3389, 0.01
        %v3518 = vmul.f32 %v3390, 0.01
        %v3519 = vmul.f32 %v3391, 0.01
        %v3520 = vmul.f32 %v3392, 0.01
        %v3521 = vmul.f32 %v3393, 0.01
        %v3522 = vmul.f32 %v3394, 0.01
        %v3523 = vmul.f32 %v3395, 0.01
        %v3524 = vmul.f32 %v3396, 0.01
        %v3525 = vmul.f32 %v3397, 0.01
        %v3526 = vmul.f32 %v3398, 0.01
        %v3527 = vmul.f32 %v3399, 0.01
        %v3528 = vmul.f32 %v3400, 0.01
        %v3529 = vmul.f32 %v3401, 0.01
        %v3530 = vmul.f32 %v3402, 0.01
        %v3531 = vmul.f32 %v3403, 0.01
        %v3532 = vmul.f32 %v3404, 0.01
        %v3533 = vmul.f32 %v3405, 0.01
        %v3534 = vmul.f32 %v3406, 0.01
        %v3535 = vmul.f32 %v3407, 0.01
        %v3536 = vsel %vm3408, %v3344, %v3472
        %v3537 = vsel %vm3409, %v3345, %v3473
        %v3538 = vsel %vm3410, %v3346, %v3474
        %v3539 = vsel %vm3411, %v3347, %v3475
        %v3540 = vsel %vm3412, %v3348, %v3476
        %v3541 = vsel %vm3413, %v3349, %v3477
        %v3542 = vsel %vm3414, %v3350, %v3478
        %v3543 = vsel %vm3415, %v3351, %v3479
        %v3544 = vsel %vm3416, %v3352, %v3480
        %v3545 = vsel %vm3417, %v3353, %v3481
        %v3546 = vsel %vm3418, %v3354, %v3482
        %v3547 = vsel %vm3419, %v3355, %v3483
        %v3548 = vsel %vm3420, %v3356, %v3484
        %v3549 = vsel %vm3421, %v3357, %v3485
        %v3550 = vsel %vm3422, %v3358, %v3486
        %v3551 = vsel %vm3423, %v3359, %v3487
        %v3552 = vsel %vm3424, %v3360, %v3488
        %v3553 = vsel %vm3425, %v3361, %v3489
        %v3554 = vsel %vm3426, %v3362, %v3490
        %v3555 = vsel %vm3427, %v3363, %v3491
        %v3556 = vsel %vm3428, %v3364, %v3492
        %v3557 = vsel %vm3429, %v3365, %v3493
        %v3558 = vsel %vm3430, %v3366, %v3494
        %v3559 = vsel %vm3431, %v3367, %v3495
        %v3560 = vsel %vm3432, %v3368, %v3496
        %v3561 = vsel %vm3433, %v3369, %v3497
        %v3562 = vsel %vm3434, %v3370, %v3498
        %v3563 = vsel %vm3435, %v3371, %v3499
        %v3564 = vsel %vm3436, %v3372, %v3500
        %v3565 = vsel %vm3437, %v3373, %v3501
        %v3566 = vsel %vm3438, %v3374, %v3502
        %v3567 = vsel %vm3439, %v3375, %v3503
        %v3568 = vsel %vm3440, %v3376, %v3504
        %v3569 = vsel %vm3441, %v3377, %v3505
        %v3570 = vsel %vm3442, %v3378, %v3506
        %v3571 = vsel %vm3443, %v3379, %v3507
        %v3572 = vsel %vm3444, %v3380, %v3508
        %v3573 = vsel %vm3445, %v3381, %v3509
        %v3574 = vsel %vm3446, %v3382, %v3510
        %v3575 = vsel %vm3447, %v3383, %v3511
        %v3576 = vsel %vm3448, %v3384, %v3512
        %v3577 = vsel %vm3449, %v3385, %v3513
        %v3578 = vsel %vm3450, %v3386, %v3514
        %v3579 = vsel %vm3451, %v3387, %v3515
        %v3580 = vsel %vm3452, %v3388, %v3516
        %v3581 = vsel %vm3453, %v3389, %v3517
        %v3582 = vsel %vm3454, %v3390, %v3518
        %v3583 = vsel %vm3455, %v3391, %v3519
        %v3584 = vsel %vm3456, %v3392, %v3520
        %v3585 = vsel %vm3457, %v3393, %v3521
        %v3586 = vsel %vm3458, %v3394, %v3522
        %v3587 = vsel %vm3459, %v3395, %v3523
        %v3588 = vsel %vm3460, %v3396, %v3524
        %v3589 = vsel %vm3461, %v3397, %v3525
        %v3590 = vsel %vm3462, %v3398, %v3526
        %v3591 = vsel %vm3463, %v3399, %v3527
        %v3592 = vsel %vm3464, %v3400, %v3528
        %v3593 = vsel %vm3465, %v3401, %v3529
        %v3594 = vsel %vm3466, %v3402, %v3530
        %v3595 = vsel %vm3467, %v3403, %v3531
        %v3596 = vsel %vm3468, %v3404, %v3532
        %v3597 = vsel %vm3469, %v3405, %v3533
        %v3598 = vsel %vm3470, %v3406, %v3534
        %v3599 = vsel %vm3471, %v3407, %v3535
        %v3600 = vmul.f32 %v3536, %v646
        %v3601 = vmul.f32 %v3537, %v646
        %v3602 = vmul.f32 %v3538, %v651
        %v3603 = vmul.f32 %v3539, %v651
        %v3604 = vmul.f32 %v3540, %v656
        %v3605 = vmul.f32 %v3541, %v656
        %v3606 = vmul.f32 %v3542, %v661
        %v3607 = vmul.f32 %v3543, %v661
        %v3608 = vmul.f32 %v3544, %v666
        %v3609 = vmul.f32 %v3545, %v666
        %v3610 = vmul.f32 %v3546, %v671
        %v3611 = vmul.f32 %v3547, %v671
        %v3612 = vmul.f32 %v3548, %v676
        %v3613 = vmul.f32 %v3549, %v676
        %v3614 = vmul.f32 %v3550, %v681
        %v3615 = vmul.f32 %v3551, %v681
        %v3616 = vmul.f32 %v3552, %v686
        %v3617 = vmul.f32 %v3553, %v686
        %v3618 = vmul.f32 %v3554, %v691
        %v3619 = vmul.f32 %v3555, %v691
        %v3620 = vmul.f32 %v3556, %v696
        %v3621 = vmul.f32 %v3557, %v696
        %v3622 = vmul.f32 %v3558, %v701
        %v3623 = vmul.f32 %v3559, %v701
        %v3624 = vmul.f32 %v3560, %v706
        %v3625 = vmul.f32 %v3561, %v706
        %v3626 = vmul.f32 %v3562, %v711
        %v3627 = vmul.f32 %v3563, %v711
        %v3628 = vmul.f32 %v3564, %v716
        %v3629 = vmul.f32 %v3565, %v716
        %v3630 = vmul.f32 %v3566, %v721
        %v3631 = vmul.f32 %v3567, %v721
        %v3632 = vmul.f32 %v3568, %v726
        %v3633 = vmul.f32 %v3569, %v726
        %v3634 = vmul.f32 %v3570, %v731
        %v3635 = vmul.f32 %v3571, %v731
        %v3636 = vmul.f32 %v3572, %v736
        %v3637 = vmul.f32 %v3573, %v736
        %v3638 = vmul.f32 %v3574, %v741
        %v3639 = vmul.f32 %v3575, %v741
        %v3640 = vmul.f32 %v3576, %v746
        %v3641 = vmul.f32 %v3577, %v746
        %v3642 = vmul.f32 %v3578, %v751
        %v3643 = vmul.f32 %v3579, %v751
        %v3644 = vmul.f32 %v3580, %v756
        %v3645 = vmul.f32 %v3581, %v756
        %v3646 = vmul.f32 %v3582, %v761
        %v3647 = vmul.f32 %v3583, %v761
        %v3648 = vmul.f32 %v3584, %v766
        %v3649 = vmul.f32 %v3585, %v766
        %v3650 = vmul.f32 %v3586, %v771
        %v3651 = vmul.f32 %v3587, %v771
        %v3652 = vmul.f32 %v3588, %v776
        %v3653 = vmul.f32 %v3589, %v776
        %v3654 = vmul.f32 %v3590, %v781
        %v3655 = vmul.f32 %v3591, %v781
        %v3656 = vmul.f32 %v3592, %v786
        %v3657 = vmul.f32 %v3593, %v786
        %v3658 = vmul.f32 %v3594, %v791
        %v3659 = vmul.f32 %v3595, %v791
        %v3660 = vmul.f32 %v3596, %v796
        %v3661 = vmul.f32 %v3597, %v796
        %v3662 = vmul.f32 %v3598, %v801
        %v3663 = vmul.f32 %v3599, %v801
        %v3664 = vadd.f32 %v3600, %v3602
        %v3665 = vadd.f32 %v3664, %v3604
        %v3666 = vadd.f32 %v3665, %v3606
        %v3667 = vadd.f32 %v3666, %v3608
        %v3668 = vadd.f32 %v3667, %v3610
        %v3669 = vadd.f32 %v3668, %v3612
        %v3670 = vadd.f32 %v3669, %v3614
        %v3671 = vadd.f32 %v3670, %v3616
        %v3672 = vadd.f32 %v3671, %v3618
        %v3673 = vadd.f32 %v3672, %v3620
        %v3674 = vadd.f32 %v3673, %v3622
        %v3675 = vadd.f32 %v3674, %v3624
        %v3676 = vadd.f32 %v3675, %v3626
        %v3677 = vadd.f32 %v3676, %v3628
        %v3678 = vadd.f32 %v3677, %v3630
        %v3679 = vadd.f32 %v3678, %v3632
        %v3680 = vadd.f32 %v3679, %v3634
        %v3681 = vadd.f32 %v3680, %v3636
        %v3682 = vadd.f32 %v3681, %v3638
        %v3683 = vadd.f32 %v3682, %v3640
        %v3684 = vadd.f32 %v3683, %v3642
        %v3685 = vadd.f32 %v3684, %v3644
        %v3686 = vadd.f32 %v3685, %v3646
        %v3687 = vadd.f32 %v3686, %v3648
        %v3688 = vadd.f32 %v3687, %v3650
        %v3689 = vadd.f32 %v3688, %v3652
        %v3690 = vadd.f32 %v3689, %v3654
        %v3691 = vadd.f32 %v3690, %v3656
        %v3692 = vadd.f32 %v3691, %v3658
        %v3693 = vadd.f32 %v3692, %v3660
        %v3694 = vadd.f32 %v3693, %v3662
        %v3695 = vrot.slane %v3694, 4
        %v3696 = vadd.f32 %v3694, %v3695
        %v3697 = vrot.slane %v3696, 2
        %v3698 = vadd.f32 %v3696, %v3697
        %v3699 = vrot.slane %v3698, 1
        %v3700 = vadd.f32 %v3698, %v3699
        %v3701 = vadd.f32 %v3601, %v3603
        %v3702 = vadd.f32 %v3701, %v3605
        %v3703 = vadd.f32 %v3702, %v3607
        %v3704 = vadd.f32 %v3703, %v3609
        %v3705 = vadd.f32 %v3704, %v3611
        %v3706 = vadd.f32 %v3705, %v3613
        %v3707 = vadd.f32 %v3706, %v3615
        %v3708 = vadd.f32 %v3707, %v3617
        %v3709 = vadd.f32 %v3708, %v3619
        %v3710 = vadd.f32 %v3709, %v3621
        %v3711 = vadd.f32 %v3710, %v3623
        %v3712 = vadd.f32 %v3711, %v3625
        %v3713 = vadd.f32 %v3712, %v3627
        %v3714 = vadd.f32 %v3713, %v3629
        %v3715 = vadd.f32 %v3714, %v3631
        %v3716 = vadd.f32 %v3715, %v3633
        %v3717 = vadd.f32 %v3716, %v3635
        %v3718 = vadd.f32 %v3717, %v3637
        %v3719 = vadd.f32 %v3718, %v3639
        %v3720 = vadd.f32 %v3719, %v3641
        %v3721 = vadd.f32 %v3720, %v3643
        %v3722 = vadd.f32 %v3721, %v3645
        %v3723 = vadd.f32 %v3722, %v3647
        %v3724 = vadd.f32 %v3723, %v3649
        %v3725 = vadd.f32 %v3724, %v3651
        %v3726 = vadd.f32 %v3725, %v3653
        %v3727 = vadd.f32 %v3726, %v3655
        %v3728 = vadd.f32 %v3727, %v3657
        %v3729 = vadd.f32 %v3728, %v3659
        %v3730 = vadd.f32 %v3729, %v3661
        %v3731 = vadd.f32 %v3730, %v3663
        %v3732 = vrot.slane %v3731, 4
        %v3733 = vadd.f32 %v3731, %v3732
        %v3734 = vrot.slane %v3733, 2
        %v3735 = vadd.f32 %v3733, %v3734
        %v3736 = vrot.slane %v3735, 1
        %v3737 = vadd.f32 %v3735, %v3736
        %v3738 = vadd.f32 %v3700, %v1269
        %v3739 = vadd.f32 %v3737, %v1269
        %v3740 = vmul.f32 %v3738, 2.0
        %v3741 = vmul.f32 %v3739, 2.0
        %v3742 = vtanh.pop %v3740
        %v3743 = vtanh.pop %v3741
        %v3746 = vcombine.low %v3742, %v3743
        %v3748 = vunpack.c.l.s4 1966171168
        %v3749 = vunpack.c.0.s8 %v3748
        %v3750 = vlaneseq
        %v3751 = vshrl.u32 %v3750, 7
        %v3752 = vsub.s32 %v3749, %v3751
        %v3753 = vrot.slane %v3746, %v3752
        %v3755 = vunpack.c.l.s4 1966171168
        %v3756 = vunpack.c.0.s8 %v3755
        %v3757 = vlaneseq
        %v3758 = vshrl.u32 %v3757, 7
        %v3759 = vsub.s32 %v3756, %v3758
        %v3760 = vrot.slane %v3753, %v3759
        %s3762 = scalar_lea.vmem %s218, 5 [#allocation3]
        %3763 = vst.msk [vmem:[%s3762] ss:$8 sm:$0x3] %vm1297, %v3760
        %3764 = vst.msk [vmem:[%s3762] ss:$8 sm:$0x0] %vm1297, %v3760
        %v3765 = vlaneseq
        %v3766 = vshrl.u32 %v3765, 7
        %v3767 = vsub.s32 6, %v3766
        %v3768 = vrot.slane %v224, %v3767
        %v3769 = vlaneseq
        %v3770 = vshrl.u32 %v3769, 7
        %v3771 = vsub.s32 6, %v3770
        %v3772 = vrot.slane %v225, %v3771
        %v3773 = vmul.f32 %v3768, %v262
        %v3774 = vmul.f32 %v3772, %v262
        %v3775 = vmul.f32 %v3768, %v267
        %v3776 = vmul.f32 %v3772, %v267
        %v3777 = vmul.f32 %v3768, %v272
        %v3778 = vmul.f32 %v3772, %v272
        %v3779 = vmul.f32 %v3768, %v277
        %v3780 = vmul.f32 %v3772, %v277
        %v3781 = vmul.f32 %v3768, %v282
        %v3782 = vmul.f32 %v3772, %v282
        %v3783 = vmul.f32 %v3768, %v287
        %v3784 = vmul.f32 %v3772, %v287
        %v3785 = vmul.f32 %v3768, %v292
        %v3786 = vmul.f32 %v3772, %v292
        %v3787 = vmul.f32 %v3768, %v297
        %v3788 = vmul.f32 %v3772, %v297
        %v3789 = vmul.f32 %v3768, %v302
        %v3790 = vmul.f32 %v3772, %v302
        %v3791 = vmul.f32 %v3768, %v307
        %v3792 = vmul.f32 %v3772, %v307
        %v3793 = vmul.f32 %v3768, %v312
        %v3794 = vmul.f32 %v3772, %v312
        %v3795 = vmul.f32 %v3768, %v317
        %v3796 = vmul.f32 %v3772, %v317
        %v3797 = vmul.f32 %v3768, %v322
        %v3798 = vmul.f32 %v3772, %v322
        %v3799 = vmul.f32 %v3768, %v327
        %v3800 = vmul.f32 %v3772, %v327
        %v3801 = vmul.f32 %v3768, %v332
        %v3802 = vmul.f32 %v3772, %v332
        %v3803 = vmul.f32 %v3768, %v337
        %v3804 = vmul.f32 %v3772, %v337
        %v3805 = vmul.f32 %v3768, %v342
        %v3806 = vmul.f32 %v3772, %v342
        %v3807 = vmul.f32 %v3768, %v347
        %v3808 = vmul.f32 %v3772, %v347
        %v3809 = vmul.f32 %v3768, %v352
        %v3810 = vmul.f32 %v3772, %v352
        %v3811 = vmul.f32 %v3768, %v357
        %v3812 = vmul.f32 %v3772, %v357
        %v3813 = vmul.f32 %v3768, %v362
        %v3814 = vmul.f32 %v3772, %v362
        %v3815 = vmul.f32 %v3768, %v367
        %v3816 = vmul.f32 %v3772, %v367
        %v3817 = vmul.f32 %v3768, %v372
        %v3818 = vmul.f32 %v3772, %v372
        %v3819 = vmul.f32 %v3768, %v377
        %v3820 = vmul.f32 %v3772, %v377
        %v3821 = vmul.f32 %v3768, %v382
        %v3822 = vmul.f32 %v3772, %v382
        %v3823 = vmul.f32 %v3768, %v387
        %v3824 = vmul.f32 %v3772, %v387
        %v3825 = vmul.f32 %v3768, %v392
        %v3826 = vmul.f32 %v3772, %v392
        %v3827 = vmul.f32 %v3768, %v397
        %v3828 = vmul.f32 %v3772, %v397
        %v3829 = vmul.f32 %v3768, %v402
        %v3830 = vmul.f32 %v3772, %v402
        %v3831 = vmul.f32 %v3768, %v407
        %v3832 = vmul.f32 %v3772, %v407
        %v3833 = vmul.f32 %v3768, %v412
        %v3834 = vmul.f32 %v3772, %v412
        %v3835 = vmul.f32 %v3768, %v417
        %v3836 = vmul.f32 %v3772, %v417
        %v3837 = vadd.f32 %v3773, %v454
        %v3838 = vadd.f32 %v3774, %v454
        %v3839 = vadd.f32 %v3775, %v459
        %v3840 = vadd.f32 %v3776, %v459
        %v3841 = vadd.f32 %v3777, %v464
        %v3842 = vadd.f32 %v3778, %v464
        %v3843 = vadd.f32 %v3779, %v469
        %v3844 = vadd.f32 %v3780, %v469
        %v3845 = vadd.f32 %v3781, %v474
        %v3846 = vadd.f32 %v3782, %v474
        %v3847 = vadd.f32 %v3783, %v479
        %v3848 = vadd.f32 %v3784, %v479
        %v3849 = vadd.f32 %v3785, %v484
        %v3850 = vadd.f32 %v3786, %v484
        %v3851 = vadd.f32 %v3787, %v489
        %v3852 = vadd.f32 %v3788, %v489
        %v3853 = vadd.f32 %v3789, %v494
        %v3854 = vadd.f32 %v3790, %v494
        %v3855 = vadd.f32 %v3791, %v499
        %v3856 = vadd.f32 %v3792, %v499
        %v3857 = vadd.f32 %v3793, %v504
        %v3858 = vadd.f32 %v3794, %v504
        %v3859 = vadd.f32 %v3795, %v509
        %v3860 = vadd.f32 %v3796, %v509
        %v3861 = vadd.f32 %v3797, %v514
        %v3862 = vadd.f32 %v3798, %v514
        %v3863 = vadd.f32 %v3799, %v519
        %v3864 = vadd.f32 %v3800, %v519
        %v3865 = vadd.f32 %v3801, %v524
        %v3866 = vadd.f32 %v3802, %v524
        %v3867 = vadd.f32 %v3803, %v529
        %v3868 = vadd.f32 %v3804, %v529
        %v3869 = vadd.f32 %v3805, %v534
        %v3870 = vadd.f32 %v3806, %v534
        %v3871 = vadd.f32 %v3807, %v539
        %v3872 = vadd.f32 %v3808, %v539
        %v3873 = vadd.f32 %v3809, %v544
        %v3874 = vadd.f32 %v3810, %v544
        %v3875 = vadd.f32 %v3811, %v549
        %v3876 = vadd.f32 %v3812, %v549
        %v3877 = vadd.f32 %v3813, %v554
        %v3878 = vadd.f32 %v3814, %v554
        %v3879 = vadd.f32 %v3815, %v559
        %v3880 = vadd.f32 %v3816, %v559
        %v3881 = vadd.f32 %v3817, %v564
        %v3882 = vadd.f32 %v3818, %v564
        %v3883 = vadd.f32 %v3819, %v569
        %v3884 = vadd.f32 %v3820, %v569
        %v3885 = vadd.f32 %v3821, %v574
        %v3886 = vadd.f32 %v3822, %v574
        %v3887 = vadd.f32 %v3823, %v579
        %v3888 = vadd.f32 %v3824, %v579
        %v3889 = vadd.f32 %v3825, %v584
        %v3890 = vadd.f32 %v3826, %v584
        %v3891 = vadd.f32 %v3827, %v589
        %v3892 = vadd.f32 %v3828, %v589
        %v3893 = vadd.f32 %v3829, %v594
        %v3894 = vadd.f32 %v3830, %v594
        %v3895 = vadd.f32 %v3831, %v599
        %v3896 = vadd.f32 %v3832, %v599
        %v3897 = vadd.f32 %v3833, %v604
        %v3898 = vadd.f32 %v3834, %v604
        %v3899 = vadd.f32 %v3835, %v609
        %v3900 = vadd.f32 %v3836, %v609
        %vm3901 = vcmp.gt.f32.partialorder %v3837, 0.0
        %vm3902 = vcmp.gt.f32.partialorder %v3838, 0.0
        %vm3903 = vcmp.gt.f32.partialorder %v3839, 0.0
        %vm3904 = vcmp.gt.f32.partialorder %v3840, 0.0
        %vm3905 = vcmp.gt.f32.partialorder %v3841, 0.0
        %vm3906 = vcmp.gt.f32.partialorder %v3842, 0.0
        %vm3907 = vcmp.gt.f32.partialorder %v3843, 0.0
        %vm3908 = vcmp.gt.f32.partialorder %v3844, 0.0
        %vm3909 = vcmp.gt.f32.partialorder %v3845, 0.0
        %vm3910 = vcmp.gt.f32.partialorder %v3846, 0.0
        %vm3911 = vcmp.gt.f32.partialorder %v3847, 0.0
        %vm3912 = vcmp.gt.f32.partialorder %v3848, 0.0
        %vm3913 = vcmp.gt.f32.partialorder %v3849, 0.0
        %vm3914 = vcmp.gt.f32.partialorder %v3850, 0.0
        %vm3915 = vcmp.gt.f32.partialorder %v3851, 0.0
        %vm3916 = vcmp.gt.f32.partialorder %v3852, 0.0
        %vm3917 = vcmp.gt.f32.partialorder %v3853, 0.0
        %vm3918 = vcmp.gt.f32.partialorder %v3854, 0.0
        %vm3919 = vcmp.gt.f32.partialorder %v3855, 0.0
        %vm3920 = vcmp.gt.f32.partialorder %v3856, 0.0
        %vm3921 = vcmp.gt.f32.partialorder %v3857, 0.0
        %vm3922 = vcmp.gt.f32.partialorder %v3858, 0.0
        %vm3923 = vcmp.gt.f32.partialorder %v3859, 0.0
        %vm3924 = vcmp.gt.f32.partialorder %v3860, 0.0
        %vm3925 = vcmp.gt.f32.partialorder %v3861, 0.0
        %vm3926 = vcmp.gt.f32.partialorder %v3862, 0.0
        %vm3927 = vcmp.gt.f32.partialorder %v3863, 0.0
        %vm3928 = vcmp.gt.f32.partialorder %v3864, 0.0
        %vm3929 = vcmp.gt.f32.partialorder %v3865, 0.0
        %vm3930 = vcmp.gt.f32.partialorder %v3866, 0.0
        %vm3931 = vcmp.gt.f32.partialorder %v3867, 0.0
        %vm3932 = vcmp.gt.f32.partialorder %v3868, 0.0
        %vm3933 = vcmp.gt.f32.partialorder %v3869, 0.0
        %vm3934 = vcmp.gt.f32.partialorder %v3870, 0.0
        %vm3935 = vcmp.gt.f32.partialorder %v3871, 0.0
        %vm3936 = vcmp.gt.f32.partialorder %v3872, 0.0
        %vm3937 = vcmp.gt.f32.partialorder %v3873, 0.0
        %vm3938 = vcmp.gt.f32.partialorder %v3874, 0.0
        %vm3939 = vcmp.gt.f32.partialorder %v3875, 0.0
        %vm3940 = vcmp.gt.f32.partialorder %v3876, 0.0
        %vm3941 = vcmp.gt.f32.partialorder %v3877, 0.0
        %vm3942 = vcmp.gt.f32.partialorder %v3878, 0.0
        %vm3943 = vcmp.gt.f32.partialorder %v3879, 0.0
        %vm3944 = vcmp.gt.f32.partialorder %v3880, 0.0
        %vm3945 = vcmp.gt.f32.partialorder %v3881, 0.0
        %vm3946 = vcmp.gt.f32.partialorder %v3882, 0.0
        %vm3947 = vcmp.gt.f32.partialorder %v3883, 0.0
        %vm3948 = vcmp.gt.f32.partialorder %v3884, 0.0
        %vm3949 = vcmp.gt.f32.partialorder %v3885, 0.0
        %vm3950 = vcmp.gt.f32.partialorder %v3886, 0.0
        %vm3951 = vcmp.gt.f32.partialorder %v3887, 0.0
        %vm3952 = vcmp.gt.f32.partialorder %v3888, 0.0
        %vm3953 = vcmp.gt.f32.partialorder %v3889, 0.0
        %vm3954 = vcmp.gt.f32.partialorder %v3890, 0.0
        %vm3955 = vcmp.gt.f32.partialorder %v3891, 0.0
        %vm3956 = vcmp.gt.f32.partialorder %v3892, 0.0
        %vm3957 = vcmp.gt.f32.partialorder %v3893, 0.0
        %vm3958 = vcmp.gt.f32.partialorder %v3894, 0.0
        %vm3959 = vcmp.gt.f32.partialorder %v3895, 0.0
        %vm3960 = vcmp.gt.f32.partialorder %v3896, 0.0
        %vm3961 = vcmp.gt.f32.partialorder %v3897, 0.0
        %vm3962 = vcmp.gt.f32.partialorder %v3898, 0.0
        %vm3963 = vcmp.gt.f32.partialorder %v3899, 0.0
        %vm3964 = vcmp.gt.f32.partialorder %v3900, 0.0
        %v3965 = vmul.f32 %v3837, 0.01
        %v3966 = vmul.f32 %v3838, 0.01
        %v3967 = vmul.f32 %v3839, 0.01
        %v3968 = vmul.f32 %v3840, 0.01
        %v3969 = vmul.f32 %v3841, 0.01
        %v3970 = vmul.f32 %v3842, 0.01
        %v3971 = vmul.f32 %v3843, 0.01
        %v3972 = vmul.f32 %v3844, 0.01
        %v3973 = vmul.f32 %v3845, 0.01
        %v3974 = vmul.f32 %v3846, 0.01
        %v3975 = vmul.f32 %v3847, 0.01
        %v3976 = vmul.f32 %v3848, 0.01
        %v3977 = vmul.f32 %v3849, 0.01
        %v3978 = vmul.f32 %v3850, 0.01
        %v3979 = vmul.f32 %v3851, 0.01
        %v3980 = vmul.f32 %v3852, 0.01
        %v3981 = vmul.f32 %v3853, 0.01
        %v3982 = vmul.f32 %v3854, 0.01
        %v3983 = vmul.f32 %v3855, 0.01
        %v3984 = vmul.f32 %v3856, 0.01
        %v3985 = vmul.f32 %v3857, 0.01
        %v3986 = vmul.f32 %v3858, 0.01
        %v3987 = vmul.f32 %v3859, 0.01
        %v3988 = vmul.f32 %v3860, 0.01
        %v3989 = vmul.f32 %v3861, 0.01
        %v3990 = vmul.f32 %v3862, 0.01
        %v3991 = vmul.f32 %v3863, 0.01
        %v3992 = vmul.f32 %v3864, 0.01
        %v3993 = vmul.f32 %v3865, 0.01
        %v3994 = vmul.f32 %v3866, 0.01
        %v3995 = vmul.f32 %v3867, 0.01
        %v3996 = vmul.f32 %v3868, 0.01
        %v3997 = vmul.f32 %v3869, 0.01
        %v3998 = vmul.f32 %v3870, 0.01
        %v3999 = vmul.f32 %v3871, 0.01
        %v4000 = vmul.f32 %v3872, 0.01
        %v4001 = vmul.f32 %v3873, 0.01
        %v4002 = vmul.f32 %v3874, 0.01
        %v4003 = vmul.f32 %v3875, 0.01
        %v4004 = vmul.f32 %v3876, 0.01
        %v4005 = vmul.f32 %v3877, 0.01
        %v4006 = vmul.f32 %v3878, 0.01
        %v4007 = vmul.f32 %v3879, 0.01
        %v4008 = vmul.f32 %v3880, 0.01
        %v4009 = vmul.f32 %v3881, 0.01
        %v4010 = vmul.f32 %v3882, 0.01
        %v4011 = vmul.f32 %v3883, 0.01
        %v4012 = vmul.f32 %v3884, 0.01
        %v4013 = vmul.f32 %v3885, 0.01
        %v4014 = vmul.f32 %v3886, 0.01
        %v4015 = vmul.f32 %v3887, 0.01
        %v4016 = vmul.f32 %v3888, 0.01
        %v4017 = vmul.f32 %v3889, 0.01
        %v4018 = vmul.f32 %v3890, 0.01
        %v4019 = vmul.f32 %v3891, 0.01
        %v4020 = vmul.f32 %v3892, 0.01
        %v4021 = vmul.f32 %v3893, 0.01
        %v4022 = vmul.f32 %v3894, 0.01
        %v4023 = vmul.f32 %v3895, 0.01
        %v4024 = vmul.f32 %v3896, 0.01
        %v4025 = vmul.f32 %v3897, 0.01
        %v4026 = vmul.f32 %v3898, 0.01
        %v4027 = vmul.f32 %v3899, 0.01
        %v4028 = vmul.f32 %v3900, 0.01
        %v4029 = vsel %vm3901, %v3837, %v3965
        %v4030 = vsel %vm3902, %v3838, %v3966
        %v4031 = vsel %vm3903, %v3839, %v3967
        %v4032 = vsel %vm3904, %v3840, %v3968
        %v4033 = vsel %vm3905, %v3841, %v3969
        %v4034 = vsel %vm3906, %v3842, %v3970
        %v4035 = vsel %vm3907, %v3843, %v3971
        %v4036 = vsel %vm3908, %v3844, %v3972
        %v4037 = vsel %vm3909, %v3845, %v3973
        %v4038 = vsel %vm3910, %v3846, %v3974
        %v4039 = vsel %vm3911, %v3847, %v3975
        %v4040 = vsel %vm3912, %v3848, %v3976
        %v4041 = vsel %vm3913, %v3849, %v3977
        %v4042 = vsel %vm3914, %v3850, %v3978
        %v4043 = vsel %vm3915, %v3851, %v3979
        %v4044 = vsel %vm3916, %v3852, %v3980
        %v4045 = vsel %vm3917, %v3853, %v3981
        %v4046 = vsel %vm3918, %v3854, %v3982
        %v4047 = vsel %vm3919, %v3855, %v3983
        %v4048 = vsel %vm3920, %v3856, %v3984
        %v4049 = vsel %vm3921, %v3857, %v3985
        %v4050 = vsel %vm3922, %v3858, %v3986
        %v4051 = vsel %vm3923, %v3859, %v3987
        %v4052 = vsel %vm3924, %v3860, %v3988
        %v4053 = vsel %vm3925, %v3861, %v3989
        %v4054 = vsel %vm3926, %v3862, %v3990
        %v4055 = vsel %vm3927, %v3863, %v3991
        %v4056 = vsel %vm3928, %v3864, %v3992
        %v4057 = vsel %vm3929, %v3865, %v3993
        %v4058 = vsel %vm3930, %v3866, %v3994
        %v4059 = vsel %vm3931, %v3867, %v3995
        %v4060 = vsel %vm3932, %v3868, %v3996
        %v4061 = vsel %vm3933, %v3869, %v3997
        %v4062 = vsel %vm3934, %v3870, %v3998
        %v4063 = vsel %vm3935, %v3871, %v3999
        %v4064 = vsel %vm3936, %v3872, %v4000
        %v4065 = vsel %vm3937, %v3873, %v4001
        %v4066 = vsel %vm3938, %v3874, %v4002
        %v4067 = vsel %vm3939, %v3875, %v4003
        %v4068 = vsel %vm3940, %v3876, %v4004
        %v4069 = vsel %vm3941, %v3877, %v4005
        %v4070 = vsel %vm3942, %v3878, %v4006
        %v4071 = vsel %vm3943, %v3879, %v4007
        %v4072 = vsel %vm3944, %v3880, %v4008
        %v4073 = vsel %vm3945, %v3881, %v4009
        %v4074 = vsel %vm3946, %v3882, %v4010
        %v4075 = vsel %vm3947, %v3883, %v4011
        %v4076 = vsel %vm3948, %v3884, %v4012
        %v4077 = vsel %vm3949, %v3885, %v4013
        %v4078 = vsel %vm3950, %v3886, %v4014
        %v4079 = vsel %vm3951, %v3887, %v4015
        %v4080 = vsel %vm3952, %v3888, %v4016
        %v4081 = vsel %vm3953, %v3889, %v4017
        %v4082 = vsel %vm3954, %v3890, %v4018
        %v4083 = vsel %vm3955, %v3891, %v4019
        %v4084 = vsel %vm3956, %v3892, %v4020
        %v4085 = vsel %vm3957, %v3893, %v4021
        %v4086 = vsel %vm3958, %v3894, %v4022
        %v4087 = vsel %vm3959, %v3895, %v4023
        %v4088 = vsel %vm3960, %v3896, %v4024
        %v4089 = vsel %vm3961, %v3897, %v4025
        %v4090 = vsel %vm3962, %v3898, %v4026
        %v4091 = vsel %vm3963, %v3899, %v4027
        %v4092 = vsel %vm3964, %v3900, %v4028
        %v4093 = vmul.f32 %v4029, %v646
        %v4094 = vmul.f32 %v4030, %v646
        %v4095 = vmul.f32 %v4031, %v651
        %v4096 = vmul.f32 %v4032, %v651
        %v4097 = vmul.f32 %v4033, %v656
        %v4098 = vmul.f32 %v4034, %v656
        %v4099 = vmul.f32 %v4035, %v661
        %v4100 = vmul.f32 %v4036, %v661
        %v4101 = vmul.f32 %v4037, %v666
        %v4102 = vmul.f32 %v4038, %v666
        %v4103 = vmul.f32 %v4039, %v671
        %v4104 = vmul.f32 %v4040, %v671
        %v4105 = vmul.f32 %v4041, %v676
        %v4106 = vmul.f32 %v4042, %v676
        %v4107 = vmul.f32 %v4043, %v681
        %v4108 = vmul.f32 %v4044, %v681
        %v4109 = vmul.f32 %v4045, %v686
        %v4110 = vmul.f32 %v4046, %v686
        %v4111 = vmul.f32 %v4047, %v691
        %v4112 = vmul.f32 %v4048, %v691
        %v4113 = vmul.f32 %v4049, %v696
        %v4114 = vmul.f32 %v4050, %v696
        %v4115 = vmul.f32 %v4051, %v701
        %v4116 = vmul.f32 %v4052, %v701
        %v4117 = vmul.f32 %v4053, %v706
        %v4118 = vmul.f32 %v4054, %v706
        %v4119 = vmul.f32 %v4055, %v711
        %v4120 = vmul.f32 %v4056, %v711
        %v4121 = vmul.f32 %v4057, %v716
        %v4122 = vmul.f32 %v4058, %v716
        %v4123 = vmul.f32 %v4059, %v721
        %v4124 = vmul.f32 %v4060, %v721
        %v4125 = vmul.f32 %v4061, %v726
        %v4126 = vmul.f32 %v4062, %v726
        %v4127 = vmul.f32 %v4063, %v731
        %v4128 = vmul.f32 %v4064, %v731
        %v4129 = vmul.f32 %v4065, %v736
        %v4130 = vmul.f32 %v4066, %v736
        %v4131 = vmul.f32 %v4067, %v741
        %v4132 = vmul.f32 %v4068, %v741
        %v4133 = vmul.f32 %v4069, %v746
        %v4134 = vmul.f32 %v4070, %v746
        %v4135 = vmul.f32 %v4071, %v751
        %v4136 = vmul.f32 %v4072, %v751
        %v4137 = vmul.f32 %v4073, %v756
        %v4138 = vmul.f32 %v4074, %v756
        %v4139 = vmul.f32 %v4075, %v761
        %v4140 = vmul.f32 %v4076, %v761
        %v4141 = vmul.f32 %v4077, %v766
        %v4142 = vmul.f32 %v4078, %v766
        %v4143 = vmul.f32 %v4079, %v771
        %v4144 = vmul.f32 %v4080, %v771
        %v4145 = vmul.f32 %v4081, %v776
        %v4146 = vmul.f32 %v4082, %v776
        %v4147 = vmul.f32 %v4083, %v781
        %v4148 = vmul.f32 %v4084, %v781
        %v4149 = vmul.f32 %v4085, %v786
        %v4150 = vmul.f32 %v4086, %v786
        %v4151 = vmul.f32 %v4087, %v791
        %v4152 = vmul.f32 %v4088, %v791
        %v4153 = vmul.f32 %v4089, %v796
        %v4154 = vmul.f32 %v4090, %v796
        %v4155 = vmul.f32 %v4091, %v801
        %v4156 = vmul.f32 %v4092, %v801
        %v4157 = vadd.f32 %v4093, %v4095
        %v4158 = vadd.f32 %v4157, %v4097
        %v4159 = vadd.f32 %v4158, %v4099
        %v4160 = vadd.f32 %v4159, %v4101
        %v4161 = vadd.f32 %v4160, %v4103
        %v4162 = vadd.f32 %v4161, %v4105
        %v4163 = vadd.f32 %v4162, %v4107
        %v4164 = vadd.f32 %v4163, %v4109
        %v4165 = vadd.f32 %v4164, %v4111
        %v4166 = vadd.f32 %v4165, %v4113
        %v4167 = vadd.f32 %v4166, %v4115
        %v4168 = vadd.f32 %v4167, %v4117
        %v4169 = vadd.f32 %v4168, %v4119
        %v4170 = vadd.f32 %v4169, %v4121
        %v4171 = vadd.f32 %v4170, %v4123
        %v4172 = vadd.f32 %v4171, %v4125
        %v4173 = vadd.f32 %v4172, %v4127
        %v4174 = vadd.f32 %v4173, %v4129
        %v4175 = vadd.f32 %v4174, %v4131
        %v4176 = vadd.f32 %v4175, %v4133
        %v4177 = vadd.f32 %v4176, %v4135
        %v4178 = vadd.f32 %v4177, %v4137
        %v4179 = vadd.f32 %v4178, %v4139
        %v4180 = vadd.f32 %v4179, %v4141
        %v4181 = vadd.f32 %v4180, %v4143
        %v4182 = vadd.f32 %v4181, %v4145
        %v4183 = vadd.f32 %v4182, %v4147
        %v4184 = vadd.f32 %v4183, %v4149
        %v4185 = vadd.f32 %v4184, %v4151
        %v4186 = vadd.f32 %v4185, %v4153
        %v4187 = vadd.f32 %v4186, %v4155
        %v4188 = vrot.slane %v4187, 4
        %v4189 = vadd.f32 %v4187, %v4188
        %v4190 = vrot.slane %v4189, 2
        %v4191 = vadd.f32 %v4189, %v4190
        %v4192 = vrot.slane %v4191, 1
        %v4193 = vadd.f32 %v4191, %v4192
        %v4194 = vadd.f32 %v4094, %v4096
        %v4195 = vadd.f32 %v4194, %v4098
        %v4196 = vadd.f32 %v4195, %v4100
        %v4197 = vadd.f32 %v4196, %v4102
        %v4198 = vadd.f32 %v4197, %v4104
        %v4199 = vadd.f32 %v4198, %v4106
        %v4200 = vadd.f32 %v4199, %v4108
        %v4201 = vadd.f32 %v4200, %v4110
        %v4202 = vadd.f32 %v4201, %v4112
        %v4203 = vadd.f32 %v4202, %v4114
        %v4204 = vadd.f32 %v4203, %v4116
        %v4205 = vadd.f32 %v4204, %v4118
        %v4206 = vadd.f32 %v4205, %v4120
        %v4207 = vadd.f32 %v4206, %v4122
        %v4208 = vadd.f32 %v4207, %v4124
        %v4209 = vadd.f32 %v4208, %v4126
        %v4210 = vadd.f32 %v4209, %v4128
        %v4211 = vadd.f32 %v4210, %v4130
        %v4212 = vadd.f32 %v4211, %v4132
        %v4213 = vadd.f32 %v4212, %v4134
        %v4214 = vadd.f32 %v4213, %v4136
        %v4215 = vadd.f32 %v4214, %v4138
        %v4216 = vadd.f32 %v4215, %v4140
        %v4217 = vadd.f32 %v4216, %v4142
        %v4218 = vadd.f32 %v4217, %v4144
        %v4219 = vadd.f32 %v4218, %v4146
        %v4220 = vadd.f32 %v4219, %v4148
        %v4221 = vadd.f32 %v4220, %v4150
        %v4222 = vadd.f32 %v4221, %v4152
        %v4223 = vadd.f32 %v4222, %v4154
        %v4224 = vadd.f32 %v4223, %v4156
        %v4225 = vrot.slane %v4224, 4
        %v4226 = vadd.f32 %v4224, %v4225
        %v4227 = vrot.slane %v4226, 2
        %v4228 = vadd.f32 %v4226, %v4227
        %v4229 = vrot.slane %v4228, 1
        %v4230 = vadd.f32 %v4228, %v4229
        %v4231 = vadd.f32 %v4193, %v1269
        %v4232 = vadd.f32 %v4230, %v1269
        %v4233 = vmul.f32 %v4231, 2.0
        %v4234 = vmul.f32 %v4232, 2.0
        %v4235 = vtanh.pop %v4233
        %v4236 = vtanh.pop %v4234
        %v4239 = vcombine.low %v4235, %v4236
        %v4241 = vunpack.c.l.s4 1966171168
        %v4242 = vunpack.c.0.s8 %v4241
        %v4243 = vlaneseq
        %v4244 = vshrl.u32 %v4243, 7
        %v4245 = vsub.s32 %v4242, %v4244
        %v4246 = vrot.slane %v4239, %v4245
        %v4248 = vunpack.c.l.s4 1966171168
        %v4249 = vunpack.c.0.s8 %v4248
        %v4250 = vlaneseq
        %v4251 = vshrl.u32 %v4250, 7
        %v4252 = vsub.s32 %v4249, %v4251
        %v4253 = vrot.slane %v4246, %v4252
        %s4255 = scalar_lea.vmem %s218, 6 [#allocation3]
        %4256 = vst.msk [vmem:[%s4255] ss:$8 sm:$0x3] %vm1297, %v4253
        %4257 = vst.msk [vmem:[%s4255] ss:$8 sm:$0x0] %vm1297, %v4253
        %v4258 = vlaneseq
        %v4259 = vshrl.u32 %v4258, 7
        %v4260 = vsub.s32 7, %v4259
        %v4261 = vrot.slane %v224, %v4260
        %v4262 = vlaneseq
        %v4263 = vshrl.u32 %v4262, 7
        %v4264 = vsub.s32 7, %v4263
        %v4265 = vrot.slane %v225, %v4264
        %v4266 = vmul.f32 %v4261, %v262
        %v4267 = vmul.f32 %v4265, %v262
        %v4268 = vmul.f32 %v4261, %v267
        %v4269 = vmul.f32 %v4265, %v267
        %v4270 = vmul.f32 %v4261, %v272
        %v4271 = vmul.f32 %v4265, %v272
        %v4272 = vmul.f32 %v4261, %v277
        %v4273 = vmul.f32 %v4265, %v277
        %v4274 = vmul.f32 %v4261, %v282
        %v4275 = vmul.f32 %v4265, %v282
        %v4276 = vmul.f32 %v4261, %v287
        %v4277 = vmul.f32 %v4265, %v287
        %v4278 = vmul.f32 %v4261, %v292
        %v4279 = vmul.f32 %v4265, %v292
        %v4280 = vmul.f32 %v4261, %v297
        %v4281 = vmul.f32 %v4265, %v297
        %v4282 = vmul.f32 %v4261, %v302
        %v4283 = vmul.f32 %v4265, %v302
        %v4284 = vmul.f32 %v4261, %v307
        %v4285 = vmul.f32 %v4265, %v307
        %v4286 = vmul.f32 %v4261, %v312
        %v4287 = vmul.f32 %v4265, %v312
        %v4288 = vmul.f32 %v4261, %v317
        %v4289 = vmul.f32 %v4265, %v317
        %v4290 = vmul.f32 %v4261, %v322
        %v4291 = vmul.f32 %v4265, %v322
        %v4292 = vmul.f32 %v4261, %v327
        %v4293 = vmul.f32 %v4265, %v327
        %v4294 = vmul.f32 %v4261, %v332
        %v4295 = vmul.f32 %v4265, %v332
        %v4296 = vmul.f32 %v4261, %v337
        %v4297 = vmul.f32 %v4265, %v337
        %v4298 = vmul.f32 %v4261, %v342
        %v4299 = vmul.f32 %v4265, %v342
        %v4300 = vmul.f32 %v4261, %v347
        %v4301 = vmul.f32 %v4265, %v347
        %v4302 = vmul.f32 %v4261, %v352
        %v4303 = vmul.f32 %v4265, %v352
        %v4304 = vmul.f32 %v4261, %v357
        %v4305 = vmul.f32 %v4265, %v357
        %v4306 = vmul.f32 %v4261, %v362
        %v4307 = vmul.f32 %v4265, %v362
        %v4308 = vmul.f32 %v4261, %v367
        %v4309 = vmul.f32 %v4265, %v367
        %v4310 = vmul.f32 %v4261, %v372
        %v4311 = vmul.f32 %v4265, %v372
        %v4312 = vmul.f32 %v4261, %v377
        %v4313 = vmul.f32 %v4265, %v377
        %v4314 = vmul.f32 %v4261, %v382
        %v4315 = vmul.f32 %v4265, %v382
        %v4316 = vmul.f32 %v4261, %v387
        %v4317 = vmul.f32 %v4265, %v387
        %v4318 = vmul.f32 %v4261, %v392
        %v4319 = vmul.f32 %v4265, %v392
        %v4320 = vmul.f32 %v4261, %v397
        %v4321 = vmul.f32 %v4265, %v397
        %v4322 = vmul.f32 %v4261, %v402
        %v4323 = vmul.f32 %v4265, %v402
        %v4324 = vmul.f32 %v4261, %v407
        %v4325 = vmul.f32 %v4265, %v407
        %v4326 = vmul.f32 %v4261, %v412
        %v4327 = vmul.f32 %v4265, %v412
        %v4328 = vmul.f32 %v4261, %v417
        %v4329 = vmul.f32 %v4265, %v417
        %v4330 = vadd.f32 %v4266, %v454
        %v4331 = vadd.f32 %v4267, %v454
        %v4332 = vadd.f32 %v4268, %v459
        %v4333 = vadd.f32 %v4269, %v459
        %v4334 = vadd.f32 %v4270, %v464
        %v4335 = vadd.f32 %v4271, %v464
        %v4336 = vadd.f32 %v4272, %v469
        %v4337 = vadd.f32 %v4273, %v469
        %v4338 = vadd.f32 %v4274, %v474
        %v4339 = vadd.f32 %v4275, %v474
        %v4340 = vadd.f32 %v4276, %v479
        %v4341 = vadd.f32 %v4277, %v479
        %v4342 = vadd.f32 %v4278, %v484
        %v4343 = vadd.f32 %v4279, %v484
        %v4344 = vadd.f32 %v4280, %v489
        %v4345 = vadd.f32 %v4281, %v489
        %v4346 = vadd.f32 %v4282, %v494
        %v4347 = vadd.f32 %v4283, %v494
        %v4348 = vadd.f32 %v4284, %v499
        %v4349 = vadd.f32 %v4285, %v499
        %v4350 = vadd.f32 %v4286, %v504
        %v4351 = vadd.f32 %v4287, %v504
        %v4352 = vadd.f32 %v4288, %v509
        %v4353 = vadd.f32 %v4289, %v509
        %v4354 = vadd.f32 %v4290, %v514
        %v4355 = vadd.f32 %v4291, %v514
        %v4356 = vadd.f32 %v4292, %v519
        %v4357 = vadd.f32 %v4293, %v519
        %v4358 = vadd.f32 %v4294, %v524
        %v4359 = vadd.f32 %v4295, %v524
        %v4360 = vadd.f32 %v4296, %v529
        %v4361 = vadd.f32 %v4297, %v529
        %v4362 = vadd.f32 %v4298, %v534
        %v4363 = vadd.f32 %v4299, %v534
        %v4364 = vadd.f32 %v4300, %v539
        %v4365 = vadd.f32 %v4301, %v539
        %v4366 = vadd.f32 %v4302, %v544
        %v4367 = vadd.f32 %v4303, %v544
        %v4368 = vadd.f32 %v4304, %v549
        %v4369 = vadd.f32 %v4305, %v549
        %v4370 = vadd.f32 %v4306, %v554
        %v4371 = vadd.f32 %v4307, %v554
        %v4372 = vadd.f32 %v4308, %v559
        %v4373 = vadd.f32 %v4309, %v559
        %v4374 = vadd.f32 %v4310, %v564
        %v4375 = vadd.f32 %v4311, %v564
        %v4376 = vadd.f32 %v4312, %v569
        %v4377 = vadd.f32 %v4313, %v569
        %v4378 = vadd.f32 %v4314, %v574
        %v4379 = vadd.f32 %v4315, %v574
        %v4380 = vadd.f32 %v4316, %v579
        %v4381 = vadd.f32 %v4317, %v579
        %v4382 = vadd.f32 %v4318, %v584
        %v4383 = vadd.f32 %v4319, %v584
        %v4384 = vadd.f32 %v4320, %v589
        %v4385 = vadd.f32 %v4321, %v589
        %v4386 = vadd.f32 %v4322, %v594
        %v4387 = vadd.f32 %v4323, %v594
        %v4388 = vadd.f32 %v4324, %v599
        %v4389 = vadd.f32 %v4325, %v599
        %v4390 = vadd.f32 %v4326, %v604
        %v4391 = vadd.f32 %v4327, %v604
        %v4392 = vadd.f32 %v4328, %v609
        %v4393 = vadd.f32 %v4329, %v609
        %vm4394 = vcmp.gt.f32.partialorder %v4330, 0.0
        %vm4395 = vcmp.gt.f32.partialorder %v4331, 0.0
        %vm4396 = vcmp.gt.f32.partialorder %v4332, 0.0
        %vm4397 = vcmp.gt.f32.partialorder %v4333, 0.0
        %vm4398 = vcmp.gt.f32.partialorder %v4334, 0.0
        %vm4399 = vcmp.gt.f32.partialorder %v4335, 0.0
        %vm4400 = vcmp.gt.f32.partialorder %v4336, 0.0
        %vm4401 = vcmp.gt.f32.partialorder %v4337, 0.0
        %vm4402 = vcmp.gt.f32.partialorder %v4338, 0.0
        %vm4403 = vcmp.gt.f32.partialorder %v4339, 0.0
        %vm4404 = vcmp.gt.f32.partialorder %v4340, 0.0
        %vm4405 = vcmp.gt.f32.partialorder %v4341, 0.0
        %vm4406 = vcmp.gt.f32.partialorder %v4342, 0.0
        %vm4407 = vcmp.gt.f32.partialorder %v4343, 0.0
        %vm4408 = vcmp.gt.f32.partialorder %v4344, 0.0
        %vm4409 = vcmp.gt.f32.partialorder %v4345, 0.0
        %vm4410 = vcmp.gt.f32.partialorder %v4346, 0.0
        %vm4411 = vcmp.gt.f32.partialorder %v4347, 0.0
        %vm4412 = vcmp.gt.f32.partialorder %v4348, 0.0
        %vm4413 = vcmp.gt.f32.partialorder %v4349, 0.0
        %vm4414 = vcmp.gt.f32.partialorder %v4350, 0.0
        %vm4415 = vcmp.gt.f32.partialorder %v4351, 0.0
        %vm4416 = vcmp.gt.f32.partialorder %v4352, 0.0
        %vm4417 = vcmp.gt.f32.partialorder %v4353, 0.0
        %vm4418 = vcmp.gt.f32.partialorder %v4354, 0.0
        %vm4419 = vcmp.gt.f32.partialorder %v4355, 0.0
        %vm4420 = vcmp.gt.f32.partialorder %v4356, 0.0
        %vm4421 = vcmp.gt.f32.partialorder %v4357, 0.0
        %vm4422 = vcmp.gt.f32.partialorder %v4358, 0.0
        %vm4423 = vcmp.gt.f32.partialorder %v4359, 0.0
        %vm4424 = vcmp.gt.f32.partialorder %v4360, 0.0
        %vm4425 = vcmp.gt.f32.partialorder %v4361, 0.0
        %vm4426 = vcmp.gt.f32.partialorder %v4362, 0.0
        %vm4427 = vcmp.gt.f32.partialorder %v4363, 0.0
        %vm4428 = vcmp.gt.f32.partialorder %v4364, 0.0
        %vm4429 = vcmp.gt.f32.partialorder %v4365, 0.0
        %vm4430 = vcmp.gt.f32.partialorder %v4366, 0.0
        %vm4431 = vcmp.gt.f32.partialorder %v4367, 0.0
        %vm4432 = vcmp.gt.f32.partialorder %v4368, 0.0
        %vm4433 = vcmp.gt.f32.partialorder %v4369, 0.0
        %vm4434 = vcmp.gt.f32.partialorder %v4370, 0.0
        %vm4435 = vcmp.gt.f32.partialorder %v4371, 0.0
        %vm4436 = vcmp.gt.f32.partialorder %v4372, 0.0
        %vm4437 = vcmp.gt.f32.partialorder %v4373, 0.0
        %vm4438 = vcmp.gt.f32.partialorder %v4374, 0.0
        %vm4439 = vcmp.gt.f32.partialorder %v4375, 0.0
        %vm4440 = vcmp.gt.f32.partialorder %v4376, 0.0
        %vm4441 = vcmp.gt.f32.partialorder %v4377, 0.0
        %vm4442 = vcmp.gt.f32.partialorder %v4378, 0.0
        %vm4443 = vcmp.gt.f32.partialorder %v4379, 0.0
        %vm4444 = vcmp.gt.f32.partialorder %v4380, 0.0
        %vm4445 = vcmp.gt.f32.partialorder %v4381, 0.0
        %vm4446 = vcmp.gt.f32.partialorder %v4382, 0.0
        %vm4447 = vcmp.gt.f32.partialorder %v4383, 0.0
        %vm4448 = vcmp.gt.f32.partialorder %v4384, 0.0
        %vm4449 = vcmp.gt.f32.partialorder %v4385, 0.0
        %vm4450 = vcmp.gt.f32.partialorder %v4386, 0.0
        %vm4451 = vcmp.gt.f32.partialorder %v4387, 0.0
        %vm4452 = vcmp.gt.f32.partialorder %v4388, 0.0
        %vm4453 = vcmp.gt.f32.partialorder %v4389, 0.0
        %vm4454 = vcmp.gt.f32.partialorder %v4390, 0.0
        %vm4455 = vcmp.gt.f32.partialorder %v4391, 0.0
        %vm4456 = vcmp.gt.f32.partialorder %v4392, 0.0
        %vm4457 = vcmp.gt.f32.partialorder %v4393, 0.0
        %v4458 = vmul.f32 %v4330, 0.01
        %v4459 = vmul.f32 %v4331, 0.01
        %v4460 = vmul.f32 %v4332, 0.01
        %v4461 = vmul.f32 %v4333, 0.01
        %v4462 = vmul.f32 %v4334, 0.01
        %v4463 = vmul.f32 %v4335, 0.01
        %v4464 = vmul.f32 %v4336, 0.01
        %v4465 = vmul.f32 %v4337, 0.01
        %v4466 = vmul.f32 %v4338, 0.01
        %v4467 = vmul.f32 %v4339, 0.01
        %v4468 = vmul.f32 %v4340, 0.01
        %v4469 = vmul.f32 %v4341, 0.01
        %v4470 = vmul.f32 %v4342, 0.01
        %v4471 = vmul.f32 %v4343, 0.01
        %v4472 = vmul.f32 %v4344, 0.01
        %v4473 = vmul.f32 %v4345, 0.01
        %v4474 = vmul.f32 %v4346, 0.01
        %v4475 = vmul.f32 %v4347, 0.01
        %v4476 = vmul.f32 %v4348, 0.01
        %v4477 = vmul.f32 %v4349, 0.01
        %v4478 = vmul.f32 %v4350, 0.01
        %v4479 = vmul.f32 %v4351, 0.01
        %v4480 = vmul.f32 %v4352, 0.01
        %v4481 = vmul.f32 %v4353, 0.01
        %v4482 = vmul.f32 %v4354, 0.01
        %v4483 = vmul.f32 %v4355, 0.01
        %v4484 = vmul.f32 %v4356, 0.01
        %v4485 = vmul.f32 %v4357, 0.01
        %v4486 = vmul.f32 %v4358, 0.01
        %v4487 = vmul.f32 %v4359, 0.01
        %v4488 = vmul.f32 %v4360, 0.01
        %v4489 = vmul.f32 %v4361, 0.01
        %v4490 = vmul.f32 %v4362, 0.01
        %v4491 = vmul.f32 %v4363, 0.01
        %v4492 = vmul.f32 %v4364, 0.01
        %v4493 = vmul.f32 %v4365, 0.01
        %v4494 = vmul.f32 %v4366, 0.01
        %v4495 = vmul.f32 %v4367, 0.01
        %v4496 = vmul.f32 %v4368, 0.01
        %v4497 = vmul.f32 %v4369, 0.01
        %v4498 = vmul.f32 %v4370, 0.01
        %v4499 = vmul.f32 %v4371, 0.01
        %v4500 = vmul.f32 %v4372, 0.01
        %v4501 = vmul.f32 %v4373, 0.01
        %v4502 = vmul.f32 %v4374, 0.01
        %v4503 = vmul.f32 %v4375, 0.01
        %v4504 = vmul.f32 %v4376, 0.01
        %v4505 = vmul.f32 %v4377, 0.01
        %v4506 = vmul.f32 %v4378, 0.01
        %v4507 = vmul.f32 %v4379, 0.01
        %v4508 = vmul.f32 %v4380, 0.01
        %v4509 = vmul.f32 %v4381, 0.01
        %v4510 = vmul.f32 %v4382, 0.01
        %v4511 = vmul.f32 %v4383, 0.01
        %v4512 = vmul.f32 %v4384, 0.01
        %v4513 = vmul.f32 %v4385, 0.01
        %v4514 = vmul.f32 %v4386, 0.01
        %v4515 = vmul.f32 %v4387, 0.01
        %v4516 = vmul.f32 %v4388, 0.01
        %v4517 = vmul.f32 %v4389, 0.01
        %v4518 = vmul.f32 %v4390, 0.01
        %v4519 = vmul.f32 %v4391, 0.01
        %v4520 = vmul.f32 %v4392, 0.01
        %v4521 = vmul.f32 %v4393, 0.01
        %v4522 = vsel %vm4394, %v4330, %v4458
        %v4523 = vsel %vm4395, %v4331, %v4459
        %v4524 = vsel %vm4396, %v4332, %v4460
        %v4525 = vsel %vm4397, %v4333, %v4461
        %v4526 = vsel %vm4398, %v4334, %v4462
        %v4527 = vsel %vm4399, %v4335, %v4463
        %v4528 = vsel %vm4400, %v4336, %v4464
        %v4529 = vsel %vm4401, %v4337, %v4465
        %v4530 = vsel %vm4402, %v4338, %v4466
        %v4531 = vsel %vm4403, %v4339, %v4467
        %v4532 = vsel %vm4404, %v4340, %v4468
        %v4533 = vsel %vm4405, %v4341, %v4469
        %v4534 = vsel %vm4406, %v4342, %v4470
        %v4535 = vsel %vm4407, %v4343, %v4471
        %v4536 = vsel %vm4408, %v4344, %v4472
        %v4537 = vsel %vm4409, %v4345, %v4473
        %v4538 = vsel %vm4410, %v4346, %v4474
        %v4539 = vsel %vm4411, %v4347, %v4475
        %v4540 = vsel %vm4412, %v4348, %v4476
        %v4541 = vsel %vm4413, %v4349, %v4477
        %v4542 = vsel %vm4414, %v4350, %v4478
        %v4543 = vsel %vm4415, %v4351, %v4479
        %v4544 = vsel %vm4416, %v4352, %v4480
        %v4545 = vsel %vm4417, %v4353, %v4481
        %v4546 = vsel %vm4418, %v4354, %v4482
        %v4547 = vsel %vm4419, %v4355, %v4483
        %v4548 = vsel %vm4420, %v4356, %v4484
        %v4549 = vsel %vm4421, %v4357, %v4485
        %v4550 = vsel %vm4422, %v4358, %v4486
        %v4551 = vsel %vm4423, %v4359, %v4487
        %v4552 = vsel %vm4424, %v4360, %v4488
        %v4553 = vsel %vm4425, %v4361, %v4489
        %v4554 = vsel %vm4426, %v4362, %v4490
        %v4555 = vsel %vm4427, %v4363, %v4491
        %v4556 = vsel %vm4428, %v4364, %v4492
        %v4557 = vsel %vm4429, %v4365, %v4493
        %v4558 = vsel %vm4430, %v4366, %v4494
        %v4559 = vsel %vm4431, %v4367, %v4495
        %v4560 = vsel %vm4432, %v4368, %v4496
        %v4561 = vsel %vm4433, %v4369, %v4497
        %v4562 = vsel %vm4434, %v4370, %v4498
        %v4563 = vsel %vm4435, %v4371, %v4499
        %v4564 = vsel %vm4436, %v4372, %v4500
        %v4565 = vsel %vm4437, %v4373, %v4501
        %v4566 = vsel %vm4438, %v4374, %v4502
        %v4567 = vsel %vm4439, %v4375, %v4503
        %v4568 = vsel %vm4440, %v4376, %v4504
        %v4569 = vsel %vm4441, %v4377, %v4505
        %v4570 = vsel %vm4442, %v4378, %v4506
        %v4571 = vsel %vm4443, %v4379, %v4507
        %v4572 = vsel %vm4444, %v4380, %v4508
        %v4573 = vsel %vm4445, %v4381, %v4509
        %v4574 = vsel %vm4446, %v4382, %v4510
        %v4575 = vsel %vm4447, %v4383, %v4511
        %v4576 = vsel %vm4448, %v4384, %v4512
        %v4577 = vsel %vm4449, %v4385, %v4513
        %v4578 = vsel %vm4450, %v4386, %v4514
        %v4579 = vsel %vm4451, %v4387, %v4515
        %v4580 = vsel %vm4452, %v4388, %v4516
        %v4581 = vsel %vm4453, %v4389, %v4517
        %v4582 = vsel %vm4454, %v4390, %v4518
        %v4583 = vsel %vm4455, %v4391, %v4519
        %v4584 = vsel %vm4456, %v4392, %v4520
        %v4585 = vsel %vm4457, %v4393, %v4521
        %v4586 = vmul.f32 %v4522, %v646
        %v4587 = vmul.f32 %v4523, %v646
        %v4588 = vmul.f32 %v4524, %v651
        %v4589 = vmul.f32 %v4525, %v651
        %v4590 = vmul.f32 %v4526, %v656
        %v4591 = vmul.f32 %v4527, %v656
        %v4592 = vmul.f32 %v4528, %v661
        %v4593 = vmul.f32 %v4529, %v661
        %v4594 = vmul.f32 %v4530, %v666
        %v4595 = vmul.f32 %v4531, %v666
        %v4596 = vmul.f32 %v4532, %v671
        %v4597 = vmul.f32 %v4533, %v671
        %v4598 = vmul.f32 %v4534, %v676
        %v4599 = vmul.f32 %v4535, %v676
        %v4600 = vmul.f32 %v4536, %v681
        %v4601 = vmul.f32 %v4537, %v681
        %v4602 = vmul.f32 %v4538, %v686
        %v4603 = vmul.f32 %v4539, %v686
        %v4604 = vmul.f32 %v4540, %v691
        %v4605 = vmul.f32 %v4541, %v691
        %v4606 = vmul.f32 %v4542, %v696
        %v4607 = vmul.f32 %v4543, %v696
        %v4608 = vmul.f32 %v4544, %v701
        %v4609 = vmul.f32 %v4545, %v701
        %v4610 = vmul.f32 %v4546, %v706
        %v4611 = vmul.f32 %v4547, %v706
        %v4612 = vmul.f32 %v4548, %v711
        %v4613 = vmul.f32 %v4549, %v711
        %v4614 = vmul.f32 %v4550, %v716
        %v4615 = vmul.f32 %v4551, %v716
        %v4616 = vmul.f32 %v4552, %v721
        %v4617 = vmul.f32 %v4553, %v721
        %v4618 = vmul.f32 %v4554, %v726
        %v4619 = vmul.f32 %v4555, %v726
        %v4620 = vmul.f32 %v4556, %v731
        %v4621 = vmul.f32 %v4557, %v731
        %v4622 = vmul.f32 %v4558, %v736
        %v4623 = vmul.f32 %v4559, %v736
        %v4624 = vmul.f32 %v4560, %v741
        %v4625 = vmul.f32 %v4561, %v741
        %v4626 = vmul.f32 %v4562, %v746
        %v4627 = vmul.f32 %v4563, %v746
        %v4628 = vmul.f32 %v4564, %v751
        %v4629 = vmul.f32 %v4565, %v751
        %v4630 = vmul.f32 %v4566, %v756
        %v4631 = vmul.f32 %v4567, %v756
        %v4632 = vmul.f32 %v4568, %v761
        %v4633 = vmul.f32 %v4569, %v761
        %v4634 = vmul.f32 %v4570, %v766
        %v4635 = vmul.f32 %v4571, %v766
        %v4636 = vmul.f32 %v4572, %v771
        %v4637 = vmul.f32 %v4573, %v771
        %v4638 = vmul.f32 %v4574, %v776
        %v4639 = vmul.f32 %v4575, %v776
        %v4640 = vmul.f32 %v4576, %v781
        %v4641 = vmul.f32 %v4577, %v781
        %v4642 = vmul.f32 %v4578, %v786
        %v4643 = vmul.f32 %v4579, %v786
        %v4644 = vmul.f32 %v4580, %v791
        %v4645 = vmul.f32 %v4581, %v791
        %v4646 = vmul.f32 %v4582, %v796
        %v4647 = vmul.f32 %v4583, %v796
        %v4648 = vmul.f32 %v4584, %v801
        %v4649 = vmul.f32 %v4585, %v801
        %v4650 = vadd.f32 %v4586, %v4588
        %v4651 = vadd.f32 %v4650, %v4590
        %v4652 = vadd.f32 %v4651, %v4592
        %v4653 = vadd.f32 %v4652, %v4594
        %v4654 = vadd.f32 %v4653, %v4596
        %v4655 = vadd.f32 %v4654, %v4598
        %v4656 = vadd.f32 %v4655, %v4600
        %v4657 = vadd.f32 %v4656, %v4602
        %v4658 = vadd.f32 %v4657, %v4604
        %v4659 = vadd.f32 %v4658, %v4606
        %v4660 = vadd.f32 %v4659, %v4608
        %v4661 = vadd.f32 %v4660, %v4610
        %v4662 = vadd.f32 %v4661, %v4612
        %v4663 = vadd.f32 %v4662, %v4614
        %v4664 = vadd.f32 %v4663, %v4616
        %v4665 = vadd.f32 %v4664, %v4618
        %v4666 = vadd.f32 %v4665, %v4620
        %v4667 = vadd.f32 %v4666, %v4622
        %v4668 = vadd.f32 %v4667, %v4624
        %v4669 = vadd.f32 %v4668, %v4626
        %v4670 = vadd.f32 %v4669, %v4628
        %v4671 = vadd.f32 %v4670, %v4630
        %v4672 = vadd.f32 %v4671, %v4632
        %v4673 = vadd.f32 %v4672, %v4634
        %v4674 = vadd.f32 %v4673, %v4636
        %v4675 = vadd.f32 %v4674, %v4638
        %v4676 = vadd.f32 %v4675, %v4640
        %v4677 = vadd.f32 %v4676, %v4642
        %v4678 = vadd.f32 %v4677, %v4644
        %v4679 = vadd.f32 %v4678, %v4646
        %v4680 = vadd.f32 %v4679, %v4648
        %v4681 = vrot.slane %v4680, 4
        %v4682 = vadd.f32 %v4680, %v4681
        %v4683 = vrot.slane %v4682, 2
        %v4684 = vadd.f32 %v4682, %v4683
        %v4685 = vrot.slane %v4684, 1
        %v4686 = vadd.f32 %v4684, %v4685
        %v4687 = vadd.f32 %v4587, %v4589
        %v4688 = vadd.f32 %v4687, %v4591
        %v4689 = vadd.f32 %v4688, %v4593
        %v4690 = vadd.f32 %v4689, %v4595
        %v4691 = vadd.f32 %v4690, %v4597
        %v4692 = vadd.f32 %v4691, %v4599
        %v4693 = vadd.f32 %v4692, %v4601
        %v4694 = vadd.f32 %v4693, %v4603
        %v4695 = vadd.f32 %v4694, %v4605
        %v4696 = vadd.f32 %v4695, %v4607
        %v4697 = vadd.f32 %v4696, %v4609
        %v4698 = vadd.f32 %v4697, %v4611
        %v4699 = vadd.f32 %v4698, %v4613
        %v4700 = vadd.f32 %v4699, %v4615
        %v4701 = vadd.f32 %v4700, %v4617
        %v4702 = vadd.f32 %v4701, %v4619
        %v4703 = vadd.f32 %v4702, %v4621
        %v4704 = vadd.f32 %v4703, %v4623
        %v4705 = vadd.f32 %v4704, %v4625
        %v4706 = vadd.f32 %v4705, %v4627
        %v4707 = vadd.f32 %v4706, %v4629
        %v4708 = vadd.f32 %v4707, %v4631
        %v4709 = vadd.f32 %v4708, %v4633
        %v4710 = vadd.f32 %v4709, %v4635
        %v4711 = vadd.f32 %v4710, %v4637
        %v4712 = vadd.f32 %v4711, %v4639
        %v4713 = vadd.f32 %v4712, %v4641
        %v4714 = vadd.f32 %v4713, %v4643
        %v4715 = vadd.f32 %v4714, %v4645
        %v4716 = vadd.f32 %v4715, %v4647
        %v4717 = vadd.f32 %v4716, %v4649
        %v4718 = vrot.slane %v4717, 4
        %v4719 = vadd.f32 %v4717, %v4718
        %v4720 = vrot.slane %v4719, 2
        %v4721 = vadd.f32 %v4719, %v4720
        %v4722 = vrot.slane %v4721, 1
        %v4723 = vadd.f32 %v4721, %v4722
        %v4724 = vadd.f32 %v4686, %v1269
        %v4725 = vadd.f32 %v4723, %v1269
        %v4726 = vmul.f32 %v4724, 2.0
        %v4727 = vmul.f32 %v4725, 2.0
        %v4728 = vtanh.pop %v4726
        %v4729 = vtanh.pop %v4727
        %v4732 = vcombine.low %v4728, %v4729
        %v4734 = vunpack.c.l.s4 1966171168
        %v4735 = vunpack.c.0.s8 %v4734
        %v4736 = vlaneseq
        %v4737 = vshrl.u32 %v4736, 7
        %v4738 = vsub.s32 %v4735, %v4737
        %v4739 = vrot.slane %v4732, %v4738
        %v4741 = vunpack.c.l.s4 1966171168
        %v4742 = vunpack.c.0.s8 %v4741
        %v4743 = vlaneseq
        %v4744 = vshrl.u32 %v4743, 7
        %v4745 = vsub.s32 %v4742, %v4744
        %v4746 = vrot.slane %v4739, %v4745
        %s4748 = scalar_lea.vmem %s218, 7 [#allocation3]
        %4749 = vst.msk [vmem:[%s4748] ss:$8 sm:$0x3] %vm1297, %v4746
        %4750 = vst.msk [vmem:[%s4748] ss:$8 sm:$0x0] %vm1297, %v4746
        %s4751 = sand.u32 %s138, 1
        %s4752 = scalar_lea.sflag [#allocation4], %s4751
        %s4753 = sand.u32 %s138, 1
        %s4754 = smul.addr %s4753, 16
        %s4755 = scalar_lea.vmem [#allocation3], %s4754
        // Predicated region
        $region41: #{tpu_custom_call.1} parent=39 // pred_check
          %p4756 = pneg %p148
        $region42: #{tpu_custom_call.1} parent=39 // pred_check_branch
          %4758 = sbr.rel (%p4756) target = $region44
        $region43: #{tpu_custom_call.1} parent=39 // pred_region
          %s4760 = ssub.s32 256, 256
          %4761 = vsyncadd %s4752, %s4760
          %s4762 = smul.addr %s20, 2
          %s4763 = smul.addr %s4762, 128
          %s4764 = scalar_lea.hbm %s5, %s4763
          %s4766 = sshll.u32 %s4755, 4
          %s4767 = int_to_ptr.vmem [resolvable:$true] %s4766
          %4769 = dma.vmem_to_hbm [thread:$0]  %s4767, 256, %s4764, %s4752
        $region44: #{tpu_custom_call.1} parent=39 // pred_fallthru
          _
      $region40: #{tpu_custom_call.1} parent=5 // pred_fallthru
        _
      %p4770 = scmp.le.s32.totalorder 2, %s15
      // Predicated region
      $region45: #{tpu_custom_call.1} parent=5 // pred_check
        %p4771 = pneg %p4770
      $region46: #{tpu_custom_call.1} parent=5 // pred_check_branch
        %4773 = sbr.rel (%p4771) target = $region48
      $region47: #{tpu_custom_call.1} parent=5 // pred_region
        %s4774 = ssub.s32 %s15, 2
        // Predicated region
        $region49: #{tpu_custom_call.1} parent=47 // pred_check
          %p4775 = pneg %p154
        $region50: #{tpu_custom_call.1} parent=47 // pred_check_branch
          %4777 = sbr.rel (%p4775) target = $region52
        $region51: #{tpu_custom_call.1} parent=47 // pred_region
          %s4778 = sand.u32 %s139, 1
          %s4779 = scalar_lea.sflag [#allocation4], %s4778
          %s4780 = sand.u32 %s139, 1
          %s4781 = smul.addr %s4780, 16
          %s4782 = scalar_lea.vmem [#allocation3], %s4781
          %4783 = dma.done %s4779, 256
        $region52: #{tpu_custom_call.1} parent=47 // pred_fallthru
          _
      $region48: #{tpu_custom_call.1} parent=5 // pred_fallthru
        _
    $region6: #{tpu_custom_call.1} parent=1 // loop_footer
      %s19 = sadd.s32 1, %s15
    $region7: #{tpu_custom_call.1} parent=1 // loop_footer_branch
      %14 = sbr.rel target = $region3
    $region8: #{tpu_custom_call.1} parent=1 // loop_exit
      _
    %4784 = vsyncpa [#allocation4], 1
    %s4785 = scalar_lea.sflag [#allocation4], 1
    %4786 = vsyncpa %s4785, 1

</llo_original>
